<compile_context>
chip_gen: v7x
topology: tpu7x:2x2x1
jax: 0.10.0
libtpu: 0.0.40
codegen_flags: <defaults>
</compile_context>

<pallas_src>
import functools
import math

import jax
import jax.numpy as jnp
from jax.experimental import pallas as pl
from jax.experimental.pallas import tpu as pltpu


def _round_up(x, m):
    return ((x + m - 1) // m) * m


# ---------------------------------------------------------------------------
# Fused PNet kernel: one grid step == one image, everything stays in VMEM.
# Canvas convention: a feature value for spatial position (i, j) of layer L is
# stored at lane index  dil_L * 0 + (i * W0 + j) * <layer dilation>  ... i.e.
# conv1 output at i*W0+j, post-pool layers at 2*i*W0 + 2*j (dilation 2).
# ---------------------------------------------------------------------------
def _pnet_kernel(x_ref, m_ref,
                 w1_ref, b1_ref, s1_ref,
                 w2_ref, b2_ref, s2_ref,
                 w3_ref, b3_ref, s3_ref,
                 wh_ref, bh_ref,
                 o_ref, *, W0, L1, L2, L3, L4, LOUT):
    f32 = jnp.float32

    def conv3x3(act_bf16, w_r, b_r, s_r, out_ch, l_out, dil):
        """Valid 3x3 conv on the lane canvas: 9 shifted-view MXU dots (f32 acc)."""
        acc = jnp.zeros((out_ch, l_out), f32)
        for di in range(3):
            for dj in range(3):
                shift = dil * (di * W0 + dj)
                tap = act_bf16[:, shift:shift + l_out]        # lane-shifted view
                acc = acc + jnp.dot(w_r[di * 3 + dj], tap,
                                    preferred_element_type=f32)
        y = acc + b_r[...]                                    # bias   (f32)
        return jnp.where(y > 0, y, s_r[...] * y)              # PReLU  (f32)

    x = x_ref[0]                                              # (8, L0) bf16

    # conv1 + prelu1 (stride-1 taps)
    c1 = conv3x3(x, w1_ref, b1_ref, s1_ref, 16, L1, dil=1)    # (16, L1) f32

    # pool1: 2x2 / stride 2 / ceil_mode.  Push invalid canvas positions to
    # -1e9 first (additive mask) so edge windows of the ceil-mode pool and the
    # halo garbage never win the max.
    c1 = c1 + m_ref[...][:, :L1]
    p1 = jnp.maximum(
        jnp.maximum(c1[:, 0:L2], c1[:, 1:L2 + 1]),
        jnp.maximum(c1[:, W0:W0 + L2], c1[:, W0 + 1:W0 + 1 + L2]))

    # conv2 + prelu2 (dilation-2 taps: pooled values live on a stride-2 grid)
    c2 = conv3x3(p1.astype(jnp.bfloat16), w2_ref, b2_ref, s2_ref, 16, L3, dil=2)

    # conv3 + prelu3
    c3 = conv3x3(c2.astype(jnp.bfloat16), w3_ref, b3_ref, s3_ref, 32, L4, dil=2)

    # heads: conv4_2 (bbox reg -> rows 0..3) and conv4_1 (cls -> rows 4..5)
    # fused into one (8, 32) matmul.
    h = c3[:, :LOUT].astype(jnp.bfloat16)                     # (32, LOUT)
    y = jnp.dot(wh_ref[...], h, preferred_element_type=f32) + bh_ref[...]

    # 2-class channel softmax == sigmoid of the logit difference.
    e = jnp.exp(y[5:6, :] - y[4:5, :])
    p_face = pl.reciprocal(1.0 + e, approx=True)              # EUP, no divide

    o_ref[0, 0:4, :] = y[0:4, :]                              # reg
    o_ref[0, 4:5, :] = p_face                                 # softmax ch 0
    o_ref[0, 5:6, :] = 1.0 - p_face                           # softmax ch 1
    o_ref[0, 6:8, :] = jnp.zeros((2, LOUT), f32)              # pad rows


# ---------------------------------------------------------------------------
# Weight packing: per-tap (O, C) matrices padded to full sublane tiles, bf16.
# ---------------------------------------------------------------------------
def _pack_conv(w, b, slope, o_pad, c_pad):
    O, C, KH, KW = w.shape
    wt = jnp.transpose(w, (2, 3, 0, 1)).reshape(KH * KW, O, C)     # t = di*3+dj
    wt = jnp.pad(wt, ((0, 0), (0, o_pad - O), (0, c_pad - C))).astype(jnp.bfloat16)
    bp = jnp.pad(b, (0, o_pad - O)).reshape(o_pad, 1).astype(jnp.float32)
    sp = jnp.pad(slope, (0, o_pad - O)).reshape(o_pad, 1).astype(jnp.float32)
    return wt, bp, sp


def pnet_forward(x_nchw, params):
    """x: (N, 3, H, W) f32 -> (b: (N,4,H',W'), a: (N,2,H',W')) like PyTorch PNet."""
    N, C0, H0, W0 = x_nchw.shape
    assert C0 == 3 and H0 >= 12 and W0 >= 12

    # Spatial bookkeeping (valid convs, ceil-mode pool).
    H1, W1 = H0 - 2, W0 - 2                  # conv1
    H2, W2 = -(-H1 // 2), -(-W1 // 2)        # pool (ceil)
    H3, W3 = H2 - 2, W2 - 2                  # conv2
    H4, W4 = H3 - 2, W3 - 2                  # conv3 / heads

    # Canvas lengths: each layer's canvas is a shifted view of the previous
    # one, so lengths shrink by that layer's maximum tap shift.
    sh1, shp, sh2, sh3 = 2 * W0 + 2, W0 + 1, 4 * W0 + 4, 4 * W0 + 4
    n1 = (2 * (H2 - 1) + 1) * W0 + 2 * (W2 - 1) + 2   # conv1 canvas: all pool taps
    n2 = 2 * (H2 - 1) * W0 + 2 * (W2 - 1) + 1         # pool canvas: conv2 reads
    n3 = 2 * (H3 - 1) * W0 + 2 * (W3 - 1) + 1         # conv2 canvas: conv3 reads
    n4 = 2 * (H4 - 1) * W0 + 2 * (W4 - 1) + 1         # head canvas: valid outputs
    LOUT = _round_up(n4, 128)
    L0 = _round_up(max(H0 * W0, n1 + sh1, n2 + sh1 + shp, n3 + sh1 + shp + sh2,
                       LOUT + sh1 + shp + sh2 + sh3), 128)
    L1 = L0 - sh1
    L2 = L1 - shp
    L3 = L2 - sh2
    L4 = L3 - sh3

    # Input: (N,3,H,W) -> bf16 lane canvas (N, 8, L0).  Pure reshape + pad
    # (no transpose): p = i*W0 + j, channels padded 3 -> 8 sublanes.
    x = x_nchw.reshape(N, 3, H0 * W0).astype(jnp.bfloat16)
    x = jnp.pad(x, ((0, 0), (0, 5), (0, L0 - H0 * W0)))

    # Additive validity mask on the conv1 canvas (handles ceil-mode pool edges
    # and the lane-halo garbage).
    pidx = jnp.arange(L0)
    valid = ((pidx // W0) < H1) & ((pidx % W0) < W1)
    mask = jnp.where(valid, 0.0, -1e9).astype(jnp.float32).reshape(1, L0)

    w1, b1, s1 = _pack_conv(params['conv1_w'], params['conv1_b'], params['prelu1'], 16, 8)
    w2, b2, s2 = _pack_conv(params['conv2_w'], params['conv2_b'], params['prelu2'], 16, 16)
    w3, b3, s3 = _pack_conv(params['conv3_w'], params['conv3_b'], params['prelu3'], 32, 16)
    wh = jnp.concatenate([params['conv4_2_w'].reshape(4, 32),
                          params['conv4_1_w'].reshape(2, 32),
                          jnp.zeros((2, 32), jnp.float32)], axis=0).astype(jnp.bfloat16)
    bh = jnp.concatenate([params['conv4_2_b'], params['conv4_1_b'],
                          jnp.zeros((2,), jnp.float32)]).reshape(8, 1).astype(jnp.float32)

    kernel = functools.partial(_pnet_kernel, W0=W0,
                               L1=L1, L2=L2, L3=L3, L4=L4, LOUT=LOUT)
    full2 = lambda n: (0, 0)
    full3 = lambda n: (0, 0, 0)

    out = pl.pallas_call(
        kernel,
        out_shape=jax.ShapeDtypeStruct((N, 8, LOUT), jnp.float32),
        grid_spec=pltpu.PrefetchScalarGridSpec(
            num_scalar_prefetch=0,
            grid=(N,),                                        # >=2 steps -> both v7x cores
            in_specs=[
                pl.BlockSpec((1, 8, L0), lambda n: (n, 0, 0)),   # image canvas (bf16)
                pl.BlockSpec((1, L0), full2),                    # validity mask (f32)
                pl.BlockSpec((9, 16, 8), full3),                 # conv1 w (bf16)
                pl.BlockSpec((16, 1), full2),                    # conv1 b
                pl.BlockSpec((16, 1), full2),                    # prelu1
                pl.BlockSpec((9, 16, 16), full3),                # conv2 w
                pl.BlockSpec((16, 1), full2),
                pl.BlockSpec((16, 1), full2),
                pl.BlockSpec((9, 32, 16), full3),                # conv3 w
                pl.BlockSpec((32, 1), full2),
                pl.BlockSpec((32, 1), full2),
                pl.BlockSpec((8, 32), full2),                    # packed heads w
                pl.BlockSpec((8, 1), full2),                     # packed heads b
            ],
            out_specs=pl.BlockSpec((1, 8, LOUT), lambda n: (n, 0, 0)),
        ),
        compiler_params=pltpu.CompilerParams(
            dimension_semantics=("parallel",)),
    )(x, mask, w1, b1, s1, w2, b2, s2, w3, b3, s3, wh, bh)

    # Gather the valid head positions (canvas index 2*i*W0 + 2*j) -> NCHW.
    idx = (2 * jnp.arange(H4)[:, None] * W0 + 2 * jnp.arange(W4)[None, :]).reshape(-1)
    b_out = jnp.take(out[:, 0:4, :], idx, axis=2).reshape(N, 4, H4, W4)
    a_out = jnp.take(out[:, 4:6, :], idx, axis=2).reshape(N, 2, H4, W4)
    return b_out, a_out


# ---------------------------------------------------------------------------
# Parameters (deterministic) and a pure-JAX f32 reference for validation.
# ---------------------------------------------------------------------------
def make_pnet_params(key):
    ks = iter(jax.random.split(key, 16))

    def conv(o, i, kh, kw):
        fan_in = i * kh * kw
        bound = 1.0 / math.sqrt(fan_in)
        w = jax.random.uniform(next(ks), (o, i, kh, kw), jnp.float32, -bound, bound)
        b = jax.random.uniform(next(ks), (o,), jnp.float32, -bound, bound)
        return w, b

    p = {}
    p['conv1_w'], p['conv1_b'] = conv(10, 3, 3, 3)
    p['prelu1'] = jnp.full((10,), 0.25, jnp.float32)
    p['conv2_w'], p['conv2_b'] = conv(16, 10, 3, 3)
    p['prelu2'] = jnp.full((16,), 0.25, jnp.float32)
    p['conv3_w'], p['conv3_b'] = conv(32, 16, 3, 3)
    p['prelu3'] = jnp.full((32,), 0.25, jnp.float32)
    p['conv4_1_w'], p['conv4_1_b'] = conv(2, 32, 1, 1)
    p['conv4_2_w'], p['conv4_2_b'] = conv(4, 32, 1, 1)
    return p


def _maxpool2x2_ceil(x):
    N, C, H, W = x.shape
    Ho, Wo = -(-H // 2), -(-W // 2)
    neg = jnp.finfo(x.dtype).min
    xp = jnp.pad(x, ((0, 0), (0, 0), (0, 2 * Ho - H), (0, 2 * Wo - W)),
                 constant_values=neg)
    return jnp.maximum(
        jnp.maximum(xp[:, :, 0::2, 0::2], xp[:, :, 0::2, 1::2]),
        jnp.maximum(xp[:, :, 1::2, 0::2], xp[:, :, 1::2, 1::2]))


def pnet_reference(x, params):
    def conv(x, w, b):
        y = jax.lax.conv_general_dilated(
            x, w, (1, 1), 'VALID', dimension_numbers=('NCHW', 'OIHW', 'NCHW'))
        return y + b.reshape(1, -1, 1, 1)

    def prelu(x, s):
        return jnp.where(x > 0, x, s.reshape(1, -1, 1, 1) * x)

    x = prelu(conv(x, params['conv1_w'], params['conv1_b']), params['prelu1'])
    x = _maxpool2x2_ceil(x)
    x = prelu(conv(x, params['conv2_w'], params['conv2_b']), params['prelu2'])
    x = prelu(conv(x, params['conv3_w'], params['conv3_b']), params['prelu3'])
    a = jax.nn.softmax(conv(x, params['conv4_1_w'], params['conv4_1_b']), axis=1)
    b = conv(x, params['conv4_2_w'], params['conv4_2_b'])
    return b, a


if __name__ == "__main__":
    key = jax.random.PRNGKey(0)
    pkey, xkey = jax.random.split(key)
    params = make_pnet_params(pkey)

    x = jax.random.normal(xkey, (2, 3, 16, 16), jnp.float32)

    fwd = jax.jit(lambda inp: pnet_forward(inp, params))
    b, a = fwd(x)
    jax.block_until_ready((b, a))

    # conv1: 16->14, pool(ceil): 14->7, conv2: 7->5, conv3: 5->3
    assert b.shape == (2, 4, 3, 3), b.shape
    assert a.shape == (2, 2, 3, 3), a.shape
    assert bool(jnp.all(jnp.isfinite(b))) and bool(jnp.all(jnp.isfinite(a)))
    assert bool(jnp.allclose(jnp.sum(a, axis=1), 1.0, atol=1e-5))

    # Validate against a pure-JAX f32 reference (kernel matmuls run in bf16).
    b_ref, a_ref = pnet_reference(x, params)
    assert bool(jnp.allclose(b, b_ref, atol=0.08, rtol=0.08)), \
        float(jnp.max(jnp.abs(b - b_ref)))
    assert bool(jnp.allclose(a, a_ref, atol=0.05, rtol=0.05)), \
        float(jnp.max(jnp.abs(a - a_ref)))
    print("KERNEL_OK")
</pallas_src>

<mosaic_0001>
module attributes {stable_mosaic.version = 11 : i64} {
  func.func @_pnet_kernel(%arg0: i32, %arg1: memref<1x8x384xbf16, #tpu.memory_space<vmem>>, %arg2: memref<1x384xf32, #tpu.memory_space<vmem>>, %arg3: memref<9x16x8xbf16, #tpu.memory_space<vmem>>, %arg4: memref<16x1xf32, #tpu.memory_space<vmem>>, %arg5: memref<16x1xf32, #tpu.memory_space<vmem>>, %arg6: memref<9x16x16xbf16, #tpu.memory_space<vmem>>, %arg7: memref<16x1xf32, #tpu.memory_space<vmem>>, %arg8: memref<16x1xf32, #tpu.memory_space<vmem>>, %arg9: memref<9x32x16xbf16, #tpu.memory_space<vmem>>, %arg10: memref<32x1xf32, #tpu.memory_space<vmem>>, %arg11: memref<32x1xf32, #tpu.memory_space<vmem>>, %arg12: memref<8x32xbf16, #tpu.memory_space<vmem>>, %arg13: memref<8x1xf32, #tpu.memory_space<vmem>>, %arg14: memref<1x8x128xf32, #tpu.memory_space<vmem>>) attributes {dimension_semantics = [#tpu.dimension_semantics<parallel>], iteration_bounds = array<i64: 2>, scalar_prefetch = 0 : i64, scratch_operands = 0 : i64, tpu.core_type = #tpu.core_type<tc>, window_params = [{transform_indices = @transform_0, window_bounds = array<i64: 1, 8, 384>}, {pipeline_mode = #tpu.pipeline_mode<synchronous>, transform_indices = @transform_1, window_bounds = array<i64: 1, 384>}, {pipeline_mode = #tpu.pipeline_mode<synchronous>, transform_indices = @transform_2, window_bounds = array<i64: 9, 16, 8>}, {pipeline_mode = #tpu.pipeline_mode<synchronous>, transform_indices = @transform_3, window_bounds = array<i64: 16, 1>}, {pipeline_mode = #tpu.pipeline_mode<synchronous>, transform_indices = @transform_4, window_bounds = array<i64: 16, 1>}, {pipeline_mode = #tpu.pipeline_mode<synchronous>, transform_indices = @transform_5, window_bounds = array<i64: 9, 16, 16>}, {pipeline_mode = #tpu.pipeline_mode<synchronous>, transform_indices = @transform_6, window_bounds = array<i64: 16, 1>}, {pipeline_mode = #tpu.pipeline_mode<synchronous>, transform_indices = @transform_7, window_bounds = array<i64: 16, 1>}, {pipeline_mode = #tpu.pipeline_mode<synchronous>, transform_indices = @transform_8, window_bounds = array<i64: 9, 32, 16>}, {pipeline_mode = #tpu.pipeline_mode<synchronous>, transform_indices = @transform_9, window_bounds = array<i64: 32, 1>}, {pipeline_mode = #tpu.pipeline_mode<synchronous>, transform_indices = @transform_10, window_bounds = array<i64: 32, 1>}, {pipeline_mode = #tpu.pipeline_mode<synchronous>, transform_indices = @transform_11, window_bounds = array<i64: 8, 32>}, {pipeline_mode = #tpu.pipeline_mode<synchronous>, transform_indices = @transform_12, window_bounds = array<i64: 8, 1>}, {transform_indices = @transform_13, window_bounds = array<i64: 1, 8, 128>}]} {
    %c0 = arith.constant 0 : index
    %c0_0 = arith.constant 0 : index
    %c0_1 = arith.constant 0 : index
    %0 = vector.load %arg1[%c0, %c0_0, %c0_1] : memref<1x8x384xbf16, #tpu.memory_space<vmem>>, vector<1x8x384xbf16>
    %1 = vector.shape_cast %0 : vector<1x8x384xbf16> to vector<8x384xbf16>
    %cst = arith.constant 0.000000e+00 : f32
    %2 = vector.broadcast %cst : f32 to vector<16x350xf32>
    %3 = vector.extract_strided_slice %1 {offsets = [0, 0], sizes = [8, 350], strides = [1, 1]} : vector<8x384xbf16> to vector<8x350xbf16>
    %c0_2 = arith.constant 0 : index
    %c0_3 = arith.constant 0 : index
    %c0_4 = arith.constant 0 : index
    %4 = vector.load %arg3[%c0_2, %c0_3, %c0_4] : memref<9x16x8xbf16, #tpu.memory_space<vmem>>, vector<1x16x8xbf16>
    %5 = vector.shape_cast %4 : vector<1x16x8xbf16> to vector<16x8xbf16>
    %cst_5 = arith.constant dense<0.000000e+00> : vector<16x350xf32>
    %6 = tpu.matmul %5, %3, %cst_5 {dimension_numbers = #tpu.dot_dimension_numbers<[1], [0], [0], [1], [0, 0, 1, 1], [], []>} : vector<16x8xbf16>, vector<8x350xbf16>, vector<16x350xf32> -> vector<16x350xf32>
    %7 = arith.addf %2, %6 : vector<16x350xf32>
    %8 = vector.extract_strided_slice %1 {offsets = [0, 1], sizes = [8, 350], strides = [1, 1]} : vector<8x384xbf16> to vector<8x350xbf16>
    %c1 = arith.constant 1 : index
    %c0_6 = arith.constant 0 : index
    %c0_7 = arith.constant 0 : index
    %9 = vector.load %arg3[%c1, %c0_6, %c0_7] : memref<9x16x8xbf16, #tpu.memory_space<vmem>>, vector<1x16x8xbf16>
    %10 = vector.shape_cast %9 : vector<1x16x8xbf16> to vector<16x8xbf16>
    %cst_8 = arith.constant dense<0.000000e+00> : vector<16x350xf32>
    %11 = tpu.matmul %10, %8, %cst_8 {dimension_numbers = #tpu.dot_dimension_numbers<[1], [0], [0], [1], [0, 0, 1, 1], [], []>} : vector<16x8xbf16>, vector<8x350xbf16>, vector<16x350xf32> -> vector<16x350xf32>
    %12 = arith.addf %7, %11 : vector<16x350xf32>
    %13 = vector.extract_strided_slice %1 {offsets = [0, 2], sizes = [8, 350], strides = [1, 1]} : vector<8x384xbf16> to vector<8x350xbf16>
    %c2 = arith.constant 2 : index
    %c0_9 = arith.constant 0 : index
    %c0_10 = arith.constant 0 : index
    %14 = vector.load %arg3[%c2, %c0_9, %c0_10] : memref<9x16x8xbf16, #tpu.memory_space<vmem>>, vector<1x16x8xbf16>
    %15 = vector.shape_cast %14 : vector<1x16x8xbf16> to vector<16x8xbf16>
    %cst_11 = arith.constant dense<0.000000e+00> : vector<16x350xf32>
    %16 = tpu.matmul %15, %13, %cst_11 {dimension_numbers = #tpu.dot_dimension_numbers<[1], [0], [0], [1], [0, 0, 1, 1], [], []>} : vector<16x8xbf16>, vector<8x350xbf16>, vector<16x350xf32> -> vector<16x350xf32>
    %17 = arith.addf %12, %16 : vector<16x350xf32>
    %18 = vector.extract_strided_slice %1 {offsets = [0, 16], sizes = [8, 350], strides = [1, 1]} : vector<8x384xbf16> to vector<8x350xbf16>
    %c3 = arith.constant 3 : index
    %c0_12 = arith.constant 0 : index
    %c0_13 = arith.constant 0 : index
    %19 = vector.load %arg3[%c3, %c0_12, %c0_13] : memref<9x16x8xbf16, #tpu.memory_space<vmem>>, vector<1x16x8xbf16>
    %20 = vector.shape_cast %19 : vector<1x16x8xbf16> to vector<16x8xbf16>
    %cst_14 = arith.constant dense<0.000000e+00> : vector<16x350xf32>
    %21 = tpu.matmul %20, %18, %cst_14 {dimension_numbers = #tpu.dot_dimension_numbers<[1], [0], [0], [1], [0, 0, 1, 1], [], []>} : vector<16x8xbf16>, vector<8x350xbf16>, vector<16x350xf32> -> vector<16x350xf32>
    %22 = arith.addf %17, %21 : vector<16x350xf32>
    %23 = vector.extract_strided_slice %1 {offsets = [0, 17], sizes = [8, 350], strides = [1, 1]} : vector<8x384xbf16> to vector<8x350xbf16>
    %c4 = arith.constant 4 : index
    %c0_15 = arith.constant 0 : index
    %c0_16 = arith.constant 0 : index
    %24 = vector.load %arg3[%c4, %c0_15, %c0_16] : memref<9x16x8xbf16, #tpu.memory_space<vmem>>, vector<1x16x8xbf16>
    %25 = vector.shape_cast %24 : vector<1x16x8xbf16> to vector<16x8xbf16>
    %cst_17 = arith.constant dense<0.000000e+00> : vector<16x350xf32>
    %26 = tpu.matmul %25, %23, %cst_17 {dimension_numbers = #tpu.dot_dimension_numbers<[1], [0], [0], [1], [0, 0, 1, 1], [], []>} : vector<16x8xbf16>, vector<8x350xbf16>, vector<16x350xf32> -> vector<16x350xf32>
    %27 = arith.addf %22, %26 : vector<16x350xf32>
    %28 = vector.extract_strided_slice %1 {offsets = [0, 18], sizes = [8, 350], strides = [1, 1]} : vector<8x384xbf16> to vector<8x350xbf16>
    %c5 = arith.constant 5 : index
    %c0_18 = arith.constant 0 : index
    %c0_19 = arith.constant 0 : index
    %29 = vector.load %arg3[%c5, %c0_18, %c0_19] : memref<9x16x8xbf16, #tpu.memory_space<vmem>>, vector<1x16x8xbf16>
    %30 = vector.shape_cast %29 : vector<1x16x8xbf16> to vector<16x8xbf16>
    %cst_20 = arith.constant dense<0.000000e+00> : vector<16x350xf32>
    %31 = tpu.matmul %30, %28, %cst_20 {dimension_numbers = #tpu.dot_dimension_numbers<[1], [0], [0], [1], [0, 0, 1, 1], [], []>} : vector<16x8xbf16>, vector<8x350xbf16>, vector<16x350xf32> -> vector<16x350xf32>
    %32 = arith.addf %27, %31 : vector<16x350xf32>
    %33 = vector.extract_strided_slice %1 {offsets = [0, 32], sizes = [8, 350], strides = [1, 1]} : vector<8x384xbf16> to vector<8x350xbf16>
    %c6 = arith.constant 6 : index
    %c0_21 = arith.constant 0 : index
    %c0_22 = arith.constant 0 : index
    %34 = vector.load %arg3[%c6, %c0_21, %c0_22] : memref<9x16x8xbf16, #tpu.memory_space<vmem>>, vector<1x16x8xbf16>
    %35 = vector.shape_cast %34 : vector<1x16x8xbf16> to vector<16x8xbf16>
    %cst_23 = arith.constant dense<0.000000e+00> : vector<16x350xf32>
    %36 = tpu.matmul %35, %33, %cst_23 {dimension_numbers = #tpu.dot_dimension_numbers<[1], [0], [0], [1], [0, 0, 1, 1], [], []>} : vector<16x8xbf16>, vector<8x350xbf16>, vector<16x350xf32> -> vector<16x350xf32>
    %37 = arith.addf %32, %36 : vector<16x350xf32>
    %38 = vector.extract_strided_slice %1 {offsets = [0, 33], sizes = [8, 350], strides = [1, 1]} : vector<8x384xbf16> to vector<8x350xbf16>
    %c7 = arith.constant 7 : index
    %c0_24 = arith.constant 0 : index
    %c0_25 = arith.constant 0 : index
    %39 = vector.load %arg3[%c7, %c0_24, %c0_25] : memref<9x16x8xbf16, #tpu.memory_space<vmem>>, vector<1x16x8xbf16>
    %40 = vector.shape_cast %39 : vector<1x16x8xbf16> to vector<16x8xbf16>
    %cst_26 = arith.constant dense<0.000000e+00> : vector<16x350xf32>
    %41 = tpu.matmul %40, %38, %cst_26 {dimension_numbers = #tpu.dot_dimension_numbers<[1], [0], [0], [1], [0, 0, 1, 1], [], []>} : vector<16x8xbf16>, vector<8x350xbf16>, vector<16x350xf32> -> vector<16x350xf32>
    %42 = arith.addf %37, %41 : vector<16x350xf32>
    %43 = vector.extract_strided_slice %1 {offsets = [0, 34], sizes = [8, 350], strides = [1, 1]} : vector<8x384xbf16> to vector<8x350xbf16>
    %c8 = arith.constant 8 : index
    %c0_27 = arith.constant 0 : index
    %c0_28 = arith.constant 0 : index
    %44 = vector.load %arg3[%c8, %c0_27, %c0_28] : memref<9x16x8xbf16, #tpu.memory_space<vmem>>, vector<1x16x8xbf16>
    %45 = vector.shape_cast %44 : vector<1x16x8xbf16> to vector<16x8xbf16>
    %cst_29 = arith.constant dense<0.000000e+00> : vector<16x350xf32>
    %46 = tpu.matmul %45, %43, %cst_29 {dimension_numbers = #tpu.dot_dimension_numbers<[1], [0], [0], [1], [0, 0, 1, 1], [], []>} : vector<16x8xbf16>, vector<8x350xbf16>, vector<16x350xf32> -> vector<16x350xf32>
    %47 = arith.addf %42, %46 : vector<16x350xf32>
    %c0_30 = arith.constant 0 : index
    %c0_31 = arith.constant 0 : index
    %48 = vector.load %arg4[%c0_30, %c0_31] : memref<16x1xf32, #tpu.memory_space<vmem>>, vector<16x1xf32>
    %49 = vector.broadcast %48 : vector<16x1xf32> to vector<16x350xf32>
    %50 = arith.addf %47, %49 : vector<16x350xf32>
    %cst_32 = arith.constant 0.000000e+00 : f32
    %51 = vector.broadcast %cst_32 : f32 to vector<16x350xf32>
    %52 = arith.cmpf ogt, %50, %51 : vector<16x350xf32>
    %c0_33 = arith.constant 0 : index
    %c0_34 = arith.constant 0 : index
    %53 = vector.load %arg5[%c0_33, %c0_34] : memref<16x1xf32, #tpu.memory_space<vmem>>, vector<16x1xf32>
    %54 = vector.broadcast %53 : vector<16x1xf32> to vector<16x350xf32>
    %55 = arith.mulf %54, %50 : vector<16x350xf32>
    %56 = arith.select %52, %50, %55 : vector<16x350xi1>, vector<16x350xf32>
    %c0_35 = arith.constant 0 : index
    %c0_36 = arith.constant 0 : index
    %57 = vector.load %arg2[%c0_35, %c0_36] : memref<1x384xf32, #tpu.memory_space<vmem>>, vector<1x384xf32>
    %58 = vector.extract_strided_slice %57 {offsets = [0, 0], sizes = [1, 350], strides = [1, 1]} : vector<1x384xf32> to vector<1x350xf32>
    %59 = vector.broadcast %58 : vector<1x350xf32> to vector<16x350xf32>
    %60 = arith.addf %56, %59 : vector<16x350xf32>
    %61 = vector.extract_strided_slice %60 {offsets = [0, 0], sizes = [16, 333], strides = [1, 1]} : vector<16x350xf32> to vector<16x333xf32>
    %62 = vector.extract_strided_slice %60 {offsets = [0, 1], sizes = [16, 333], strides = [1, 1]} : vector<16x350xf32> to vector<16x333xf32>
    %63 = arith.maximumf %61, %62 : vector<16x333xf32>
    %64 = vector.extract_strided_slice %60 {offsets = [0, 16], sizes = [16, 333], strides = [1, 1]} : vector<16x350xf32> to vector<16x333xf32>
    %65 = vector.extract_strided_slice %60 {offsets = [0, 17], sizes = [16, 333], strides = [1, 1]} : vector<16x350xf32> to vector<16x333xf32>
    %66 = arith.maximumf %64, %65 : vector<16x333xf32>
    %67 = arith.maximumf %63, %66 : vector<16x333xf32>
    %68 = arith.truncf %67 : vector<16x333xf32> to vector<16x333xbf16>
    %cst_37 = arith.constant 0.000000e+00 : f32
    %69 = vector.broadcast %cst_37 : f32 to vector<16x265xf32>
    %70 = vector.extract_strided_slice %68 {offsets = [0, 0], sizes = [16, 265], strides = [1, 1]} : vector<16x333xbf16> to vector<16x265xbf16>
    %c0_38 = arith.constant 0 : index
    %c0_39 = arith.constant 0 : index
    %c0_40 = arith.constant 0 : index
    %71 = vector.load %arg6[%c0_38, %c0_39, %c0_40] : memref<9x16x16xbf16, #tpu.memory_space<vmem>>, vector<1x16x16xbf16>
    %72 = vector.shape_cast %71 : vector<1x16x16xbf16> to vector<16x16xbf16>
    %cst_41 = arith.constant dense<0.000000e+00> : vector<16x265xf32>
    %73 = tpu.matmul %72, %70, %cst_41 {dimension_numbers = #tpu.dot_dimension_numbers<[1], [0], [0], [1], [0, 0, 1, 1], [], []>} : vector<16x16xbf16>, vector<16x265xbf16>, vector<16x265xf32> -> vector<16x265xf32>
    %74 = arith.addf %69, %73 : vector<16x265xf32>
    %75 = vector.extract_strided_slice %68 {offsets = [0, 2], sizes = [16, 265], strides = [1, 1]} : vector<16x333xbf16> to vector<16x265xbf16>
    %c1_42 = arith.constant 1 : index
    %c0_43 = arith.constant 0 : index
    %c0_44 = arith.constant 0 : index
    %76 = vector.load %arg6[%c1_42, %c0_43, %c0_44] : memref<9x16x16xbf16, #tpu.memory_space<vmem>>, vector<1x16x16xbf16>
    %77 = vector.shape_cast %76 : vector<1x16x16xbf16> to vector<16x16xbf16>
    %cst_45 = arith.constant dense<0.000000e+00> : vector<16x265xf32>
    %78 = tpu.matmul %77, %75, %cst_45 {dimension_numbers = #tpu.dot_dimension_numbers<[1], [0], [0], [1], [0, 0, 1, 1], [], []>} : vector<16x16xbf16>, vector<16x265xbf16>, vector<16x265xf32> -> vector<16x265xf32>
    %79 = arith.addf %74, %78 : vector<16x265xf32>
    %80 = vector.extract_strided_slice %68 {offsets = [0, 4], sizes = [16, 265], strides = [1, 1]} : vector<16x333xbf16> to vector<16x265xbf16>
    %c2_46 = arith.constant 2 : index
    %c0_47 = arith.constant 0 : index
    %c0_48 = arith.constant 0 : index
    %81 = vector.load %arg6[%c2_46, %c0_47, %c0_48] : memref<9x16x16xbf16, #tpu.memory_space<vmem>>, vector<1x16x16xbf16>
    %82 = vector.shape_cast %81 : vector<1x16x16xbf16> to vector<16x16xbf16>
    %cst_49 = arith.constant dense<0.000000e+00> : vector<16x265xf32>
    %83 = tpu.matmul %82, %80, %cst_49 {dimension_numbers = #tpu.dot_dimension_numbers<[1], [0], [0], [1], [0, 0, 1, 1], [], []>} : vector<16x16xbf16>, vector<16x265xbf16>, vector<16x265xf32> -> vector<16x265xf32>
    %84 = arith.addf %79, %83 : vector<16x265xf32>
    %85 = vector.extract_strided_slice %68 {offsets = [0, 32], sizes = [16, 265], strides = [1, 1]} : vector<16x333xbf16> to vector<16x265xbf16>
    %c3_50 = arith.constant 3 : index
    %c0_51 = arith.constant 0 : index
    %c0_52 = arith.constant 0 : index
    %86 = vector.load %arg6[%c3_50, %c0_51, %c0_52] : memref<9x16x16xbf16, #tpu.memory_space<vmem>>, vector<1x16x16xbf16>
    %87 = vector.shape_cast %86 : vector<1x16x16xbf16> to vector<16x16xbf16>
    %cst_53 = arith.constant dense<0.000000e+00> : vector<16x265xf32>
    %88 = tpu.matmul %87, %85, %cst_53 {dimension_numbers = #tpu.dot_dimension_numbers<[1], [0], [0], [1], [0, 0, 1, 1], [], []>} : vector<16x16xbf16>, vector<16x265xbf16>, vector<16x265xf32> -> vector<16x265xf32>
    %89 = arith.addf %84, %88 : vector<16x265xf32>
    %90 = vector.extract_strided_slice %68 {offsets = [0, 34], sizes = [16, 265], strides = [1, 1]} : vector<16x333xbf16> to vector<16x265xbf16>
    %c4_54 = arith.constant 4 : index
    %c0_55 = arith.constant 0 : index
    %c0_56 = arith.constant 0 : index
    %91 = vector.load %arg6[%c4_54, %c0_55, %c0_56] : memref<9x16x16xbf16, #tpu.memory_space<vmem>>, vector<1x16x16xbf16>
    %92 = vector.shape_cast %91 : vector<1x16x16xbf16> to vector<16x16xbf16>
    %cst_57 = arith.constant dense<0.000000e+00> : vector<16x265xf32>
    %93 = tpu.matmul %92, %90, %cst_57 {dimension_numbers = #tpu.dot_dimension_numbers<[1], [0], [0], [1], [0, 0, 1, 1], [], []>} : vector<16x16xbf16>, vector<16x265xbf16>, vector<16x265xf32> -> vector<16x265xf32>
    %94 = arith.addf %89, %93 : vector<16x265xf32>
    %95 = vector.extract_strided_slice %68 {offsets = [0, 36], sizes = [16, 265], strides = [1, 1]} : vector<16x333xbf16> to vector<16x265xbf16>
    %c5_58 = arith.constant 5 : index
    %c0_59 = arith.constant 0 : index
    %c0_60 = arith.constant 0 : index
    %96 = vector.load %arg6[%c5_58, %c0_59, %c0_60] : memref<9x16x16xbf16, #tpu.memory_space<vmem>>, vector<1x16x16xbf16>
    %97 = vector.shape_cast %96 : vector<1x16x16xbf16> to vector<16x16xbf16>
    %cst_61 = arith.constant dense<0.000000e+00> : vector<16x265xf32>
    %98 = tpu.matmul %97, %95, %cst_61 {dimension_numbers = #tpu.dot_dimension_numbers<[1], [0], [0], [1], [0, 0, 1, 1], [], []>} : vector<16x16xbf16>, vector<16x265xbf16>, vector<16x265xf32> -> vector<16x265xf32>
    %99 = arith.addf %94, %98 : vector<16x265xf32>
    %100 = vector.extract_strided_slice %68 {offsets = [0, 64], sizes = [16, 265], strides = [1, 1]} : vector<16x333xbf16> to vector<16x265xbf16>
    %c6_62 = arith.constant 6 : index
    %c0_63 = arith.constant 0 : index
    %c0_64 = arith.constant 0 : index
    %101 = vector.load %arg6[%c6_62, %c0_63, %c0_64] : memref<9x16x16xbf16, #tpu.memory_space<vmem>>, vector<1x16x16xbf16>
    %102 = vector.shape_cast %101 : vector<1x16x16xbf16> to vector<16x16xbf16>
    %cst_65 = arith.constant dense<0.000000e+00> : vector<16x265xf32>
    %103 = tpu.matmul %102, %100, %cst_65 {dimension_numbers = #tpu.dot_dimension_numbers<[1], [0], [0], [1], [0, 0, 1, 1], [], []>} : vector<16x16xbf16>, vector<16x265xbf16>, vector<16x265xf32> -> vector<16x265xf32>
    %104 = arith.addf %99, %103 : vector<16x265xf32>
    %105 = vector.extract_strided_slice %68 {offsets = [0, 66], sizes = [16, 265], strides = [1, 1]} : vector<16x333xbf16> to vector<16x265xbf16>
    %c7_66 = arith.constant 7 : index
    %c0_67 = arith.constant 0 : index
    %c0_68 = arith.constant 0 : index
    %106 = vector.load %arg6[%c7_66, %c0_67, %c0_68] : memref<9x16x16xbf16, #tpu.memory_space<vmem>>, vector<1x16x16xbf16>
    %107 = vector.shape_cast %106 : vector<1x16x16xbf16> to vector<16x16xbf16>
    %cst_69 = arith.constant dense<0.000000e+00> : vector<16x265xf32>
    %108 = tpu.matmul %107, %105, %cst_69 {dimension_numbers = #tpu.dot_dimension_numbers<[1], [0], [0], [1], [0, 0, 1, 1], [], []>} : vector<16x16xbf16>, vector<16x265xbf16>, vector<16x265xf32> -> vector<16x265xf32>
    %109 = arith.addf %104, %108 : vector<16x265xf32>
    %110 = vector.extract_strided_slice %68 {offsets = [0, 68], sizes = [16, 265], strides = [1, 1]} : vector<16x333xbf16> to vector<16x265xbf16>
    %c8_70 = arith.constant 8 : index
    %c0_71 = arith.constant 0 : index
    %c0_72 = arith.constant 0 : index
    %111 = vector.load %arg6[%c8_70, %c0_71, %c0_72] : memref<9x16x16xbf16, #tpu.memory_space<vmem>>, vector<1x16x16xbf16>
    %112 = vector.shape_cast %111 : vector<1x16x16xbf16> to vector<16x16xbf16>
    %cst_73 = arith.constant dense<0.000000e+00> : vector<16x265xf32>
    %113 = tpu.matmul %112, %110, %cst_73 {dimension_numbers = #tpu.dot_dimension_numbers<[1], [0], [0], [1], [0, 0, 1, 1], [], []>} : vector<16x16xbf16>, vector<16x265xbf16>, vector<16x265xf32> -> vector<16x265xf32>
    %114 = arith.addf %109, %113 : vector<16x265xf32>
    %c0_74 = arith.constant 0 : index
    %c0_75 = arith.constant 0 : index
    %115 = vector.load %arg7[%c0_74, %c0_75] : memref<16x1xf32, #tpu.memory_space<vmem>>, vector<16x1xf32>
    %116 = vector.broadcast %115 : vector<16x1xf32> to vector<16x265xf32>
    %117 = arith.addf %114, %116 : vector<16x265xf32>
    %cst_76 = arith.constant 0.000000e+00 : f32
    %118 = vector.broadcast %cst_76 : f32 to vector<16x265xf32>
    %119 = arith.cmpf ogt, %117, %118 : vector<16x265xf32>
    %c0_77 = arith.constant 0 : index
    %c0_78 = arith.constant 0 : index
    %120 = vector.load %arg8[%c0_77, %c0_78] : memref<16x1xf32, #tpu.memory_space<vmem>>, vector<16x1xf32>
    %121 = vector.broadcast %120 : vector<16x1xf32> to vector<16x265xf32>
    %122 = arith.mulf %121, %117 : vector<16x265xf32>
    %123 = arith.select %119, %117, %122 : vector<16x265xi1>, vector<16x265xf32>
    %124 = arith.truncf %123 : vector<16x265xf32> to vector<16x265xbf16>
    %cst_79 = arith.constant 0.000000e+00 : f32
    %125 = vector.broadcast %cst_79 : f32 to vector<32x197xf32>
    %126 = vector.extract_strided_slice %124 {offsets = [0, 0], sizes = [16, 197], strides = [1, 1]} : vector<16x265xbf16> to vector<16x197xbf16>
    %c0_80 = arith.constant 0 : index
    %c0_81 = arith.constant 0 : index
    %c0_82 = arith.constant 0 : index
    %127 = vector.load %arg9[%c0_80, %c0_81, %c0_82] : memref<9x32x16xbf16, #tpu.memory_space<vmem>>, vector<1x32x16xbf16>
    %128 = vector.shape_cast %127 : vector<1x32x16xbf16> to vector<32x16xbf16>
    %cst_83 = arith.constant dense<0.000000e+00> : vector<32x197xf32>
    %129 = tpu.matmul %128, %126, %cst_83 {dimension_numbers = #tpu.dot_dimension_numbers<[1], [0], [0], [1], [0, 0, 1, 1], [], []>} : vector<32x16xbf16>, vector<16x197xbf16>, vector<32x197xf32> -> vector<32x197xf32>
    %130 = arith.addf %125, %129 : vector<32x197xf32>
    %131 = vector.extract_strided_slice %124 {offsets = [0, 2], sizes = [16, 197], strides = [1, 1]} : vector<16x265xbf16> to vector<16x197xbf16>
    %c1_84 = arith.constant 1 : index
    %c0_85 = arith.constant 0 : index
    %c0_86 = arith.constant 0 : index
    %132 = vector.load %arg9[%c1_84, %c0_85, %c0_86] : memref<9x32x16xbf16, #tpu.memory_space<vmem>>, vector<1x32x16xbf16>
    %133 = vector.shape_cast %132 : vector<1x32x16xbf16> to vector<32x16xbf16>
    %cst_87 = arith.constant dense<0.000000e+00> : vector<32x197xf32>
    %134 = tpu.matmul %133, %131, %cst_87 {dimension_numbers = #tpu.dot_dimension_numbers<[1], [0], [0], [1], [0, 0, 1, 1], [], []>} : vector<32x16xbf16>, vector<16x197xbf16>, vector<32x197xf32> -> vector<32x197xf32>
    %135 = arith.addf %130, %134 : vector<32x197xf32>
    %136 = vector.extract_strided_slice %124 {offsets = [0, 4], sizes = [16, 197], strides = [1, 1]} : vector<16x265xbf16> to vector<16x197xbf16>
    %c2_88 = arith.constant 2 : index
    %c0_89 = arith.constant 0 : index
    %c0_90 = arith.constant 0 : index
    %137 = vector.load %arg9[%c2_88, %c0_89, %c0_90] : memref<9x32x16xbf16, #tpu.memory_space<vmem>>, vector<1x32x16xbf16>
    %138 = vector.shape_cast %137 : vector<1x32x16xbf16> to vector<32x16xbf16>
    %cst_91 = arith.constant dense<0.000000e+00> : vector<32x197xf32>
    %139 = tpu.matmul %138, %136, %cst_91 {dimension_numbers = #tpu.dot_dimension_numbers<[1], [0], [0], [1], [0, 0, 1, 1], [], []>} : vector<32x16xbf16>, vector<16x197xbf16>, vector<32x197xf32> -> vector<32x197xf32>
    %140 = arith.addf %135, %139 : vector<32x197xf32>
    %141 = vector.extract_strided_slice %124 {offsets = [0, 32], sizes = [16, 197], strides = [1, 1]} : vector<16x265xbf16> to vector<16x197xbf16>
    %c3_92 = arith.constant 3 : index
    %c0_93 = arith.constant 0 : index
    %c0_94 = arith.constant 0 : index
    %142 = vector.load %arg9[%c3_92, %c0_93, %c0_94] : memref<9x32x16xbf16, #tpu.memory_space<vmem>>, vector<1x32x16xbf16>
    %143 = vector.shape_cast %142 : vector<1x32x16xbf16> to vector<32x16xbf16>
    %cst_95 = arith.constant dense<0.000000e+00> : vector<32x197xf32>
    %144 = tpu.matmul %143, %141, %cst_95 {dimension_numbers = #tpu.dot_dimension_numbers<[1], [0], [0], [1], [0, 0, 1, 1], [], []>} : vector<32x16xbf16>, vector<16x197xbf16>, vector<32x197xf32> -> vector<32x197xf32>
    %145 = arith.addf %140, %144 : vector<32x197xf32>
    %146 = vector.extract_strided_slice %124 {offsets = [0, 34], sizes = [16, 197], strides = [1, 1]} : vector<16x265xbf16> to vector<16x197xbf16>
    %c4_96 = arith.constant 4 : index
    %c0_97 = arith.constant 0 : index
    %c0_98 = arith.constant 0 : index
    %147 = vector.load %arg9[%c4_96, %c0_97, %c0_98] : memref<9x32x16xbf16, #tpu.memory_space<vmem>>, vector<1x32x16xbf16>
    %148 = vector.shape_cast %147 : vector<1x32x16xbf16> to vector<32x16xbf16>
    %cst_99 = arith.constant dense<0.000000e+00> : vector<32x197xf32>
    %149 = tpu.matmul %148, %146, %cst_99 {dimension_numbers = #tpu.dot_dimension_numbers<[1], [0], [0], [1], [0, 0, 1, 1], [], []>} : vector<32x16xbf16>, vector<16x197xbf16>, vector<32x197xf32> -> vector<32x197xf32>
    %150 = arith.addf %145, %149 : vector<32x197xf32>
    %151 = vector.extract_strided_slice %124 {offsets = [0, 36], sizes = [16, 197], strides = [1, 1]} : vector<16x265xbf16> to vector<16x197xbf16>
    %c5_100 = arith.constant 5 : index
    %c0_101 = arith.constant 0 : index
    %c0_102 = arith.constant 0 : index
    %152 = vector.load %arg9[%c5_100, %c0_101, %c0_102] : memref<9x32x16xbf16, #tpu.memory_space<vmem>>, vector<1x32x16xbf16>
    %153 = vector.shape_cast %152 : vector<1x32x16xbf16> to vector<32x16xbf16>
    %cst_103 = arith.constant dense<0.000000e+00> : vector<32x197xf32>
    %154 = tpu.matmul %153, %151, %cst_103 {dimension_numbers = #tpu.dot_dimension_numbers<[1], [0], [0], [1], [0, 0, 1, 1], [], []>} : vector<32x16xbf16>, vector<16x197xbf16>, vector<32x197xf32> -> vector<32x197xf32>
    %155 = arith.addf %150, %154 : vector<32x197xf32>
    %156 = vector.extract_strided_slice %124 {offsets = [0, 64], sizes = [16, 197], strides = [1, 1]} : vector<16x265xbf16> to vector<16x197xbf16>
    %c6_104 = arith.constant 6 : index
    %c0_105 = arith.constant 0 : index
    %c0_106 = arith.constant 0 : index
    %157 = vector.load %arg9[%c6_104, %c0_105, %c0_106] : memref<9x32x16xbf16, #tpu.memory_space<vmem>>, vector<1x32x16xbf16>
    %158 = vector.shape_cast %157 : vector<1x32x16xbf16> to vector<32x16xbf16>
    %cst_107 = arith.constant dense<0.000000e+00> : vector<32x197xf32>
    %159 = tpu.matmul %158, %156, %cst_107 {dimension_numbers = #tpu.dot_dimension_numbers<[1], [0], [0], [1], [0, 0, 1, 1], [], []>} : vector<32x16xbf16>, vector<16x197xbf16>, vector<32x197xf32> -> vector<32x197xf32>
    %160 = arith.addf %155, %159 : vector<32x197xf32>
    %161 = vector.extract_strided_slice %124 {offsets = [0, 66], sizes = [16, 197], strides = [1, 1]} : vector<16x265xbf16> to vector<16x197xbf16>
    %c7_108 = arith.constant 7 : index
    %c0_109 = arith.constant 0 : index
    %c0_110 = arith.constant 0 : index
    %162 = vector.load %arg9[%c7_108, %c0_109, %c0_110] : memref<9x32x16xbf16, #tpu.memory_space<vmem>>, vector<1x32x16xbf16>
    %163 = vector.shape_cast %162 : vector<1x32x16xbf16> to vector<32x16xbf16>
    %cst_111 = arith.constant dense<0.000000e+00> : vector<32x197xf32>
    %164 = tpu.matmul %163, %161, %cst_111 {dimension_numbers = #tpu.dot_dimension_numbers<[1], [0], [0], [1], [0, 0, 1, 1], [], []>} : vector<32x16xbf16>, vector<16x197xbf16>, vector<32x197xf32> -> vector<32x197xf32>
    %165 = arith.addf %160, %164 : vector<32x197xf32>
    %166 = vector.extract_strided_slice %124 {offsets = [0, 68], sizes = [16, 197], strides = [1, 1]} : vector<16x265xbf16> to vector<16x197xbf16>
    %c8_112 = arith.constant 8 : index
    %c0_113 = arith.constant 0 : index
    %c0_114 = arith.constant 0 : index
    %167 = vector.load %arg9[%c8_112, %c0_113, %c0_114] : memref<9x32x16xbf16, #tpu.memory_space<vmem>>, vector<1x32x16xbf16>
    %168 = vector.shape_cast %167 : vector<1x32x16xbf16> to vector<32x16xbf16>
    %cst_115 = arith.constant dense<0.000000e+00> : vector<32x197xf32>
    %169 = tpu.matmul %168, %166, %cst_115 {dimension_numbers = #tpu.dot_dimension_numbers<[1], [0], [0], [1], [0, 0, 1, 1], [], []>} : vector<32x16xbf16>, vector<16x197xbf16>, vector<32x197xf32> -> vector<32x197xf32>
    %170 = arith.addf %165, %169 : vector<32x197xf32>
    %c0_116 = arith.constant 0 : index
    %c0_117 = arith.constant 0 : index
    %171 = vector.load %arg10[%c0_116, %c0_117] : memref<32x1xf32, #tpu.memory_space<vmem>>, vector<32x1xf32>
    %172 = vector.broadcast %171 : vector<32x1xf32> to vector<32x197xf32>
    %173 = arith.addf %170, %172 : vector<32x197xf32>
    %cst_118 = arith.constant 0.000000e+00 : f32
    %174 = vector.broadcast %cst_118 : f32 to vector<32x197xf32>
    %175 = arith.cmpf ogt, %173, %174 : vector<32x197xf32>
    %c0_119 = arith.constant 0 : index
    %c0_120 = arith.constant 0 : index
    %176 = vector.load %arg11[%c0_119, %c0_120] : memref<32x1xf32, #tpu.memory_space<vmem>>, vector<32x1xf32>
    %177 = vector.broadcast %176 : vector<32x1xf32> to vector<32x197xf32>
    %178 = arith.mulf %177, %173 : vector<32x197xf32>
    %179 = arith.select %175, %173, %178 : vector<32x197xi1>, vector<32x197xf32>
    %180 = vector.extract_strided_slice %179 {offsets = [0, 0], sizes = [32, 128], strides = [1, 1]} : vector<32x197xf32> to vector<32x128xf32>
    %181 = arith.truncf %180 : vector<32x128xf32> to vector<32x128xbf16>
    %c0_121 = arith.constant 0 : index
    %c0_122 = arith.constant 0 : index
    %182 = vector.load %arg12[%c0_121, %c0_122] : memref<8x32xbf16, #tpu.memory_space<vmem>>, vector<8x32xbf16>
    %cst_123 = arith.constant dense<0.000000e+00> : vector<8x128xf32>
    %183 = tpu.matmul %182, %181, %cst_123 {dimension_numbers = #tpu.dot_dimension_numbers<[1], [0], [0], [1], [0, 0, 1, 1], [], []>} : vector<8x32xbf16>, vector<32x128xbf16>, vector<8x128xf32> -> vector<8x128xf32>
    %c0_124 = arith.constant 0 : index
    %c0_125 = arith.constant 0 : index
    %184 = vector.load %arg13[%c0_124, %c0_125] : memref<8x1xf32, #tpu.memory_space<vmem>>, vector<8x1xf32>
    %185 = vector.broadcast %184 : vector<8x1xf32> to vector<8x128xf32>
    %186 = arith.addf %183, %185 : vector<8x128xf32>
    %187 = vector.extract_strided_slice %186 {offsets = [5, 0], sizes = [1, 128], strides = [1, 1]} : vector<8x128xf32> to vector<1x128xf32>
    %188 = vector.extract_strided_slice %186 {offsets = [4, 0], sizes = [1, 128], strides = [1, 1]} : vector<8x128xf32> to vector<1x128xf32>
    %189 = arith.subf %187, %188 : vector<1x128xf32>
    %190 = math.exp %189 : vector<1x128xf32>
    %cst_126 = arith.constant 1.000000e+00 : f32
    %191 = vector.broadcast %cst_126 : f32 to vector<1x128xf32>
    %192 = arith.addf %191, %190 : vector<1x128xf32>
    %193 = tpu.reciprocal %192 {approx = true} : vector<1x128xf32> -> vector<1x128xf32>
    %194 = vector.extract_strided_slice %186 {offsets = [0, 0], sizes = [4, 128], strides = [1, 1]} : vector<8x128xf32> to vector<4x128xf32>
    %c0_127 = arith.constant 0 : index
    %c0_128 = arith.constant 0 : index
    %c0_129 = arith.constant 0 : index
    %195 = vector.load %arg14[%c0_127, %c0_128, %c0_129] : memref<1x8x128xf32, #tpu.memory_space<vmem>>, vector<1x4x128xf32>
    %196 = vector.shape_cast %195 : vector<1x4x128xf32> to vector<4x128xf32>
    %197 = vector.shape_cast %194 : vector<4x128xf32> to vector<1x4x128xf32>
    tpu.vector_store %arg14[%c0_127, %c0_128, %c0_129], %197 {strides = array<i32>} : memref<1x8x128xf32, #tpu.memory_space<vmem>>, vector<1x4x128xf32>,
    %c0_130 = arith.constant 0 : index
    %c4_131 = arith.constant 4 : index
    %c0_132 = arith.constant 0 : index
    %198 = vector.load %arg14[%c0_130, %c4_131, %c0_132] : memref<1x8x128xf32, #tpu.memory_space<vmem>>, vector<1x1x128xf32>
    %199 = vector.shape_cast %198 : vector<1x1x128xf32> to vector<1x128xf32>
    %200 = vector.shape_cast %193 : vector<1x128xf32> to vector<1x1x128xf32>
    tpu.vector_store %arg14[%c0_130, %c4_131, %c0_132], %200 {strides = array<i32>} : memref<1x8x128xf32, #tpu.memory_space<vmem>>, vector<1x1x128xf32>,
    %cst_133 = arith.constant 1.000000e+00 : f32
    %201 = vector.broadcast %cst_133 : f32 to vector<1x128xf32>
    %202 = arith.subf %201, %193 : vector<1x128xf32>
    %c0_134 = arith.constant 0 : index
    %c5_135 = arith.constant 5 : index
    %c0_136 = arith.constant 0 : index
    %203 = vector.load %arg14[%c0_134, %c5_135, %c0_136] : memref<1x8x128xf32, #tpu.memory_space<vmem>>, vector<1x1x128xf32>
    %204 = vector.shape_cast %203 : vector<1x1x128xf32> to vector<1x128xf32>
    %205 = vector.shape_cast %202 : vector<1x128xf32> to vector<1x1x128xf32>
    tpu.vector_store %arg14[%c0_134, %c5_135, %c0_136], %205 {strides = array<i32>} : memref<1x8x128xf32, #tpu.memory_space<vmem>>, vector<1x1x128xf32>,
    %cst_137 = arith.constant 0.000000e+00 : f32
    %206 = vector.broadcast %cst_137 : f32 to vector<2x128xf32>
    %c0_138 = arith.constant 0 : index
    %c6_139 = arith.constant 6 : index
    %c0_140 = arith.constant 0 : index
    %207 = vector.load %arg14[%c0_138, %c6_139, %c0_140] : memref<1x8x128xf32, #tpu.memory_space<vmem>>, vector<1x2x128xf32>
    %208 = vector.shape_cast %207 : vector<1x2x128xf32> to vector<2x128xf32>
    %209 = vector.shape_cast %206 : vector<2x128xf32> to vector<1x2x128xf32>
    tpu.vector_store %arg14[%c0_138, %c6_139, %c0_140], %209 {strides = array<i32>} : memref<1x8x128xf32, #tpu.memory_space<vmem>>, vector<1x2x128xf32>,
    return
  }
  func.func @transform_0(%arg0: i32) -> (i32, i32, i32) {
    %c0_i32 = arith.constant 0 : i32
    %c0_i32_0 = arith.constant 0 : i32
    %c0_i32_1 = arith.constant 0 : i32
    return %arg0, %c0_i32, %c0_i32_0 : i32, i32, i32
  }
  func.func @transform_1(%arg0: i32) -> (i32, i32) {
    %c0_i32 = arith.constant 0 : i32
    %c0_i32_0 = arith.constant 0 : i32
    %c0_i32_1 = arith.constant 0 : i32
    return %c0_i32, %c0_i32_0 : i32, i32
  }
  func.func @transform_2(%arg0: i32) -> (i32, i32, i32) {
    %c0_i32 = arith.constant 0 : i32
    %c0_i32_0 = arith.constant 0 : i32
    %c0_i32_1 = arith.constant 0 : i32
    %c0_i32_2 = arith.constant 0 : i32
    return %c0_i32, %c0_i32_0, %c0_i32_1 : i32, i32, i32
  }
  func.func @transform_3(%arg0: i32) -> (i32, i32) {
    %c0_i32 = arith.constant 0 : i32
    %c0_i32_0 = arith.constant 0 : i32
    %c0_i32_1 = arith.constant 0 : i32
    return %c0_i32, %c0_i32_0 : i32, i32
  }
  func.func @transform_4(%arg0: i32) -> (i32, i32) {
    %c0_i32 = arith.constant 0 : i32
    %c0_i32_0 = arith.constant 0 : i32
    %c0_i32_1 = arith.constant 0 : i32
    return %c0_i32, %c0_i32_0 : i32, i32
  }
  func.func @transform_5(%arg0: i32) -> (i32, i32, i32) {
    %c0_i32 = arith.constant 0 : i32
    %c0_i32_0 = arith.constant 0 : i32
    %c0_i32_1 = arith.constant 0 : i32
    %c0_i32_2 = arith.constant 0 : i32
    return %c0_i32, %c0_i32_0, %c0_i32_1 : i32, i32, i32
  }
  func.func @transform_6(%arg0: i32) -> (i32, i32) {
    %c0_i32 = arith.constant 0 : i32
    %c0_i32_0 = arith.constant 0 : i32
    %c0_i32_1 = arith.constant 0 : i32
    return %c0_i32, %c0_i32_0 : i32, i32
  }
  func.func @transform_7(%arg0: i32) -> (i32, i32) {
    %c0_i32 = arith.constant 0 : i32
    %c0_i32_0 = arith.constant 0 : i32
    %c0_i32_1 = arith.constant 0 : i32
    return %c0_i32, %c0_i32_0 : i32, i32
  }
  func.func @transform_8(%arg0: i32) -> (i32, i32, i32) {
    %c0_i32 = arith.constant 0 : i32
    %c0_i32_0 = arith.constant 0 : i32
    %c0_i32_1 = arith.constant 0 : i32
    %c0_i32_2 = arith.constant 0 : i32
    return %c0_i32, %c0_i32_0, %c0_i32_1 : i32, i32, i32
  }
  func.func @transform_9(%arg0: i32) -> (i32, i32) {
    %c0_i32 = arith.constant 0 : i32
    %c0_i32_0 = arith.constant 0 : i32
    %c0_i32_1 = arith.constant 0 : i32
    return %c0_i32, %c0_i32_0 : i32, i32
  }
  func.func @transform_10(%arg0: i32) -> (i32, i32) {
    %c0_i32 = arith.constant 0 : i32
    %c0_i32_0 = arith.constant 0 : i32
    %c0_i32_1 = arith.constant 0 : i32
    return %c0_i32, %c0_i32_0 : i32, i32
  }
  func.func @transform_11(%arg0: i32) -> (i32, i32) {
    %c0_i32 = arith.constant 0 : i32
    %c0_i32_0 = arith.constant 0 : i32
    %c0_i32_1 = arith.constant 0 : i32
    return %c0_i32, %c0_i32_0 : i32, i32
  }
  func.func @transform_12(%arg0: i32) -> (i32, i32) {
    %c0_i32 = arith.constant 0 : i32
    %c0_i32_0 = arith.constant 0 : i32
    %c0_i32_1 = arith.constant 0 : i32
    return %c0_i32, %c0_i32_0 : i32, i32
  }
  func.func @transform_13(%arg0: i32) -> (i32, i32, i32) {
    %c0_i32 = arith.constant 0 : i32
    %c0_i32_0 = arith.constant 0 : i32
    %c0_i32_1 = arith.constant 0 : i32
    return %arg0, %c0_i32, %c0_i32_0 : i32, i32, i32
  }
}

</mosaic_0001>

<llo_original>
// kernel: _lambda_.1
$region0: #{_lambda_.1}
  #allocation0 [shape = 'u32[]', space=smem, size = 0x4, offset = 0x4, fixed_abs, tag = 'smem constant byte address 0x4 - core index']
  #allocation1 [shape = 'u32[144,128]{1,0:T(1,128)}', space=vmem, size = 0x12000, scoped, tag = 'internal scratch']
  %s0 = inlined_call_operand.vmem [shape: bf16[2,8,384], index: 0, kind: input, shape index: {}]
  %s1 = inlined_call_operand.vmem [shape: f32[1,384], index: 1, kind: input, shape index: {}]
  %s2 = inlined_call_operand.vmem [shape: bf16[9,16,8], index: 2, kind: input, shape index: {}]
  %s3 = inlined_call_operand.vmem [shape: f32[16,1], index: 3, kind: input, shape index: {}]
  %s4 = inlined_call_operand.vmem [shape: f32[16,1], index: 4, kind: input, shape index: {}]
  %s5 = inlined_call_operand.vmem [shape: bf16[9,16,16], index: 5, kind: input, shape index: {}]
  %s6 = inlined_call_operand.vmem [shape: f32[16,1], index: 6, kind: input, shape index: {}]
  %s7 = inlined_call_operand.vmem [shape: f32[16,1], index: 7, kind: input, shape index: {}]
  %s8 = inlined_call_operand.vmem [shape: bf16[9,32,16], index: 8, kind: input, shape index: {}]
  %s9 = inlined_call_operand.vmem [shape: f32[32,1], index: 9, kind: input, shape index: {}]
  %s10 = inlined_call_operand.vmem [shape: f32[32,1], index: 10, kind: input, shape index: {}]
  %s11 = inlined_call_operand.vmem [shape: bf16[8,32], index: 11, kind: input, shape index: {}]
  %s12 = inlined_call_operand.vmem [shape: f32[8,1], index: 12, kind: input, shape index: {}]
  %s13 = inlined_call_operand.vmem [shape: f32[2,8,128], index: 13, kind: output, shape index: {}]
  %s14 = sld [smem:[#allocation0]]
  $region85: #{_lambda_.1} parent=0
    _
  %s16 = ssub.s32 1, %s14
  %s17 = scalar_select 0, %s16, %s14
  loop: start=0, step=1, limit=4
  $region2: #{_lambda_.1} parent=0 // loop_pre_header
    _
  $region3: #{_lambda_.1} parent=0 // loop_header
    %s19 = sphi 0, %s23
    %p20 = scmp.ge.s32.totalorder %s19, 4
    %s29 = sphi 0, %s31
    %s32 = sphi 0, %s29
    %s33 = sphi 0, %s32
    %s49 = sphi 0, %s33
    %s53 = sphi 0, %s53
    %s55 = sphi 0, %s53
    %s56 = sphi 0, %s55
    %s70 = sphi 0, %s56
    %s74 = sphi 0, %s74
    %s76 = sphi 0, %s74
    %s77 = sphi 0, %s76
    %s91 = sphi 0, %s77
    %s95 = sphi 0, %s95
    %s97 = sphi 0, %s95
    %s98 = sphi 0, %s97
    %s112 = sphi 0, %s98
    %s116 = sphi 0, %s116
    %s118 = sphi 0, %s116
    %s119 = sphi 0, %s118
    %s133 = sphi 0, %s119
    %s137 = sphi 0, %s137
    %s139 = sphi 0, %s137
    %s140 = sphi 0, %s139
    %s154 = sphi 0, %s140
    %s158 = sphi 0, %s158
    %s160 = sphi 0, %s158
    %s161 = sphi 0, %s160
    %s175 = sphi 0, %s161
    %s179 = sphi 0, %s179
    %s181 = sphi 0, %s179
    %s182 = sphi 0, %s181
    %s196 = sphi 0, %s182
    %s200 = sphi 0, %s200
    %s202 = sphi 0, %s200
    %s203 = sphi 0, %s202
    %s217 = sphi 0, %s203
    %s221 = sphi 0, %s221
    %s223 = sphi 0, %s221
    %s224 = sphi 0, %s223
    %s238 = sphi 0, %s224
    %s242 = sphi 0, %s242
    %s244 = sphi 0, %s242
    %s245 = sphi 0, %s244
    %s259 = sphi 0, %s245
    %s263 = sphi 0, %s263
    %s265 = sphi 0, %s263
    %s266 = sphi 0, %s265
    %s280 = sphi 0, %s266
    %s284 = sphi 0, %s284
    %s286 = sphi 0, %s284
    %s287 = sphi 0, %s286
    %s301 = sphi 0, %s287
    %s307 = sphi 0, %s309
    %s310 = sphi 0, %s307
    %s311 = sphi 0, %s310
    %s327 = sphi 0, %s311
  $region4: #{_lambda_.1} parent=0 // loop_header_branch
    %22 = sbr.rel (%p20) target = $region8
  $region5: #{_lambda_.1} parent=0 // loop_body
    %s24 = ssub.s32 %s19, 1
    %s25 = ssub.s32 %s19, 2
    %s26 = sadd.s32 %s19, 1
    %s27 = ssub.s32 %s19, %s26
    %p28 = scmp.eq.s32.totalorder %s27, 0
    %s30 = sadd.s32 %s29, 1
    %s31 = scalar_select %p28, %s29, %s30
    %p34 = pneg %p28
    %p35 = scmp.eq.s32.totalorder %s19, 1
    %p36 = por %p34, %p35
    %p37 = scmp.ne.s32.totalorder %s29, %s32
    %p38 = scmp.eq.s32.totalorder %s19, 0
    %p39 = por %p37, %p38
    %p40 = scmp.ne.s32.totalorder %s29, %s32
    %p41 = scmp.eq.s32.totalorder %s24, 1
    %p42 = por %p40, %p41
    %p43 = scmp.ne.s32.totalorder %s32, %s33
    %p44 = scmp.eq.s32.totalorder %s24, 0
    %p45 = por %p43, %p44
    %p46 = scmp.ne.s32.totalorder %s32, %s33
    %p47 = scmp.eq.s32.totalorder %s25, 1
    %p48 = por %p46, %p47
    %p50 = scmp.ne.s32.totalorder %s33, %s49
    %p51 = scmp.eq.s32.totalorder %s25, 0
    %p52 = por %p50, %p51
    %s54 = sadd.s32 %s53, 1
    %p57 = scmp.eq.s32.totalorder %s19, 1
    %p58 = scmp.ne.s32.totalorder %s53, %s55
    %p59 = scmp.eq.s32.totalorder %s19, 0
    %p60 = por %p58, %p59
    %p61 = scmp.ne.s32.totalorder %s53, %s55
    %p62 = scmp.eq.s32.totalorder %s24, 1
    %p63 = por %p61, %p62
    %p64 = scmp.ne.s32.totalorder %s55, %s56
    %p65 = scmp.eq.s32.totalorder %s24, 0
    %p66 = por %p64, %p65
    %p67 = scmp.ne.s32.totalorder %s55, %s56
    %p68 = scmp.eq.s32.totalorder %s25, 1
    %p69 = por %p67, %p68
    %p71 = scmp.ne.s32.totalorder %s56, %s70
    %p72 = scmp.eq.s32.totalorder %s25, 0
    %p73 = por %p71, %p72
    %s75 = sadd.s32 %s74, 1
    %p78 = scmp.eq.s32.totalorder %s19, 1
    %p79 = scmp.ne.s32.totalorder %s74, %s76
    %p80 = scmp.eq.s32.totalorder %s19, 0
    %p81 = por %p79, %p80
    %p82 = scmp.ne.s32.totalorder %s74, %s76
    %p83 = scmp.eq.s32.totalorder %s24, 1
    %p84 = por %p82, %p83
    %p85 = scmp.ne.s32.totalorder %s76, %s77
    %p86 = scmp.eq.s32.totalorder %s24, 0
    %p87 = por %p85, %p86
    %p88 = scmp.ne.s32.totalorder %s76, %s77
    %p89 = scmp.eq.s32.totalorder %s25, 1
    %p90 = por %p88, %p89
    %p92 = scmp.ne.s32.totalorder %s77, %s91
    %p93 = scmp.eq.s32.totalorder %s25, 0
    %p94 = por %p92, %p93
    %s96 = sadd.s32 %s95, 1
    %p99 = scmp.eq.s32.totalorder %s19, 1
    %p100 = scmp.ne.s32.totalorder %s95, %s97
    %p101 = scmp.eq.s32.totalorder %s19, 0
    %p102 = por %p100, %p101
    %p103 = scmp.ne.s32.totalorder %s95, %s97
    %p104 = scmp.eq.s32.totalorder %s24, 1
    %p105 = por %p103, %p104
    %p106 = scmp.ne.s32.totalorder %s97, %s98
    %p107 = scmp.eq.s32.totalorder %s24, 0
    %p108 = por %p106, %p107
    %p109 = scmp.ne.s32.totalorder %s97, %s98
    %p110 = scmp.eq.s32.totalorder %s25, 1
    %p111 = por %p109, %p110
    %p113 = scmp.ne.s32.totalorder %s98, %s112
    %p114 = scmp.eq.s32.totalorder %s25, 0
    %p115 = por %p113, %p114
    %s117 = sadd.s32 %s116, 1
    %p120 = scmp.eq.s32.totalorder %s19, 1
    %p121 = scmp.ne.s32.totalorder %s116, %s118
    %p122 = scmp.eq.s32.totalorder %s19, 0
    %p123 = por %p121, %p122
    %p124 = scmp.ne.s32.totalorder %s116, %s118
    %p125 = scmp.eq.s32.totalorder %s24, 1
    %p126 = por %p124, %p125
    %p127 = scmp.ne.s32.totalorder %s118, %s119
    %p128 = scmp.eq.s32.totalorder %s24, 0
    %p129 = por %p127, %p128
    %p130 = scmp.ne.s32.totalorder %s118, %s119
    %p131 = scmp.eq.s32.totalorder %s25, 1
    %p132 = por %p130, %p131
    %p134 = scmp.ne.s32.totalorder %s119, %s133
    %p135 = scmp.eq.s32.totalorder %s25, 0
    %p136 = por %p134, %p135
    %s138 = sadd.s32 %s137, 1
    %p141 = scmp.eq.s32.totalorder %s19, 1
    %p142 = scmp.ne.s32.totalorder %s137, %s139
    %p143 = scmp.eq.s32.totalorder %s19, 0
    %p144 = por %p142, %p143
    %p145 = scmp.ne.s32.totalorder %s137, %s139
    %p146 = scmp.eq.s32.totalorder %s24, 1
    %p147 = por %p145, %p146
    %p148 = scmp.ne.s32.totalorder %s139, %s140
    %p149 = scmp.eq.s32.totalorder %s24, 0
    %p150 = por %p148, %p149
    %p151 = scmp.ne.s32.totalorder %s139, %s140
    %p152 = scmp.eq.s32.totalorder %s25, 1
    %p153 = por %p151, %p152
    %p155 = scmp.ne.s32.totalorder %s140, %s154
    %p156 = scmp.eq.s32.totalorder %s25, 0
    %p157 = por %p155, %p156
    %s159 = sadd.s32 %s158, 1
    %p162 = scmp.eq.s32.totalorder %s19, 1
    %p163 = scmp.ne.s32.totalorder %s158, %s160
    %p164 = scmp.eq.s32.totalorder %s19, 0
    %p165 = por %p163, %p164
    %p166 = scmp.ne.s32.totalorder %s158, %s160
    %p167 = scmp.eq.s32.totalorder %s24, 1
    %p168 = por %p166, %p167
    %p169 = scmp.ne.s32.totalorder %s160, %s161
    %p170 = scmp.eq.s32.totalorder %s24, 0
    %p171 = por %p169, %p170
    %p172 = scmp.ne.s32.totalorder %s160, %s161
    %p173 = scmp.eq.s32.totalorder %s25, 1
    %p174 = por %p172, %p173
    %p176 = scmp.ne.s32.totalorder %s161, %s175
    %p177 = scmp.eq.s32.totalorder %s25, 0
    %p178 = por %p176, %p177
    %s180 = sadd.s32 %s179, 1
    %p183 = scmp.eq.s32.totalorder %s19, 1
    %p184 = scmp.ne.s32.totalorder %s179, %s181
    %p185 = scmp.eq.s32.totalorder %s19, 0
    %p186 = por %p184, %p185
    %p187 = scmp.ne.s32.totalorder %s179, %s181
    %p188 = scmp.eq.s32.totalorder %s24, 1
    %p189 = por %p187, %p188
    %p190 = scmp.ne.s32.totalorder %s181, %s182
    %p191 = scmp.eq.s32.totalorder %s24, 0
    %p192 = por %p190, %p191
    %p193 = scmp.ne.s32.totalorder %s181, %s182
    %p194 = scmp.eq.s32.totalorder %s25, 1
    %p195 = por %p193, %p194
    %p197 = scmp.ne.s32.totalorder %s182, %s196
    %p198 = scmp.eq.s32.totalorder %s25, 0
    %p199 = por %p197, %p198
    %s201 = sadd.s32 %s200, 1
    %p204 = scmp.eq.s32.totalorder %s19, 1
    %p205 = scmp.ne.s32.totalorder %s200, %s202
    %p206 = scmp.eq.s32.totalorder %s19, 0
    %p207 = por %p205, %p206
    %p208 = scmp.ne.s32.totalorder %s200, %s202
    %p209 = scmp.eq.s32.totalorder %s24, 1
    %p210 = por %p208, %p209
    %p211 = scmp.ne.s32.totalorder %s202, %s203
    %p212 = scmp.eq.s32.totalorder %s24, 0
    %p213 = por %p211, %p212
    %p214 = scmp.ne.s32.totalorder %s202, %s203
    %p215 = scmp.eq.s32.totalorder %s25, 1
    %p216 = por %p214, %p215
    %p218 = scmp.ne.s32.totalorder %s203, %s217
    %p219 = scmp.eq.s32.totalorder %s25, 0
    %p220 = por %p218, %p219
    %s222 = sadd.s32 %s221, 1
    %p225 = scmp.eq.s32.totalorder %s19, 1
    %p226 = scmp.ne.s32.totalorder %s221, %s223
    %p227 = scmp.eq.s32.totalorder %s19, 0
    %p228 = por %p226, %p227
    %p229 = scmp.ne.s32.totalorder %s221, %s223
    %p230 = scmp.eq.s32.totalorder %s24, 1
    %p231 = por %p229, %p230
    %p232 = scmp.ne.s32.totalorder %s223, %s224
    %p233 = scmp.eq.s32.totalorder %s24, 0
    %p234 = por %p232, %p233
    %p235 = scmp.ne.s32.totalorder %s223, %s224
    %p236 = scmp.eq.s32.totalorder %s25, 1
    %p237 = por %p235, %p236
    %p239 = scmp.ne.s32.totalorder %s224, %s238
    %p240 = scmp.eq.s32.totalorder %s25, 0
    %p241 = por %p239, %p240
    %s243 = sadd.s32 %s242, 1
    %p246 = scmp.eq.s32.totalorder %s19, 1
    %p247 = scmp.ne.s32.totalorder %s242, %s244
    %p248 = scmp.eq.s32.totalorder %s19, 0
    %p249 = por %p247, %p248
    %p250 = scmp.ne.s32.totalorder %s242, %s244
    %p251 = scmp.eq.s32.totalorder %s24, 1
    %p252 = por %p250, %p251
    %p253 = scmp.ne.s32.totalorder %s244, %s245
    %p254 = scmp.eq.s32.totalorder %s24, 0
    %p255 = por %p253, %p254
    %p256 = scmp.ne.s32.totalorder %s244, %s245
    %p257 = scmp.eq.s32.totalorder %s25, 1
    %p258 = por %p256, %p257
    %p260 = scmp.ne.s32.totalorder %s245, %s259
    %p261 = scmp.eq.s32.totalorder %s25, 0
    %p262 = por %p260, %p261
    %s264 = sadd.s32 %s263, 1
    %p267 = scmp.eq.s32.totalorder %s19, 1
    %p268 = scmp.ne.s32.totalorder %s263, %s265
    %p269 = scmp.eq.s32.totalorder %s19, 0
    %p270 = por %p268, %p269
    %p271 = scmp.ne.s32.totalorder %s263, %s265
    %p272 = scmp.eq.s32.totalorder %s24, 1
    %p273 = por %p271, %p272
    %p274 = scmp.ne.s32.totalorder %s265, %s266
    %p275 = scmp.eq.s32.totalorder %s24, 0
    %p276 = por %p274, %p275
    %p277 = scmp.ne.s32.totalorder %s265, %s266
    %p278 = scmp.eq.s32.totalorder %s25, 1
    %p279 = por %p277, %p278
    %p281 = scmp.ne.s32.totalorder %s266, %s280
    %p282 = scmp.eq.s32.totalorder %s25, 0
    %p283 = por %p281, %p282
    %s285 = sadd.s32 %s284, 1
    %p288 = scmp.eq.s32.totalorder %s19, 1
    %p289 = scmp.ne.s32.totalorder %s284, %s286
    %p290 = scmp.eq.s32.totalorder %s19, 0
    %p291 = por %p289, %p290
    %p292 = scmp.ne.s32.totalorder %s284, %s286
    %p293 = scmp.eq.s32.totalorder %s24, 1
    %p294 = por %p292, %p293
    %p295 = scmp.ne.s32.totalorder %s286, %s287
    %p296 = scmp.eq.s32.totalorder %s24, 0
    %p297 = por %p295, %p296
    %p298 = scmp.ne.s32.totalorder %s286, %s287
    %p299 = scmp.eq.s32.totalorder %s25, 1
    %p300 = por %p298, %p299
    %p302 = scmp.ne.s32.totalorder %s287, %s301
    %p303 = scmp.eq.s32.totalorder %s25, 0
    %p304 = por %p302, %p303
    %s305 = ssub.s32 %s19, %s26
    %p306 = scmp.eq.s32.totalorder %s305, 0
    %s308 = sadd.s32 %s307, 1
    %s309 = scalar_select %p306, %s307, %s308
    %p312 = pneg %p306
    %p313 = scmp.eq.s32.totalorder %s19, 1
    %p314 = por %p312, %p313
    %p315 = scmp.ne.s32.totalorder %s307, %s310
    %p316 = scmp.eq.s32.totalorder %s19, 0
    %p317 = por %p315, %p316
    %p318 = scmp.ne.s32.totalorder %s307, %s310
    %p319 = scmp.eq.s32.totalorder %s24, 1
    %p320 = por %p318, %p319
    %p321 = scmp.ne.s32.totalorder %s310, %s311
    %p322 = scmp.eq.s32.totalorder %s24, 0
    %p323 = por %p321, %p322
    %p324 = scmp.ne.s32.totalorder %s310, %s311
    %p325 = scmp.eq.s32.totalorder %s25, 1
    %p326 = por %p324, %p325
    %p328 = scmp.ne.s32.totalorder %s311, %s327
    %p329 = scmp.eq.s32.totalorder %s25, 0
    %p330 = por %p328, %p329
    %p331 = scmp.le.s32.totalorder 1, %s19
    %p332 = scmp.lt.s32.totalorder %s19, 3
    %p333 = pnand %p331, %p332
    %p334 = pneg %p333
    // Predicated region
    $region9: #{_lambda_.1} parent=5 // pred_check
      _
    $region10: #{_lambda_.1} parent=5 // pred_check_branch
      %336 = sbr.rel (%p333) target = $region12
    $region11: #{_lambda_.1} parent=5 // pred_region
      %s337 = ssub.s32 %s19, 1
      // Predicated region
      $region13: #{_lambda_.1} parent=11 // pred_check
        %p338 = pneg %p66
      $region14: #{_lambda_.1} parent=11 // pred_check_branch
        %340 = sbr.rel (%p338) target = $region16
      $region15: #{_lambda_.1} parent=11 // pred_region
        _
      $region16: #{_lambda_.1} parent=11 // pred_fallthru
        _
      // Predicated region
      $region17: #{_lambda_.1} parent=11 // pred_check
        %p341 = pneg %p87
      $region18: #{_lambda_.1} parent=11 // pred_check_branch
        %343 = sbr.rel (%p341) target = $region20
      $region19: #{_lambda_.1} parent=11 // pred_region
        _
      $region20: #{_lambda_.1} parent=11 // pred_fallthru
        _
      // Predicated region
      $region21: #{_lambda_.1} parent=11 // pred_check
        %p344 = pneg %p108
      $region22: #{_lambda_.1} parent=11 // pred_check_branch
        %346 = sbr.rel (%p344) target = $region24
      $region23: #{_lambda_.1} parent=11 // pred_region
        _
      $region24: #{_lambda_.1} parent=11 // pred_fallthru
        _
      // Predicated region
      $region25: #{_lambda_.1} parent=11 // pred_check
        %p347 = pneg %p129
      $region26: #{_lambda_.1} parent=11 // pred_check_branch
        %349 = sbr.rel (%p347) target = $region28
      $region27: #{_lambda_.1} parent=11 // pred_region
        _
      $region28: #{_lambda_.1} parent=11 // pred_fallthru
        _
      // Predicated region
      $region29: #{_lambda_.1} parent=11 // pred_check
        %p350 = pneg %p150
      $region30: #{_lambda_.1} parent=11 // pred_check_branch
        %352 = sbr.rel (%p350) target = $region32
      $region31: #{_lambda_.1} parent=11 // pred_region
        _
      $region32: #{_lambda_.1} parent=11 // pred_fallthru
        _
      // Predicated region
      $region33: #{_lambda_.1} parent=11 // pred_check
        %p353 = pneg %p171
      $region34: #{_lambda_.1} parent=11 // pred_check_branch
        %355 = sbr.rel (%p353) target = $region36
      $region35: #{_lambda_.1} parent=11 // pred_region
        _
      $region36: #{_lambda_.1} parent=11 // pred_fallthru
        _
      // Predicated region
      $region37: #{_lambda_.1} parent=11 // pred_check
        %p356 = pneg %p192
      $region38: #{_lambda_.1} parent=11 // pred_check_branch
        %358 = sbr.rel (%p356) target = $region40
      $region39: #{_lambda_.1} parent=11 // pred_region
        _
      $region40: #{_lambda_.1} parent=11 // pred_fallthru
        _
      // Predicated region
      $region41: #{_lambda_.1} parent=11 // pred_check
        %p359 = pneg %p213
      $region42: #{_lambda_.1} parent=11 // pred_check_branch
        %361 = sbr.rel (%p359) target = $region44
      $region43: #{_lambda_.1} parent=11 // pred_region
        _
      $region44: #{_lambda_.1} parent=11 // pred_fallthru
        _
      // Predicated region
      $region45: #{_lambda_.1} parent=11 // pred_check
        %p362 = pneg %p234
      $region46: #{_lambda_.1} parent=11 // pred_check_branch
        %364 = sbr.rel (%p362) target = $region48
      $region47: #{_lambda_.1} parent=11 // pred_region
        _
      $region48: #{_lambda_.1} parent=11 // pred_fallthru
        _
      // Predicated region
      $region49: #{_lambda_.1} parent=11 // pred_check
        %p365 = pneg %p255
      $region50: #{_lambda_.1} parent=11 // pred_check_branch
        %367 = sbr.rel (%p365) target = $region52
      $region51: #{_lambda_.1} parent=11 // pred_region
        _
      $region52: #{_lambda_.1} parent=11 // pred_fallthru
        _
      // Predicated region
      $region53: #{_lambda_.1} parent=11 // pred_check
        %p368 = pneg %p276
      $region54: #{_lambda_.1} parent=11 // pred_check_branch
        %370 = sbr.rel (%p368) target = $region56
      $region55: #{_lambda_.1} parent=11 // pred_region
        _
      $region56: #{_lambda_.1} parent=11 // pred_fallthru
        _
      // Predicated region
      $region57: #{_lambda_.1} parent=11 // pred_check
        %p371 = pneg %p297
      $region58: #{_lambda_.1} parent=11 // pred_check_branch
        %373 = sbr.rel (%p371) target = $region60
      $region59: #{_lambda_.1} parent=11 // pred_region
        _
      $region60: #{_lambda_.1} parent=11 // pred_fallthru
        _
    $region12: #{_lambda_.1} parent=5 // pred_fallthru
      _
    %p374 = scmp.lt.s32.totalorder %s19, 2
    // Predicated region
    $region61: #{_lambda_.1} parent=5 // pred_check
      %p375 = pneg %p374
    $region62: #{_lambda_.1} parent=5 // pred_check_branch
      %377 = sbr.rel (%p375) target = $region64
    $region63: #{_lambda_.1} parent=5 // pred_region
      // Predicated region
      $region65: #{_lambda_.1} parent=63 // pred_check
        %p378 = pneg %p39
      $region66: #{_lambda_.1} parent=63 // pred_check_branch
        %380 = sbr.rel (%p378) target = $region68
      $region67: #{_lambda_.1} parent=63 // pred_region
        %p381 = scmp.lt.s32.totalorder %s19, 1
        %s382 = scalar_select %p381, %s19, 1
        %s383 = smul.addr %s382, 3
        %s384 = smul.addr %s383, 4
        %s385 = scalar_lea.vmem %s0, %s384
      $region68: #{_lambda_.1} parent=63 // pred_fallthru
        _
    $region64: #{_lambda_.1} parent=5 // pred_fallthru
      _
    %p386 = scmp.le.s32.totalorder 1, %s19
    %p387 = scmp.lt.s32.totalorder %s19, 3
    %p388 = pnand %p386, %p387
    %p389 = pneg %p388
    // Predicated region
    $region69: #{_lambda_.1} parent=5 // pred_check
      _
    $region70: #{_lambda_.1} parent=5 // pred_check_branch
      %391 = sbr.rel (%p388) target = $region72
    $region71: #{_lambda_.1} parent=5 // pred_region
      %s392 = ssub.s32 %s19, 1
      %p393 = scmp.lt.s32.totalorder %s24, 1
      %s394 = scalar_select %p393, %s24, 1
      %s395 = smul.addr %s394, 3
      %s396 = smul.addr %s395, 4
      %s397 = scalar_lea.vmem %s0, %s396
      %p398 = pneg %p45
      %p399 = pneg %p42
      %p400 = pneg %p66
      %p401 = pneg %p63
      %p402 = pneg %p87
      %p403 = pneg %p84
      %p404 = pneg %p108
      %p405 = pneg %p105
      %p406 = pneg %p129
      %p407 = pneg %p126
      %p408 = pneg %p150
      %p409 = pneg %p147
      %p410 = pneg %p171
      %p411 = pneg %p168
      %p412 = pneg %p192
      %p413 = pneg %p189
      %p414 = pneg %p213
      %p415 = pneg %p210
      %p416 = pneg %p234
      %p417 = pneg %p231
      %p418 = pneg %p255
      %p419 = pneg %p252
      %p420 = pneg %p276
      %p421 = pneg %p273
      %p422 = pneg %p297
      %p423 = pneg %p294
      %p424 = pneg %p323
      %p425 = pneg %p320
      %p426 = scmp.lt.s32.totalorder %s24, 1
      %s427 = scalar_select %p426, %s24, 1
      %s428 = smul.addr %s427, 8
      %s429 = scalar_lea.vmem %s13, %s428
      %p430 = scmp.lt.s32.totalorder %s24, 1
      %s431 = scalar_select %p430, %s24, 1
      %s432 = smul.addr %s431, 3
      %s433 = smul.addr %s432, 4
      %s434 = scalar_lea.vmem %s0, %s433
      %p435 = scmp.lt.s32.totalorder %s24, 1
      %s436 = scalar_select %p435, %s24, 1
      %s437 = smul.addr %s436, 8
      %s438 = scalar_lea.vmem %s13, %s437
      %v440 = vld [vmem:[%s434] sm:$0xff]
      %v441 = vld [vmem:[%s434 + $0x8] sm:$0xf]
      %v442 = vld [vmem:[%s2] sm:$0xf]
      %v443 = vld [vmem:[%s2 + $0x4] sm:$0xf]
      %s444 = scalar_lea.vmem %s2, 8
      %v445 = vld [vmem:[%s444] sm:$0xf]
      %v446 = vld [vmem:[%s444 + $0x4] sm:$0xf]
      %v449 = vunpack.c.l.b16 %v445
      %v450 = vunpack.c.l.b16 %v446
      %v451 = vpack.c.b16 %v450, %v449
      %v454 = vunpack.c.l.b16 %v440
      %v455 = vunpack.c.h.b16 %v440
      %v456 = vunpack.c.l.b16 %v441
      %v457 = vpack.c.b16 %v454, %v454
      %v458 = vpack.c.b16 %v455, %v455
      %v459 = vpack.c.b16 %v456, %v456
      %460 = vrot.lane.b32.xlu0 %v457, 127
      %v461 = vpop.permute.xlu0 %460
      %462 = vrot.lane.b32.xlu0 %v458, 127
      %v463 = vpop.permute.xlu0 %462
      %464 = vrot.lane.b32.xlu0 %v459, 127
      %v465 = vpop.permute.xlu0 %464
      %vm466 = vcmask 1039360
      %v467 = vsel %vm466, %v461, %v463
      %v468 = vsel %vm466, %v463, %v465
      %vm469 = vcmask 64512
      %v471 = vsel %vm469, %v451, 0
      %vm473 = vcmask 1043456
      %v475 = vsel %vm473, %v467, 0
      %v478 = vsel %vm473, %v468, 0
      %v481 = vsel %vm473, %v465, 0
      %483 = vmatprep.subr.bf16.mxu0 %v478
      %484 = vmatpush1.bf16.msra.mxu0 %v475
      %485 = vmatprep.subr.bf16.mxu0 0
      %486 = vmatpush1.bf16.msra.mxu0 0
      %487 = vmatprep.subr.bf16.mxu0 0
      %488 = vmatpush1.bf16.msra.mxu0 0
      %489 = vmatprep.subr.bf16.mxu0 0
      %490 = vmatpush1.bf16.msra.mxu0 0
      %491 = vmatprep.subr.bf16.mxu0 0
      %492 = vmatpush1.bf16.msra.mxu0 0
      %493 = vmatprep.subr.bf16.mxu0 0
      %494 = vmatpush1.bf16.msra.mxu0 0
      %495 = vmatprep.subr.bf16.mxu0 0
      %496 = vmatpush1.bf16.msra.mxu0 0
      %497 = vmatprep.subr.bf16.mxu0 0
      %498 = vmatpush1.bf16.msra.mxu0 0
      %499 = vmatprep.subr.bf16.mxu0 0
      %500 = vmatpush1.bf16.msra.mxu0 0
      %501 = vmatprep.subr.bf16.mxu0 0
      %502 = vmatpush1.bf16.msra.mxu0 0
      %503 = vmatprep.subr.bf16.mxu0 0
      %504 = vmatpush1.bf16.msra.mxu0 0
      %505 = vmatprep.subr.bf16.mxu0 0
      %506 = vmatpush1.bf16.msra.mxu0 0
      %507 = vmatprep.subr.bf16.mxu0 0
      %508 = vmatpush1.bf16.msra.mxu0 0
      %509 = vmatprep.subr.bf16.mxu0 0
      %510 = vmatpush1.bf16.msra.mxu0 0
      %511 = vmatprep.subr.bf16.mxu0 0
      %512 = vmatpush1.bf16.msra.mxu0 0
      %513 = vmatprep.subr.bf16.mxu0 0
      %514 = vmatpush1.bf16.msra.mxu0 0
      %515 = vmatprep.mubr.bf16.mxu0 0
      %516 = vmatmul.mubr.bf16.gmra.mrb[0].mxu0 %v471
      %v517 = vpop.f32.mrb[0].mxu0
      %v518 = vadd.f32 0.0, %v517
      %v519 = vpop.f32.mrb[0].mxu0
      %v520 = vadd.f32 0.0, %v519
      %v521 = vpop.f32.mrb[0].mxu0
      %v522 = vadd.f32 0.0, %v521
      %v523 = vpop.f32.mrb[0].mxu0
      %v524 = vadd.f32 0.0, %v523
      %525 = vdwg.mxu0
      %526 = vmatprep.subr.bf16.mxu0 0
      %527 = vmatpush1.bf16.msra.mxu0 %v481
      %528 = vmatprep.subr.bf16.mxu0 0
      %529 = vmatpush1.bf16.msra.mxu0 0
      %530 = vmatprep.subr.bf16.mxu0 0
      %531 = vmatpush1.bf16.msra.mxu0 0
      %532 = vmatprep.subr.bf16.mxu0 0
      %533 = vmatpush1.bf16.msra.mxu0 0
      %534 = vmatprep.subr.bf16.mxu0 0
      %535 = vmatpush1.bf16.msra.mxu0 0
      %536 = vmatprep.subr.bf16.mxu0 0
      %537 = vmatpush1.bf16.msra.mxu0 0
      %538 = vmatprep.subr.bf16.mxu0 0
      %539 = vmatpush1.bf16.msra.mxu0 0
      %540 = vmatprep.subr.bf16.mxu0 0
      %541 = vmatpush1.bf16.msra.mxu0 0
      %542 = vmatprep.subr.bf16.mxu0 0
      %543 = vmatpush1.bf16.msra.mxu0 0
      %544 = vmatprep.subr.bf16.mxu0 0
      %545 = vmatpush1.bf16.msra.mxu0 0
      %546 = vmatprep.subr.bf16.mxu0 0
      %547 = vmatpush1.bf16.msra.mxu0 0
      %548 = vmatprep.subr.bf16.mxu0 0
      %549 = vmatpush1.bf16.msra.mxu0 0
      %550 = vmatprep.subr.bf16.mxu0 0
      %551 = vmatpush1.bf16.msra.mxu0 0
      %552 = vmatprep.subr.bf16.mxu0 0
      %553 = vmatpush1.bf16.msra.mxu0 0
      %554 = vmatprep.subr.bf16.mxu0 0
      %555 = vmatpush1.bf16.msra.mxu0 0
      %556 = vmatprep.subr.bf16.mxu0 0
      %557 = vmatpush1.bf16.msra.mxu0 0
      %558 = vmatprep.mubr.bf16.mxu0 0
      %559 = vmatmul.mubr.bf16.gmra.mrb[0].mxu0 %v471
      %v560 = vpop.f32.mrb[0].mxu0
      %v561 = vadd.f32 0.0, %v560
      %v562 = vpop.f32.mrb[0].mxu0
      %v563 = vpop.f32.mrb[0].mxu0
      %v564 = vadd.f32 0.0, %v563
      %v565 = vpop.f32.mrb[0].mxu0
      %566 = vdwg.mxu0
      %v569 = vunpack.c.l.b16 %v442
      %v570 = vunpack.c.l.b16 %v443
      %v571 = vpack.c.b16 %v570, %v569
      %v573 = vsel %vm469, %v571, 0
      %v576 = vsel %vm473, %v457, 0
      %v579 = vsel %vm473, %v458, 0
      %v582 = vsel %vm473, %v459, 0
      %584 = vmatprep.subr.bf16.mxu0 %v579
      %585 = vmatpush1.bf16.msra.mxu0 %v576
      %586 = vmatprep.subr.bf16.mxu0 0
      %587 = vmatpush1.bf16.msra.mxu0 0
      %588 = vmatprep.subr.bf16.mxu0 0
      %589 = vmatpush1.bf16.msra.mxu0 0
      %590 = vmatprep.subr.bf16.mxu0 0
      %591 = vmatpush1.bf16.msra.mxu0 0
      %592 = vmatprep.subr.bf16.mxu0 0
      %593 = vmatpush1.bf16.msra.mxu0 0
      %594 = vmatprep.subr.bf16.mxu0 0
      %595 = vmatpush1.bf16.msra.mxu0 0
      %596 = vmatprep.subr.bf16.mxu0 0
      %597 = vmatpush1.bf16.msra.mxu0 0
      %598 = vmatprep.subr.bf16.mxu0 0
      %599 = vmatpush1.bf16.msra.mxu0 0
      %600 = vmatprep.subr.bf16.mxu0 0
      %601 = vmatpush1.bf16.msra.mxu0 0
      %602 = vmatprep.subr.bf16.mxu0 0
      %603 = vmatpush1.bf16.msra.mxu0 0
      %604 = vmatprep.subr.bf16.mxu0 0
      %605 = vmatpush1.bf16.msra.mxu0 0
      %606 = vmatprep.subr.bf16.mxu0 0
      %607 = vmatpush1.bf16.msra.mxu0 0
      %608 = vmatprep.subr.bf16.mxu0 0
      %609 = vmatpush1.bf16.msra.mxu0 0
      %610 = vmatprep.subr.bf16.mxu0 0
      %611 = vmatpush1.bf16.msra.mxu0 0
      %612 = vmatprep.subr.bf16.mxu0 0
      %613 = vmatpush1.bf16.msra.mxu0 0
      %614 = vmatprep.subr.bf16.mxu0 0
      %615 = vmatpush1.bf16.msra.mxu0 0
      %616 = vmatprep.mubr.bf16.mxu0 0
      %617 = vmatmul.mubr.bf16.gmra.mrb[0].mxu0 %v573
      %v618 = vpop.f32.mrb[0].mxu0
      %v619 = vadd.f32 %v518, %v618
      %v620 = vpop.f32.mrb[0].mxu0
      %v621 = vadd.f32 %v520, %v620
      %v622 = vpop.f32.mrb[0].mxu0
      %v623 = vadd.f32 %v522, %v622
      %v624 = vpop.f32.mrb[0].mxu0
      %v625 = vadd.f32 %v524, %v624
      %626 = vdwg.mxu0
      %627 = vmatprep.subr.bf16.mxu0 0
      %628 = vmatpush1.bf16.msra.mxu0 %v582
      %629 = vmatprep.subr.bf16.mxu0 0
      %630 = vmatpush1.bf16.msra.mxu0 0
      %631 = vmatprep.subr.bf16.mxu0 0
      %632 = vmatpush1.bf16.msra.mxu0 0
      %633 = vmatprep.subr.bf16.mxu0 0
      %634 = vmatpush1.bf16.msra.mxu0 0
      %635 = vmatprep.subr.bf16.mxu0 0
      %636 = vmatpush1.bf16.msra.mxu0 0
      %637 = vmatprep.subr.bf16.mxu0 0
      %638 = vmatpush1.bf16.msra.mxu0 0
      %639 = vmatprep.subr.bf16.mxu0 0
      %640 = vmatpush1.bf16.msra.mxu0 0
      %641 = vmatprep.subr.bf16.mxu0 0
      %642 = vmatpush1.bf16.msra.mxu0 0
      %643 = vmatprep.subr.bf16.mxu0 0
      %644 = vmatpush1.bf16.msra.mxu0 0
      %645 = vmatprep.subr.bf16.mxu0 0
      %646 = vmatpush1.bf16.msra.mxu0 0
      %647 = vmatprep.subr.bf16.mxu0 0
      %648 = vmatpush1.bf16.msra.mxu0 0
      %649 = vmatprep.subr.bf16.mxu0 0
      %650 = vmatpush1.bf16.msra.mxu0 0
      %651 = vmatprep.subr.bf16.mxu0 0
      %652 = vmatpush1.bf16.msra.mxu0 0
      %653 = vmatprep.subr.bf16.mxu0 0
      %654 = vmatpush1.bf16.msra.mxu0 0
      %655 = vmatprep.subr.bf16.mxu0 0
      %656 = vmatpush1.bf16.msra.mxu0 0
      %657 = vmatprep.subr.bf16.mxu0 0
      %658 = vmatpush1.bf16.msra.mxu0 0
      %659 = vmatprep.mubr.bf16.mxu0 0
      %660 = vmatmul.mubr.bf16.gmra.mrb[0].mxu0 %v573
      %v661 = vpop.f32.mrb[0].mxu0
      %v662 = vadd.f32 %v561, %v661
      %v663 = vpop.f32.mrb[0].mxu0
      %v664 = vpop.f32.mrb[0].mxu0
      %v665 = vadd.f32 %v564, %v664
      %v666 = vpop.f32.mrb[0].mxu0
      %667 = vdwg.mxu0
      %s668 = scalar_lea.vmem %s2, 16
      %v669 = vld [vmem:[%s668] sm:$0xf]
      %v670 = vld [vmem:[%s668 + $0x4] sm:$0xf]
      %v673 = vunpack.c.l.b16 %v669
      %v674 = vunpack.c.l.b16 %v670
      %v675 = vpack.c.b16 %v674, %v673
      %676 = vrot.lane.b32.xlu0 %v457, 126
      %v677 = vpop.permute.xlu0 %676
      %678 = vrot.lane.b32.xlu0 %v458, 126
      %v679 = vpop.permute.xlu0 %678
      %680 = vrot.lane.b32.xlu0 %v459, 126
      %v681 = vpop.permute.xlu0 %680
      %vm682 = vcmask 1031168
      %v683 = vsel %vm682, %v677, %v679
      %v684 = vsel %vm682, %v679, %v681
      %v686 = vsel %vm469, %v675, 0
      %v689 = vsel %vm473, %v683, 0
      %v692 = vsel %vm473, %v684, 0
      %v695 = vsel %vm473, %v681, 0
      %697 = vmatprep.subr.bf16.mxu0 %v692
      %698 = vmatpush1.bf16.msra.mxu0 %v689
      %699 = vmatprep.subr.bf16.mxu0 0
      %700 = vmatpush1.bf16.msra.mxu0 0
      %701 = vmatprep.subr.bf16.mxu0 0
      %702 = vmatpush1.bf16.msra.mxu0 0
      %703 = vmatprep.subr.bf16.mxu0 0
      %704 = vmatpush1.bf16.msra.mxu0 0
      %705 = vmatprep.subr.bf16.mxu0 0
      %706 = vmatpush1.bf16.msra.mxu0 0
      %707 = vmatprep.subr.bf16.mxu0 0
      %708 = vmatpush1.bf16.msra.mxu0 0
      %709 = vmatprep.subr.bf16.mxu0 0
      %710 = vmatpush1.bf16.msra.mxu0 0
      %711 = vmatprep.subr.bf16.mxu0 0
      %712 = vmatpush1.bf16.msra.mxu0 0
      %713 = vmatprep.subr.bf16.mxu0 0
      %714 = vmatpush1.bf16.msra.mxu0 0
      %715 = vmatprep.subr.bf16.mxu0 0
      %716 = vmatpush1.bf16.msra.mxu0 0
      %717 = vmatprep.subr.bf16.mxu0 0
      %718 = vmatpush1.bf16.msra.mxu0 0
      %719 = vmatprep.subr.bf16.mxu0 0
      %720 = vmatpush1.bf16.msra.mxu0 0
      %721 = vmatprep.subr.bf16.mxu0 0
      %722 = vmatpush1.bf16.msra.mxu0 0
      %723 = vmatprep.subr.bf16.mxu0 0
      %724 = vmatpush1.bf16.msra.mxu0 0
      %725 = vmatprep.subr.bf16.mxu0 0
      %726 = vmatpush1.bf16.msra.mxu0 0
      %727 = vmatprep.subr.bf16.mxu0 0
      %728 = vmatpush1.bf16.msra.mxu0 0
      %729 = vmatprep.mubr.bf16.mxu0 0
      %730 = vmatmul.mubr.bf16.gmra.mrb[0].mxu0 %v686
      %v731 = vpop.f32.mrb[0].mxu0
      %v732 = vadd.f32 0.0, %v731
      %v733 = vpop.f32.mrb[0].mxu0
      %v734 = vadd.f32 0.0, %v733
      %v735 = vpop.f32.mrb[0].mxu0
      %v736 = vadd.f32 0.0, %v735
      %v737 = vpop.f32.mrb[0].mxu0
      %v738 = vadd.f32 0.0, %v737
      %739 = vdwg.mxu0
      %740 = vmatprep.subr.bf16.mxu0 0
      %741 = vmatpush1.bf16.msra.mxu0 %v695
      %742 = vmatprep.subr.bf16.mxu0 0
      %743 = vmatpush1.bf16.msra.mxu0 0
      %744 = vmatprep.subr.bf16.mxu0 0
      %745 = vmatpush1.bf16.msra.mxu0 0
      %746 = vmatprep.subr.bf16.mxu0 0
      %747 = vmatpush1.bf16.msra.mxu0 0
      %748 = vmatprep.subr.bf16.mxu0 0
      %749 = vmatpush1.bf16.msra.mxu0 0
      %750 = vmatprep.subr.bf16.mxu0 0
      %751 = vmatpush1.bf16.msra.mxu0 0
      %752 = vmatprep.subr.bf16.mxu0 0
      %753 = vmatpush1.bf16.msra.mxu0 0
      %754 = vmatprep.subr.bf16.mxu0 0
      %755 = vmatpush1.bf16.msra.mxu0 0
      %756 = vmatprep.subr.bf16.mxu0 0
      %757 = vmatpush1.bf16.msra.mxu0 0
      %758 = vmatprep.subr.bf16.mxu0 0
      %759 = vmatpush1.bf16.msra.mxu0 0
      %760 = vmatprep.subr.bf16.mxu0 0
      %761 = vmatpush1.bf16.msra.mxu0 0
      %762 = vmatprep.subr.bf16.mxu0 0
      %763 = vmatpush1.bf16.msra.mxu0 0
      %764 = vmatprep.subr.bf16.mxu0 0
      %765 = vmatpush1.bf16.msra.mxu0 0
      %766 = vmatprep.subr.bf16.mxu0 0
      %767 = vmatpush1.bf16.msra.mxu0 0
      %768 = vmatprep.subr.bf16.mxu0 0
      %769 = vmatpush1.bf16.msra.mxu0 0
      %770 = vmatprep.subr.bf16.mxu0 0
      %771 = vmatpush1.bf16.msra.mxu0 0
      %772 = vmatprep.mubr.bf16.mxu0 0
      %773 = vmatmul.mubr.bf16.gmra.mrb[0].mxu0 %v686
      %v774 = vpop.f32.mrb[0].mxu0
      %v775 = vadd.f32 0.0, %v774
      %v776 = vpop.f32.mrb[0].mxu0
      %v777 = vpop.f32.mrb[0].mxu0
      %v778 = vadd.f32 0.0, %v777
      %v779 = vpop.f32.mrb[0].mxu0
      %780 = vdwg.mxu0
      %v781 = vadd.f32 %v619, %v732
      %v782 = vadd.f32 %v621, %v734
      %v783 = vadd.f32 %v662, %v775
      %v784 = vadd.f32 %v623, %v736
      %v785 = vadd.f32 %v625, %v738
      %v786 = vadd.f32 %v665, %v778
      %s787 = scalar_lea.vmem %s2, 24
      %v788 = vld [vmem:[%s787] sm:$0xf]
      %v789 = vld [vmem:[%s787 + $0x4] sm:$0xf]
      %v792 = vunpack.c.l.b16 %v788
      %v793 = vunpack.c.l.b16 %v789
      %v794 = vpack.c.b16 %v793, %v792
      %795 = vrot.lane.b32.xlu0 %v457, 112
      %v796 = vpop.permute.xlu0 %795
      %797 = vrot.lane.b32.xlu0 %v458, 112
      %v798 = vpop.permute.xlu0 %797
      %799 = vrot.lane.b32.xlu0 %v459, 112
      %v800 = vpop.permute.xlu0 %799
      %vm801 = vcmask 916480
      %v802 = vsel %vm801, %v796, %v798
      %v803 = vsel %vm801, %v798, %v800
      %v805 = vsel %vm469, %v794, 0
      %v808 = vsel %vm473, %v802, 0
      %v811 = vsel %vm473, %v803, 0
      %v814 = vsel %vm473, %v800, 0
      %816 = vmatprep.subr.bf16.mxu0 %v811
      %817 = vmatpush1.bf16.msra.mxu0 %v808
      %818 = vmatprep.subr.bf16.mxu0 0
      %819 = vmatpush1.bf16.msra.mxu0 0
      %820 = vmatprep.subr.bf16.mxu0 0
      %821 = vmatpush1.bf16.msra.mxu0 0
      %822 = vmatprep.subr.bf16.mxu0 0
      %823 = vmatpush1.bf16.msra.mxu0 0
      %824 = vmatprep.subr.bf16.mxu0 0
      %825 = vmatpush1.bf16.msra.mxu0 0
      %826 = vmatprep.subr.bf16.mxu0 0
      %827 = vmatpush1.bf16.msra.mxu0 0
      %828 = vmatprep.subr.bf16.mxu0 0
      %829 = vmatpush1.bf16.msra.mxu0 0
      %830 = vmatprep.subr.bf16.mxu0 0
      %831 = vmatpush1.bf16.msra.mxu0 0
      %832 = vmatprep.subr.bf16.mxu0 0
      %833 = vmatpush1.bf16.msra.mxu0 0
      %834 = vmatprep.subr.bf16.mxu0 0
      %835 = vmatpush1.bf16.msra.mxu0 0
      %836 = vmatprep.subr.bf16.mxu0 0
      %837 = vmatpush1.bf16.msra.mxu0 0
      %838 = vmatprep.subr.bf16.mxu0 0
      %839 = vmatpush1.bf16.msra.mxu0 0
      %840 = vmatprep.subr.bf16.mxu0 0
      %841 = vmatpush1.bf16.msra.mxu0 0
      %842 = vmatprep.subr.bf16.mxu0 0
      %843 = vmatpush1.bf16.msra.mxu0 0
      %844 = vmatprep.subr.bf16.mxu0 0
      %845 = vmatpush1.bf16.msra.mxu0 0
      %846 = vmatprep.subr.bf16.mxu0 0
      %847 = vmatpush1.bf16.msra.mxu0 0
      %848 = vmatprep.mubr.bf16.mxu0 0
      %849 = vmatmul.mubr.bf16.gmra.mrb[0].mxu0 %v805
      %v850 = vpop.f32.mrb[0].mxu0
      %v851 = vadd.f32 0.0, %v850
      %v852 = vpop.f32.mrb[0].mxu0
      %v853 = vadd.f32 0.0, %v852
      %v854 = vpop.f32.mrb[0].mxu0
      %v855 = vadd.f32 0.0, %v854
      %v856 = vpop.f32.mrb[0].mxu0
      %v857 = vadd.f32 0.0, %v856
      %858 = vdwg.mxu0
      %859 = vmatprep.subr.bf16.mxu0 0
      %860 = vmatpush1.bf16.msra.mxu0 %v814
      %861 = vmatprep.subr.bf16.mxu0 0
      %862 = vmatpush1.bf16.msra.mxu0 0
      %863 = vmatprep.subr.bf16.mxu0 0
      %864 = vmatpush1.bf16.msra.mxu0 0
      %865 = vmatprep.subr.bf16.mxu0 0
      %866 = vmatpush1.bf16.msra.mxu0 0
      %867 = vmatprep.subr.bf16.mxu0 0
      %868 = vmatpush1.bf16.msra.mxu0 0
      %869 = vmatprep.subr.bf16.mxu0 0
      %870 = vmatpush1.bf16.msra.mxu0 0
      %871 = vmatprep.subr.bf16.mxu0 0
      %872 = vmatpush1.bf16.msra.mxu0 0
      %873 = vmatprep.subr.bf16.mxu0 0
      %874 = vmatpush1.bf16.msra.mxu0 0
      %875 = vmatprep.subr.bf16.mxu0 0
      %876 = vmatpush1.bf16.msra.mxu0 0
      %877 = vmatprep.subr.bf16.mxu0 0
      %878 = vmatpush1.bf16.msra.mxu0 0
      %879 = vmatprep.subr.bf16.mxu0 0
      %880 = vmatpush1.bf16.msra.mxu0 0
      %881 = vmatprep.subr.bf16.mxu0 0
      %882 = vmatpush1.bf16.msra.mxu0 0
      %883 = vmatprep.subr.bf16.mxu0 0
      %884 = vmatpush1.bf16.msra.mxu0 0
      %885 = vmatprep.subr.bf16.mxu0 0
      %886 = vmatpush1.bf16.msra.mxu0 0
      %887 = vmatprep.subr.bf16.mxu0 0
      %888 = vmatpush1.bf16.msra.mxu0 0
      %889 = vmatprep.subr.bf16.mxu0 0
      %890 = vmatpush1.bf16.msra.mxu0 0
      %891 = vmatprep.mubr.bf16.mxu0 0
      %892 = vmatmul.mubr.bf16.gmra.mrb[0].mxu0 %v805
      %v893 = vpop.f32.mrb[0].mxu0
      %v894 = vadd.f32 0.0, %v893
      %v895 = vpop.f32.mrb[0].mxu0
      %v896 = vpop.f32.mrb[0].mxu0
      %v897 = vadd.f32 0.0, %v896
      %v898 = vpop.f32.mrb[0].mxu0
      %899 = vdwg.mxu0
      %v900 = vadd.f32 %v781, %v851
      %v901 = vadd.f32 %v782, %v853
      %v902 = vadd.f32 %v783, %v894
      %v903 = vadd.f32 %v784, %v855
      %v904 = vadd.f32 %v785, %v857
      %v905 = vadd.f32 %v786, %v897
      %s906 = scalar_lea.vmem %s2, 32
      %v907 = vld [vmem:[%s906] sm:$0xf]
      %v908 = vld [vmem:[%s906 + $0x4] sm:$0xf]
      %v911 = vunpack.c.l.b16 %v907
      %v912 = vunpack.c.l.b16 %v908
      %v913 = vpack.c.b16 %v912, %v911
      %914 = vrot.lane.b32.xlu0 %v457, 111
      %v915 = vpop.permute.xlu0 %914
      %916 = vrot.lane.b32.xlu0 %v458, 111
      %v917 = vpop.permute.xlu0 %916
      %918 = vrot.lane.b32.xlu0 %v459, 111
      %v919 = vpop.permute.xlu0 %918
      %vm920 = vcmask 908288
      %v921 = vsel %vm920, %v915, %v917
      %v922 = vsel %vm920, %v917, %v919
      %v924 = vsel %vm469, %v913, 0
      %v927 = vsel %vm473, %v921, 0
      %v930 = vsel %vm473, %v922, 0
      %v933 = vsel %vm473, %v919, 0
      %935 = vmatprep.subr.bf16.mxu0 %v930
      %936 = vmatpush1.bf16.msra.mxu0 %v927
      %937 = vmatprep.subr.bf16.mxu0 0
      %938 = vmatpush1.bf16.msra.mxu0 0
      %939 = vmatprep.subr.bf16.mxu0 0
      %940 = vmatpush1.bf16.msra.mxu0 0
      %941 = vmatprep.subr.bf16.mxu0 0
      %942 = vmatpush1.bf16.msra.mxu0 0
      %943 = vmatprep.subr.bf16.mxu0 0
      %944 = vmatpush1.bf16.msra.mxu0 0
      %945 = vmatprep.subr.bf16.mxu0 0
      %946 = vmatpush1.bf16.msra.mxu0 0
      %947 = vmatprep.subr.bf16.mxu0 0
      %948 = vmatpush1.bf16.msra.mxu0 0
      %949 = vmatprep.subr.bf16.mxu0 0
      %950 = vmatpush1.bf16.msra.mxu0 0
      %951 = vmatprep.subr.bf16.mxu0 0
      %952 = vmatpush1.bf16.msra.mxu0 0
      %953 = vmatprep.subr.bf16.mxu0 0
      %954 = vmatpush1.bf16.msra.mxu0 0
      %955 = vmatprep.subr.bf16.mxu0 0
      %956 = vmatpush1.bf16.msra.mxu0 0
      %957 = vmatprep.subr.bf16.mxu0 0
      %958 = vmatpush1.bf16.msra.mxu0 0
      %959 = vmatprep.subr.bf16.mxu0 0
      %960 = vmatpush1.bf16.msra.mxu0 0
      %961 = vmatprep.subr.bf16.mxu0 0
      %962 = vmatpush1.bf16.msra.mxu0 0
      %963 = vmatprep.subr.bf16.mxu0 0
      %964 = vmatpush1.bf16.msra.mxu0 0
      %965 = vmatprep.subr.bf16.mxu0 0
      %966 = vmatpush1.bf16.msra.mxu0 0
      %967 = vmatprep.mubr.bf16.mxu0 0
      %968 = vmatmul.mubr.bf16.gmra.mrb[0].mxu0 %v924
      %v969 = vpop.f32.mrb[0].mxu0
      %v970 = vadd.f32 0.0, %v969
      %v971 = vpop.f32.mrb[0].mxu0
      %v972 = vadd.f32 0.0, %v971
      %v973 = vpop.f32.mrb[0].mxu0
      %v974 = vadd.f32 0.0, %v973
      %v975 = vpop.f32.mrb[0].mxu0
      %v976 = vadd.f32 0.0, %v975
      %977 = vdwg.mxu0
      %978 = vmatprep.subr.bf16.mxu0 0
      %979 = vmatpush1.bf16.msra.mxu0 %v933
      %980 = vmatprep.subr.bf16.mxu0 0
      %981 = vmatpush1.bf16.msra.mxu0 0
      %982 = vmatprep.subr.bf16.mxu0 0
      %983 = vmatpush1.bf16.msra.mxu0 0
      %984 = vmatprep.subr.bf16.mxu0 0
      %985 = vmatpush1.bf16.msra.mxu0 0
      %986 = vmatprep.subr.bf16.mxu0 0
      %987 = vmatpush1.bf16.msra.mxu0 0
      %988 = vmatprep.subr.bf16.mxu0 0
      %989 = vmatpush1.bf16.msra.mxu0 0
      %990 = vmatprep.subr.bf16.mxu0 0
      %991 = vmatpush1.bf16.msra.mxu0 0
      %992 = vmatprep.subr.bf16.mxu0 0
      %993 = vmatpush1.bf16.msra.mxu0 0
      %994 = vmatprep.subr.bf16.mxu0 0
      %995 = vmatpush1.bf16.msra.mxu0 0
      %996 = vmatprep.subr.bf16.mxu0 0
      %997 = vmatpush1.bf16.msra.mxu0 0
      %998 = vmatprep.subr.bf16.mxu0 0
      %999 = vmatpush1.bf16.msra.mxu0 0
      %1000 = vmatprep.subr.bf16.mxu0 0
      %1001 = vmatpush1.bf16.msra.mxu0 0
      %1002 = vmatprep.subr.bf16.mxu0 0
      %1003 = vmatpush1.bf16.msra.mxu0 0
      %1004 = vmatprep.subr.bf16.mxu0 0
      %1005 = vmatpush1.bf16.msra.mxu0 0
      %1006 = vmatprep.subr.bf16.mxu0 0
      %1007 = vmatpush1.bf16.msra.mxu0 0
      %1008 = vmatprep.subr.bf16.mxu0 0
      %1009 = vmatpush1.bf16.msra.mxu0 0
      %1010 = vmatprep.mubr.bf16.mxu0 0
      %1011 = vmatmul.mubr.bf16.gmra.mrb[0].mxu0 %v924
      %v1012 = vpop.f32.mrb[0].mxu0
      %v1013 = vadd.f32 0.0, %v1012
      %v1014 = vpop.f32.mrb[0].mxu0
      %v1015 = vpop.f32.mrb[0].mxu0
      %v1016 = vadd.f32 0.0, %v1015
      %v1017 = vpop.f32.mrb[0].mxu0
      %1018 = vdwg.mxu0
      %v1019 = vadd.f32 %v900, %v970
      %v1020 = vadd.f32 %v901, %v972
      %v1021 = vadd.f32 %v902, %v1013
      %v1022 = vadd.f32 %v903, %v974
      %v1023 = vadd.f32 %v904, %v976
      %v1024 = vadd.f32 %v905, %v1016
      %s1025 = scalar_lea.vmem %s2, 40
      %v1026 = vld [vmem:[%s1025] sm:$0xf]
      %v1027 = vld [vmem:[%s1025 + $0x4] sm:$0xf]
      %v1030 = vunpack.c.l.b16 %v1026
      %v1031 = vunpack.c.l.b16 %v1027
      %v1032 = vpack.c.b16 %v1031, %v1030
      %1033 = vrot.lane.b32.xlu0 %v457, 110
      %v1034 = vpop.permute.xlu0 %1033
      %1035 = vrot.lane.b32.xlu0 %v458, 110
      %v1036 = vpop.permute.xlu0 %1035
      %1037 = vrot.lane.b32.xlu0 %v459, 110
      %v1038 = vpop.permute.xlu0 %1037
      %vm1039 = vcmask 900096
      %v1040 = vsel %vm1039, %v1034, %v1036
      %v1041 = vsel %vm1039, %v1036, %v1038
      %v1043 = vsel %vm469, %v1032, 0
      %v1046 = vsel %vm473, %v1040, 0
      %v1049 = vsel %vm473, %v1041, 0
      %v1052 = vsel %vm473, %v1038, 0
      %1054 = vmatprep.subr.bf16.mxu0 %v1049
      %1055 = vmatpush1.bf16.msra.mxu0 %v1046
      %1056 = vmatprep.subr.bf16.mxu0 0
      %1057 = vmatpush1.bf16.msra.mxu0 0
      %1058 = vmatprep.subr.bf16.mxu0 0
      %1059 = vmatpush1.bf16.msra.mxu0 0
      %1060 = vmatprep.subr.bf16.mxu0 0
      %1061 = vmatpush1.bf16.msra.mxu0 0
      %1062 = vmatprep.subr.bf16.mxu0 0
      %1063 = vmatpush1.bf16.msra.mxu0 0
      %1064 = vmatprep.subr.bf16.mxu0 0
      %1065 = vmatpush1.bf16.msra.mxu0 0
      %1066 = vmatprep.subr.bf16.mxu0 0
      %1067 = vmatpush1.bf16.msra.mxu0 0
      %1068 = vmatprep.subr.bf16.mxu0 0
      %1069 = vmatpush1.bf16.msra.mxu0 0
      %1070 = vmatprep.subr.bf16.mxu0 0
      %1071 = vmatpush1.bf16.msra.mxu0 0
      %1072 = vmatprep.subr.bf16.mxu0 0
      %1073 = vmatpush1.bf16.msra.mxu0 0
      %1074 = vmatprep.subr.bf16.mxu0 0
      %1075 = vmatpush1.bf16.msra.mxu0 0
      %1076 = vmatprep.subr.bf16.mxu0 0
      %1077 = vmatpush1.bf16.msra.mxu0 0
      %1078 = vmatprep.subr.bf16.mxu0 0
      %1079 = vmatpush1.bf16.msra.mxu0 0
      %1080 = vmatprep.subr.bf16.mxu0 0
      %1081 = vmatpush1.bf16.msra.mxu0 0
      %1082 = vmatprep.subr.bf16.mxu0 0
      %1083 = vmatpush1.bf16.msra.mxu0 0
      %1084 = vmatprep.subr.bf16.mxu0 0
      %1085 = vmatpush1.bf16.msra.mxu0 0
      %1086 = vmatprep.mubr.bf16.mxu0 0
      %1087 = vmatmul.mubr.bf16.gmra.mrb[0].mxu0 %v1043
      %v1088 = vpop.f32.mrb[0].mxu0
      %v1089 = vadd.f32 0.0, %v1088
      %v1090 = vpop.f32.mrb[0].mxu0
      %v1091 = vadd.f32 0.0, %v1090
      %v1092 = vpop.f32.mrb[0].mxu0
      %v1093 = vadd.f32 0.0, %v1092
      %v1094 = vpop.f32.mrb[0].mxu0
      %v1095 = vadd.f32 0.0, %v1094
      %1096 = vdwg.mxu0
      %1097 = vmatprep.subr.bf16.mxu0 0
      %1098 = vmatpush1.bf16.msra.mxu0 %v1052
      %1099 = vmatprep.subr.bf16.mxu0 0
      %1100 = vmatpush1.bf16.msra.mxu0 0
      %1101 = vmatprep.subr.bf16.mxu0 0
      %1102 = vmatpush1.bf16.msra.mxu0 0
      %1103 = vmatprep.subr.bf16.mxu0 0
      %1104 = vmatpush1.bf16.msra.mxu0 0
      %1105 = vmatprep.subr.bf16.mxu0 0
      %1106 = vmatpush1.bf16.msra.mxu0 0
      %1107 = vmatprep.subr.bf16.mxu0 0
      %1108 = vmatpush1.bf16.msra.mxu0 0
      %1109 = vmatprep.subr.bf16.mxu0 0
      %1110 = vmatpush1.bf16.msra.mxu0 0
      %1111 = vmatprep.subr.bf16.mxu0 0
      %1112 = vmatpush1.bf16.msra.mxu0 0
      %1113 = vmatprep.subr.bf16.mxu0 0
      %1114 = vmatpush1.bf16.msra.mxu0 0
      %1115 = vmatprep.subr.bf16.mxu0 0
      %1116 = vmatpush1.bf16.msra.mxu0 0
      %1117 = vmatprep.subr.bf16.mxu0 0
      %1118 = vmatpush1.bf16.msra.mxu0 0
      %1119 = vmatprep.subr.bf16.mxu0 0
      %1120 = vmatpush1.bf16.msra.mxu0 0
      %1121 = vmatprep.subr.bf16.mxu0 0
      %1122 = vmatpush1.bf16.msra.mxu0 0
      %1123 = vmatprep.subr.bf16.mxu0 0
      %1124 = vmatpush1.bf16.msra.mxu0 0
      %1125 = vmatprep.subr.bf16.mxu0 0
      %1126 = vmatpush1.bf16.msra.mxu0 0
      %1127 = vmatprep.subr.bf16.mxu0 0
      %1128 = vmatpush1.bf16.msra.mxu0 0
      %1129 = vmatprep.mubr.bf16.mxu0 0
      %1130 = vmatmul.mubr.bf16.gmra.mrb[0].mxu0 %v1043
      %v1131 = vpop.f32.mrb[0].mxu0
      %v1132 = vadd.f32 0.0, %v1131
      %v1133 = vpop.f32.mrb[0].mxu0
      %v1134 = vpop.f32.mrb[0].mxu0
      %v1135 = vadd.f32 0.0, %v1134
      %v1136 = vpop.f32.mrb[0].mxu0
      %1137 = vdwg.mxu0
      %v1138 = vadd.f32 %v1019, %v1089
      %v1139 = vadd.f32 %v1020, %v1091
      %v1140 = vadd.f32 %v1021, %v1132
      %v1141 = vadd.f32 %v1022, %v1093
      %v1142 = vadd.f32 %v1023, %v1095
      %v1143 = vadd.f32 %v1024, %v1135
      %s1144 = scalar_lea.vmem %s2, 48
      %v1145 = vld [vmem:[%s1144] sm:$0xf]
      %v1146 = vld [vmem:[%s1144 + $0x4] sm:$0xf]
      %v1149 = vunpack.c.l.b16 %v1145
      %v1150 = vunpack.c.l.b16 %v1146
      %v1151 = vpack.c.b16 %v1150, %v1149
      %1152 = vrot.lane.b32.xlu0 %v457, 96
      %v1153 = vpop.permute.xlu0 %1152
      %1154 = vrot.lane.b32.xlu0 %v458, 96
      %v1155 = vpop.permute.xlu0 %1154
      %1156 = vrot.lane.b32.xlu0 %v459, 96
      %v1157 = vpop.permute.xlu0 %1156
      %vm1158 = vcmask 785408
      %v1159 = vsel %vm1158, %v1153, %v1155
      %v1160 = vsel %vm1158, %v1155, %v1157
      %v1162 = vsel %vm469, %v1151, 0
      %v1165 = vsel %vm473, %v1159, 0
      %v1168 = vsel %vm473, %v1160, 0
      %v1171 = vsel %vm473, %v1157, 0
      %1173 = vmatprep.subr.bf16.mxu0 %v1168
      %1174 = vmatpush1.bf16.msra.mxu0 %v1165
      %1175 = vmatprep.subr.bf16.mxu0 0
      %1176 = vmatpush1.bf16.msra.mxu0 0
      %1177 = vmatprep.subr.bf16.mxu0 0
      %1178 = vmatpush1.bf16.msra.mxu0 0
      %1179 = vmatprep.subr.bf16.mxu0 0
      %1180 = vmatpush1.bf16.msra.mxu0 0
      %1181 = vmatprep.subr.bf16.mxu0 0
      %1182 = vmatpush1.bf16.msra.mxu0 0
      %1183 = vmatprep.subr.bf16.mxu0 0
      %1184 = vmatpush1.bf16.msra.mxu0 0
      %1185 = vmatprep.subr.bf16.mxu0 0
      %1186 = vmatpush1.bf16.msra.mxu0 0
      %1187 = vmatprep.subr.bf16.mxu0 0
      %1188 = vmatpush1.bf16.msra.mxu0 0
      %1189 = vmatprep.subr.bf16.mxu0 0
      %1190 = vmatpush1.bf16.msra.mxu0 0
      %1191 = vmatprep.subr.bf16.mxu0 0
      %1192 = vmatpush1.bf16.msra.mxu0 0
      %1193 = vmatprep.subr.bf16.mxu0 0
      %1194 = vmatpush1.bf16.msra.mxu0 0
      %1195 = vmatprep.subr.bf16.mxu0 0
      %1196 = vmatpush1.bf16.msra.mxu0 0
      %1197 = vmatprep.subr.bf16.mxu0 0
      %1198 = vmatpush1.bf16.msra.mxu0 0
      %1199 = vmatprep.subr.bf16.mxu0 0
      %1200 = vmatpush1.bf16.msra.mxu0 0
      %1201 = vmatprep.subr.bf16.mxu0 0
      %1202 = vmatpush1.bf16.msra.mxu0 0
      %1203 = vmatprep.subr.bf16.mxu0 0
      %1204 = vmatpush1.bf16.msra.mxu0 0
      %1205 = vmatprep.mubr.bf16.mxu0 0
      %1206 = vmatmul.mubr.bf16.gmra.mrb[0].mxu0 %v1162
      %v1207 = vpop.f32.mrb[0].mxu0
      %v1208 = vadd.f32 0.0, %v1207
      %v1209 = vpop.f32.mrb[0].mxu0
      %v1210 = vadd.f32 0.0, %v1209
      %v1211 = vpop.f32.mrb[0].mxu0
      %v1212 = vadd.f32 0.0, %v1211
      %v1213 = vpop.f32.mrb[0].mxu0
      %v1214 = vadd.f32 0.0, %v1213
      %1215 = vdwg.mxu0
      %1216 = vmatprep.subr.bf16.mxu0 0
      %1217 = vmatpush1.bf16.msra.mxu0 %v1171
      %1218 = vmatprep.subr.bf16.mxu0 0
      %1219 = vmatpush1.bf16.msra.mxu0 0
      %1220 = vmatprep.subr.bf16.mxu0 0
      %1221 = vmatpush1.bf16.msra.mxu0 0
      %1222 = vmatprep.subr.bf16.mxu0 0
      %1223 = vmatpush1.bf16.msra.mxu0 0
      %1224 = vmatprep.subr.bf16.mxu0 0
      %1225 = vmatpush1.bf16.msra.mxu0 0
      %1226 = vmatprep.subr.bf16.mxu0 0
      %1227 = vmatpush1.bf16.msra.mxu0 0
      %1228 = vmatprep.subr.bf16.mxu0 0
      %1229 = vmatpush1.bf16.msra.mxu0 0
      %1230 = vmatprep.subr.bf16.mxu0 0
      %1231 = vmatpush1.bf16.msra.mxu0 0
      %1232 = vmatprep.subr.bf16.mxu0 0
      %1233 = vmatpush1.bf16.msra.mxu0 0
      %1234 = vmatprep.subr.bf16.mxu0 0
      %1235 = vmatpush1.bf16.msra.mxu0 0
      %1236 = vmatprep.subr.bf16.mxu0 0
      %1237 = vmatpush1.bf16.msra.mxu0 0
      %1238 = vmatprep.subr.bf16.mxu0 0
      %1239 = vmatpush1.bf16.msra.mxu0 0
      %1240 = vmatprep.subr.bf16.mxu0 0
      %1241 = vmatpush1.bf16.msra.mxu0 0
      %1242 = vmatprep.subr.bf16.mxu0 0
      %1243 = vmatpush1.bf16.msra.mxu0 0
      %1244 = vmatprep.subr.bf16.mxu0 0
      %1245 = vmatpush1.bf16.msra.mxu0 0
      %1246 = vmatprep.subr.bf16.mxu0 0
      %1247 = vmatpush1.bf16.msra.mxu0 0
      %1248 = vmatprep.mubr.bf16.mxu0 0
      %1249 = vmatmul.mubr.bf16.gmra.mrb[0].mxu0 %v1162
      %v1250 = vpop.f32.mrb[0].mxu0
      %v1251 = vadd.f32 0.0, %v1250
      %v1252 = vpop.f32.mrb[0].mxu0
      %v1253 = vpop.f32.mrb[0].mxu0
      %v1254 = vadd.f32 0.0, %v1253
      %v1255 = vpop.f32.mrb[0].mxu0
      %1256 = vdwg.mxu0
      %v1257 = vadd.f32 %v1138, %v1208
      %v1258 = vadd.f32 %v1139, %v1210
      %v1259 = vadd.f32 %v1140, %v1251
      %v1260 = vadd.f32 %v1141, %v1212
      %v1261 = vadd.f32 %v1142, %v1214
      %v1262 = vadd.f32 %v1143, %v1254
      %s1263 = scalar_lea.vmem %s2, 56
      %v1264 = vld [vmem:[%s1263] sm:$0xf]
      %v1265 = vld [vmem:[%s1263 + $0x4] sm:$0xf]
      %v1268 = vunpack.c.l.b16 %v1264
      %v1269 = vunpack.c.l.b16 %v1265
      %v1270 = vpack.c.b16 %v1269, %v1268
      %1271 = vrot.lane.b32.xlu0 %v457, 95
      %v1272 = vpop.permute.xlu0 %1271
      %1273 = vrot.lane.b32.xlu0 %v458, 95
      %v1274 = vpop.permute.xlu0 %1273
      %1275 = vrot.lane.b32.xlu0 %v459, 95
      %v1276 = vpop.permute.xlu0 %1275
      %vm1277 = vcmask 777216
      %v1278 = vsel %vm1277, %v1272, %v1274
      %v1279 = vsel %vm1277, %v1274, %v1276
      %v1281 = vsel %vm469, %v1270, 0
      %v1284 = vsel %vm473, %v1278, 0
      %v1287 = vsel %vm473, %v1279, 0
      %v1290 = vsel %vm473, %v1276, 0
      %1292 = vmatprep.subr.bf16.mxu0 %v1287
      %1293 = vmatpush1.bf16.msra.mxu0 %v1284
      %1294 = vmatprep.subr.bf16.mxu0 0
      %1295 = vmatpush1.bf16.msra.mxu0 0
      %1296 = vmatprep.subr.bf16.mxu0 0
      %1297 = vmatpush1.bf16.msra.mxu0 0
      %1298 = vmatprep.subr.bf16.mxu0 0
      %1299 = vmatpush1.bf16.msra.mxu0 0
      %1300 = vmatprep.subr.bf16.mxu0 0
      %1301 = vmatpush1.bf16.msra.mxu0 0
      %1302 = vmatprep.subr.bf16.mxu0 0
      %1303 = vmatpush1.bf16.msra.mxu0 0
      %1304 = vmatprep.subr.bf16.mxu0 0
      %1305 = vmatpush1.bf16.msra.mxu0 0
      %1306 = vmatprep.subr.bf16.mxu0 0
      %1307 = vmatpush1.bf16.msra.mxu0 0
      %1308 = vmatprep.subr.bf16.mxu0 0
      %1309 = vmatpush1.bf16.msra.mxu0 0
      %1310 = vmatprep.subr.bf16.mxu0 0
      %1311 = vmatpush1.bf16.msra.mxu0 0
      %1312 = vmatprep.subr.bf16.mxu0 0
      %1313 = vmatpush1.bf16.msra.mxu0 0
      %1314 = vmatprep.subr.bf16.mxu0 0
      %1315 = vmatpush1.bf16.msra.mxu0 0
      %1316 = vmatprep.subr.bf16.mxu0 0
      %1317 = vmatpush1.bf16.msra.mxu0 0
      %1318 = vmatprep.subr.bf16.mxu0 0
      %1319 = vmatpush1.bf16.msra.mxu0 0
      %1320 = vmatprep.subr.bf16.mxu0 0
      %1321 = vmatpush1.bf16.msra.mxu0 0
      %1322 = vmatprep.subr.bf16.mxu0 0
      %1323 = vmatpush1.bf16.msra.mxu0 0
      %1324 = vmatprep.mubr.bf16.mxu0 0
      %1325 = vmatmul.mubr.bf16.gmra.mrb[0].mxu0 %v1281
      %v1326 = vpop.f32.mrb[0].mxu0
      %v1327 = vadd.f32 0.0, %v1326
      %v1328 = vpop.f32.mrb[0].mxu0
      %v1329 = vadd.f32 0.0, %v1328
      %v1330 = vpop.f32.mrb[0].mxu0
      %v1331 = vadd.f32 0.0, %v1330
      %v1332 = vpop.f32.mrb[0].mxu0
      %v1333 = vadd.f32 0.0, %v1332
      %1334 = vdwg.mxu0
      %1335 = vmatprep.subr.bf16.mxu0 0
      %1336 = vmatpush1.bf16.msra.mxu0 %v1290
      %1337 = vmatprep.subr.bf16.mxu0 0
      %1338 = vmatpush1.bf16.msra.mxu0 0
      %1339 = vmatprep.subr.bf16.mxu0 0
      %1340 = vmatpush1.bf16.msra.mxu0 0
      %1341 = vmatprep.subr.bf16.mxu0 0
      %1342 = vmatpush1.bf16.msra.mxu0 0
      %1343 = vmatprep.subr.bf16.mxu0 0
      %1344 = vmatpush1.bf16.msra.mxu0 0
      %1345 = vmatprep.subr.bf16.mxu0 0
      %1346 = vmatpush1.bf16.msra.mxu0 0
      %1347 = vmatprep.subr.bf16.mxu0 0
      %1348 = vmatpush1.bf16.msra.mxu0 0
      %1349 = vmatprep.subr.bf16.mxu0 0
      %1350 = vmatpush1.bf16.msra.mxu0 0
      %1351 = vmatprep.subr.bf16.mxu0 0
      %1352 = vmatpush1.bf16.msra.mxu0 0
      %1353 = vmatprep.subr.bf16.mxu0 0
      %1354 = vmatpush1.bf16.msra.mxu0 0
      %1355 = vmatprep.subr.bf16.mxu0 0
      %1356 = vmatpush1.bf16.msra.mxu0 0
      %1357 = vmatprep.subr.bf16.mxu0 0
      %1358 = vmatpush1.bf16.msra.mxu0 0
      %1359 = vmatprep.subr.bf16.mxu0 0
      %1360 = vmatpush1.bf16.msra.mxu0 0
      %1361 = vmatprep.subr.bf16.mxu0 0
      %1362 = vmatpush1.bf16.msra.mxu0 0
      %1363 = vmatprep.subr.bf16.mxu0 0
      %1364 = vmatpush1.bf16.msra.mxu0 0
      %1365 = vmatprep.subr.bf16.mxu0 0
      %1366 = vmatpush1.bf16.msra.mxu0 0
      %1367 = vmatprep.mubr.bf16.mxu0 0
      %1368 = vmatmul.mubr.bf16.gmra.mrb[0].mxu0 %v1281
      %v1369 = vpop.f32.mrb[0].mxu0
      %v1370 = vadd.f32 0.0, %v1369
      %v1371 = vpop.f32.mrb[0].mxu0
      %v1372 = vpop.f32.mrb[0].mxu0
      %v1373 = vadd.f32 0.0, %v1372
      %v1374 = vpop.f32.mrb[0].mxu0
      %1375 = vdwg.mxu0
      %v1376 = vadd.f32 %v1257, %v1327
      %v1377 = vadd.f32 %v1258, %v1329
      %v1378 = vadd.f32 %v1259, %v1370
      %v1379 = vadd.f32 %v1260, %v1331
      %v1380 = vadd.f32 %v1261, %v1333
      %v1381 = vadd.f32 %v1262, %v1373
      %s1382 = scalar_lea.vmem %s2, 64
      %v1383 = vld [vmem:[%s1382] sm:$0xf]
      %v1384 = vld [vmem:[%s1382 + $0x4] sm:$0xf]
      %v1387 = vunpack.c.l.b16 %v1383
      %v1388 = vunpack.c.l.b16 %v1384
      %v1389 = vpack.c.b16 %v1388, %v1387
      %1390 = vrot.lane.b32.xlu0 %v457, 94
      %v1391 = vpop.permute.xlu0 %1390
      %1392 = vrot.lane.b32.xlu0 %v458, 94
      %v1393 = vpop.permute.xlu0 %1392
      %1394 = vrot.lane.b32.xlu0 %v459, 94
      %v1395 = vpop.permute.xlu0 %1394
      %vm1396 = vcmask 769024
      %v1397 = vsel %vm1396, %v1391, %v1393
      %v1398 = vsel %vm1396, %v1393, %v1395
      %v1400 = vsel %vm469, %v1389, 0
      %v1403 = vsel %vm473, %v1397, 0
      %v1406 = vsel %vm473, %v1398, 0
      %v1409 = vsel %vm473, %v1395, 0
      %1411 = vmatprep.subr.bf16.mxu0 %v1406
      %1412 = vmatpush1.bf16.msra.mxu0 %v1403
      %1413 = vmatprep.subr.bf16.mxu0 0
      %1414 = vmatpush1.bf16.msra.mxu0 0
      %1415 = vmatprep.subr.bf16.mxu0 0
      %1416 = vmatpush1.bf16.msra.mxu0 0
      %1417 = vmatprep.subr.bf16.mxu0 0
      %1418 = vmatpush1.bf16.msra.mxu0 0
      %1419 = vmatprep.subr.bf16.mxu0 0
      %1420 = vmatpush1.bf16.msra.mxu0 0
      %1421 = vmatprep.subr.bf16.mxu0 0
      %1422 = vmatpush1.bf16.msra.mxu0 0
      %1423 = vmatprep.subr.bf16.mxu0 0
      %1424 = vmatpush1.bf16.msra.mxu0 0
      %1425 = vmatprep.subr.bf16.mxu0 0
      %1426 = vmatpush1.bf16.msra.mxu0 0
      %1427 = vmatprep.subr.bf16.mxu0 0
      %1428 = vmatpush1.bf16.msra.mxu0 0
      %1429 = vmatprep.subr.bf16.mxu0 0
      %1430 = vmatpush1.bf16.msra.mxu0 0
      %1431 = vmatprep.subr.bf16.mxu0 0
      %1432 = vmatpush1.bf16.msra.mxu0 0
      %1433 = vmatprep.subr.bf16.mxu0 0
      %1434 = vmatpush1.bf16.msra.mxu0 0
      %1435 = vmatprep.subr.bf16.mxu0 0
      %1436 = vmatpush1.bf16.msra.mxu0 0
      %1437 = vmatprep.subr.bf16.mxu0 0
      %1438 = vmatpush1.bf16.msra.mxu0 0
      %1439 = vmatprep.subr.bf16.mxu0 0
      %1440 = vmatpush1.bf16.msra.mxu0 0
      %1441 = vmatprep.subr.bf16.mxu0 0
      %1442 = vmatpush1.bf16.msra.mxu0 0
      %1443 = vmatprep.mubr.bf16.mxu0 0
      %1444 = vmatmul.mubr.bf16.gmra.mrb[0].mxu0 %v1400
      %v1445 = vpop.f32.mrb[0].mxu0
      %v1446 = vadd.f32 0.0, %v1445
      %v1447 = vpop.f32.mrb[0].mxu0
      %v1448 = vadd.f32 0.0, %v1447
      %v1449 = vpop.f32.mrb[0].mxu0
      %v1450 = vadd.f32 0.0, %v1449
      %v1451 = vpop.f32.mrb[0].mxu0
      %v1452 = vadd.f32 0.0, %v1451
      %1453 = vdwg.mxu0
      %1454 = vmatprep.subr.bf16.mxu0 0
      %1455 = vmatpush1.bf16.msra.mxu0 %v1409
      %1456 = vmatprep.subr.bf16.mxu0 0
      %1457 = vmatpush1.bf16.msra.mxu0 0
      %1458 = vmatprep.subr.bf16.mxu0 0
      %1459 = vmatpush1.bf16.msra.mxu0 0
      %1460 = vmatprep.subr.bf16.mxu0 0
      %1461 = vmatpush1.bf16.msra.mxu0 0
      %1462 = vmatprep.subr.bf16.mxu0 0
      %1463 = vmatpush1.bf16.msra.mxu0 0
      %1464 = vmatprep.subr.bf16.mxu0 0
      %1465 = vmatpush1.bf16.msra.mxu0 0
      %1466 = vmatprep.subr.bf16.mxu0 0
      %1467 = vmatpush1.bf16.msra.mxu0 0
      %1468 = vmatprep.subr.bf16.mxu0 0
      %1469 = vmatpush1.bf16.msra.mxu0 0
      %1470 = vmatprep.subr.bf16.mxu0 0
      %1471 = vmatpush1.bf16.msra.mxu0 0
      %1472 = vmatprep.subr.bf16.mxu0 0
      %1473 = vmatpush1.bf16.msra.mxu0 0
      %1474 = vmatprep.subr.bf16.mxu0 0
      %1475 = vmatpush1.bf16.msra.mxu0 0
      %1476 = vmatprep.subr.bf16.mxu0 0
      %1477 = vmatpush1.bf16.msra.mxu0 0
      %1478 = vmatprep.subr.bf16.mxu0 0
      %1479 = vmatpush1.bf16.msra.mxu0 0
      %1480 = vmatprep.subr.bf16.mxu0 0
      %1481 = vmatpush1.bf16.msra.mxu0 0
      %1482 = vmatprep.subr.bf16.mxu0 0
      %1483 = vmatpush1.bf16.msra.mxu0 0
      %1484 = vmatprep.subr.bf16.mxu0 0
      %1485 = vmatpush1.bf16.msra.mxu0 0
      %1486 = vmatprep.mubr.bf16.mxu0 0
      %1487 = vmatmul.mubr.bf16.gmra.mrb[0].mxu0 %v1400
      %v1488 = vpop.f32.mrb[0].mxu0
      %v1489 = vadd.f32 0.0, %v1488
      %v1490 = vpop.f32.mrb[0].mxu0
      %v1491 = vpop.f32.mrb[0].mxu0
      %v1492 = vadd.f32 0.0, %v1491
      %v1493 = vpop.f32.mrb[0].mxu0
      %1494 = vdwg.mxu0
      %v1495 = vadd.f32 %v1376, %v1446
      %v1496 = vadd.f32 %v1377, %v1448
      %v1497 = vadd.f32 %v1378, %v1489
      %v1498 = vadd.f32 %v1379, %v1450
      %v1499 = vadd.f32 %v1380, %v1452
      %v1500 = vadd.f32 %v1381, %v1492
      %v1501 = vld [vmem:[%s3] sm:$0xff]
      %v1502 = vld [vmem:[%s3 + $0x8] sm:$0xff]
      %1504 = vset.pattern.permute.xlu0 0
      %1505 = vperm.xlu0 %1504, %v1501
      %v1506 = vpop.permute.xlu0 %1505
      %1509 = vset.pattern.permute.xlu0 0
      %1510 = vperm.xlu0 %1509, %v1502
      %v1511 = vpop.permute.xlu0 %1510
      %v1513 = vadd.f32 %v1495, %v1506
      %v1514 = vadd.f32 %v1496, %v1506
      %v1515 = vadd.f32 %v1497, %v1506
      %v1516 = vadd.f32 %v1498, %v1511
      %v1517 = vadd.f32 %v1499, %v1511
      %v1518 = vadd.f32 %v1500, %v1511
      %vm1519 = vcmp.gt.f32.partialorder %v1513, 0.0
      %vm1520 = vcmp.gt.f32.partialorder %v1514, 0.0
      %vm1521 = vcmp.gt.f32.partialorder %v1515, 0.0
      %vm1522 = vcmp.gt.f32.partialorder %v1516, 0.0
      %vm1523 = vcmp.gt.f32.partialorder %v1517, 0.0
      %vm1524 = vcmp.gt.f32.partialorder %v1518, 0.0
      %v1525 = vld [vmem:[%s4] sm:$0xff]
      %v1526 = vld [vmem:[%s4 + $0x8] sm:$0xff]
      %1528 = vset.pattern.permute.xlu0 0
      %1529 = vperm.xlu0 %1528, %v1525
      %v1530 = vpop.permute.xlu0 %1529
      %1533 = vset.pattern.permute.xlu0 0
      %1534 = vperm.xlu0 %1533, %v1526
      %v1535 = vpop.permute.xlu0 %1534
      %v1537 = vmul.f32 %v1530, %v1513
      %v1538 = vmul.f32 %v1530, %v1514
      %v1539 = vmul.f32 %v1530, %v1515
      %v1540 = vmul.f32 %v1535, %v1516
      %v1541 = vmul.f32 %v1535, %v1517
      %v1542 = vmul.f32 %v1535, %v1518
      %v1543 = vsel %vm1519, %v1513, %v1537
      %v1544 = vsel %vm1520, %v1514, %v1538
      %v1545 = vsel %vm1521, %v1515, %v1539
      %v1546 = vsel %vm1522, %v1516, %v1540
      %v1547 = vsel %vm1523, %v1517, %v1541
      %v1548 = vsel %vm1524, %v1518, %v1542
      %v1549 = vld [vmem:[%s1] sm:$0x7]
      %v1551 = vlaneseq
      %v1552 = vshrl.u32 %v1551, 7
      %v1553 = vsub.s32 0, %v1552
      %v1554 = vrot.slane %v1549, %v1553
      %v1555 = vlaneseq
      %v1556 = vshrl.u32 %v1555, 7
      %v1557 = vsub.s32 1, %v1556
      %v1558 = vrot.slane %v1549, %v1557
      %v1559 = vlaneseq
      %v1560 = vshrl.u32 %v1559, 7
      %v1561 = vsub.s32 2, %v1560
      %v1562 = vrot.slane %v1549, %v1561
      %v1566 = vadd.f32 %v1543, %v1554
      %v1567 = vadd.f32 %v1544, %v1558
      %v1568 = vadd.f32 %v1545, %v1562
      %v1569 = vadd.f32 %v1546, %v1554
      %v1570 = vadd.f32 %v1547, %v1558
      %v1571 = vadd.f32 %v1548, %v1562
      %1578 = vrot.lane.b32.xlu0 %v1566, 127
      %v1579 = vpop.permute.xlu0 %1578
      %1580 = vrot.lane.b32.xlu0 %v1567, 127
      %v1581 = vpop.permute.xlu0 %1580
      %1582 = vrot.lane.b32.xlu0 %v1568, 127
      %v1583 = vpop.permute.xlu0 %1582
      %1584 = vrot.lane.b32.xlu0 %v1569, 127
      %v1585 = vpop.permute.xlu0 %1584
      %1586 = vrot.lane.b32.xlu0 %v1570, 127
      %v1587 = vpop.permute.xlu0 %1586
      %1588 = vrot.lane.b32.xlu0 %v1571, 127
      %v1589 = vpop.permute.xlu0 %1588
      %vm1590 = vcmask 1039360
      %v1591 = vsel %vm1590, %v1579, %v1581
      %v1592 = vsel %vm1590, %v1581, %v1583
      %v1593 = vsel %vm1590, %v1585, %v1587
      %v1594 = vsel %vm1590, %v1587, %v1589
      %v1601 = vmax.f32 %v1566, %v1591
      %v1602 = vmax.f32 %v1567, %v1592
      %v1603 = vmax.f32 %v1568, %v1583
      %v1604 = vmax.f32 %v1569, %v1593
      %v1605 = vmax.f32 %v1570, %v1594
      %v1606 = vmax.f32 %v1571, %v1589
      %1613 = vrot.lane.b32.xlu0 %v1601, 112
      %v1614 = vpop.permute.xlu0 %1613
      %1615 = vrot.lane.b32.xlu0 %v1602, 112
      %v1616 = vpop.permute.xlu0 %1615
      %1617 = vrot.lane.b32.xlu0 %v1603, 112
      %v1618 = vpop.permute.xlu0 %1617
      %1619 = vrot.lane.b32.xlu0 %v1604, 112
      %v1620 = vpop.permute.xlu0 %1619
      %1621 = vrot.lane.b32.xlu0 %v1605, 112
      %v1622 = vpop.permute.xlu0 %1621
      %1623 = vrot.lane.b32.xlu0 %v1606, 112
      %v1624 = vpop.permute.xlu0 %1623
      %vm1625 = vcmask 916480
      %v1626 = vsel %vm1625, %v1614, %v1616
      %v1627 = vsel %vm1625, %v1616, %v1618
      %v1628 = vsel %vm1625, %v1620, %v1622
      %v1629 = vsel %vm1625, %v1622, %v1624
      %v1636 = vmax.f32 %v1601, %v1626
      %v1637 = vmax.f32 %v1602, %v1627
      %v1638 = vmax.f32 %v1603, %v1618
      %v1639 = vmax.f32 %v1604, %v1628
      %v1640 = vmax.f32 %v1605, %v1629
      %v1641 = vmax.f32 %v1606, %v1624
      %v1642 = vpack.c.bf16 %v1639, %v1636
      %v1643 = vpack.c.bf16 %v1640, %v1637
      %v1644 = vpack.c.bf16 %v1641, %v1638
      %v1645 = vld [vmem:[%s5] sm:$0xf]
      %v1646 = vld [vmem:[%s5 + $0x4] sm:$0xf]
      %s1647 = scalar_lea.vmem %s5, 8
      %v1648 = vld [vmem:[%s1647] sm:$0xf]
      %v1649 = vld [vmem:[%s1647 + $0x4] sm:$0xf]
      %v1652 = vunpack.c.l.b16 %v1648
      %v1653 = vunpack.c.l.b16 %v1649
      %v1654 = vpack.c.b16 %v1653, %v1652
      %1658 = vrot.lane.b32.xlu0 %v1642, 126
      %v1659 = vpop.permute.xlu0 %1658
      %1660 = vrot.lane.b32.xlu0 %v1643, 126
      %v1661 = vpop.permute.xlu0 %1660
      %1662 = vrot.lane.b32.xlu0 %v1644, 126
      %v1663 = vpop.permute.xlu0 %1662
      %v1664 = vsel %vm682, %v1659, %v1661
      %v1665 = vsel %vm682, %v1661, %v1663
      %vm1669 = vcmask 130048
      %v1671 = vsel %vm1669, %v1654, 0
      %1673 = vmatprep.subr.bf16.mxu0 %v1665
      %1674 = vmatpush1.bf16.msra.mxu0 %v1664
      %1675 = vmatprep.subr.bf16.mxu0 0
      %1676 = vmatpush1.bf16.msra.mxu0 0
      %1677 = vmatprep.subr.bf16.mxu0 0
      %1678 = vmatpush1.bf16.msra.mxu0 0
      %1679 = vmatprep.subr.bf16.mxu0 0
      %1680 = vmatpush1.bf16.msra.mxu0 0
      %1681 = vmatprep.subr.bf16.mxu0 0
      %1682 = vmatpush1.bf16.msra.mxu0 0
      %1683 = vmatprep.subr.bf16.mxu0 0
      %1684 = vmatpush1.bf16.msra.mxu0 0
      %1685 = vmatprep.subr.bf16.mxu0 0
      %1686 = vmatpush1.bf16.msra.mxu0 0
      %1687 = vmatprep.subr.bf16.mxu0 0
      %1688 = vmatpush1.bf16.msra.mxu0 0
      %1689 = vmatprep.subr.bf16.mxu0 0
      %1690 = vmatpush1.bf16.msra.mxu0 0
      %1691 = vmatprep.subr.bf16.mxu0 0
      %1692 = vmatpush1.bf16.msra.mxu0 0
      %1693 = vmatprep.subr.bf16.mxu0 0
      %1694 = vmatpush1.bf16.msra.mxu0 0
      %1695 = vmatprep.subr.bf16.mxu0 0
      %1696 = vmatpush1.bf16.msra.mxu0 0
      %1697 = vmatprep.subr.bf16.mxu0 0
      %1698 = vmatpush1.bf16.msra.mxu0 0
      %1699 = vmatprep.subr.bf16.mxu0 0
      %1700 = vmatpush1.bf16.msra.mxu0 0
      %1701 = vmatprep.subr.bf16.mxu0 0
      %1702 = vmatpush1.bf16.msra.mxu0 0
      %1703 = vmatprep.subr.bf16.mxu0 0
      %1704 = vmatpush1.bf16.msra.mxu0 0
      %1705 = vmatprep.mubr.bf16.mxu0 0
      %1706 = vmatmul.mubr.bf16.gmra.mrb[0].mxu0 %v1671
      %v1707 = vpop.f32.mrb[0].mxu0
      %v1708 = vadd.f32 0.0, %v1707
      %v1709 = vpop.f32.mrb[0].mxu0
      %v1710 = vadd.f32 0.0, %v1709
      %v1711 = vpop.f32.mrb[0].mxu0
      %v1712 = vadd.f32 0.0, %v1711
      %v1713 = vpop.f32.mrb[0].mxu0
      %v1714 = vadd.f32 0.0, %v1713
      %1715 = vdwg.mxu0
      %1716 = vmatprep.subr.bf16.mxu0 0
      %1717 = vmatpush1.bf16.msra.mxu0 %v1663
      %1718 = vmatprep.subr.bf16.mxu0 0
      %1719 = vmatpush1.bf16.msra.mxu0 0
      %1720 = vmatprep.subr.bf16.mxu0 0
      %1721 = vmatpush1.bf16.msra.mxu0 0
      %1722 = vmatprep.subr.bf16.mxu0 0
      %1723 = vmatpush1.bf16.msra.mxu0 0
      %1724 = vmatprep.subr.bf16.mxu0 0
      %1725 = vmatpush1.bf16.msra.mxu0 0
      %1726 = vmatprep.subr.bf16.mxu0 0
      %1727 = vmatpush1.bf16.msra.mxu0 0
      %1728 = vmatprep.subr.bf16.mxu0 0
      %1729 = vmatpush1.bf16.msra.mxu0 0
      %1730 = vmatprep.subr.bf16.mxu0 0
      %1731 = vmatpush1.bf16.msra.mxu0 0
      %1732 = vmatprep.subr.bf16.mxu0 0
      %1733 = vmatpush1.bf16.msra.mxu0 0
      %1734 = vmatprep.subr.bf16.mxu0 0
      %1735 = vmatpush1.bf16.msra.mxu0 0
      %1736 = vmatprep.subr.bf16.mxu0 0
      %1737 = vmatpush1.bf16.msra.mxu0 0
      %1738 = vmatprep.subr.bf16.mxu0 0
      %1739 = vmatpush1.bf16.msra.mxu0 0
      %1740 = vmatprep.subr.bf16.mxu0 0
      %1741 = vmatpush1.bf16.msra.mxu0 0
      %1742 = vmatprep.subr.bf16.mxu0 0
      %1743 = vmatpush1.bf16.msra.mxu0 0
      %1744 = vmatprep.subr.bf16.mxu0 0
      %1745 = vmatpush1.bf16.msra.mxu0 0
      %1746 = vmatprep.subr.bf16.mxu0 0
      %1747 = vmatpush1.bf16.msra.mxu0 0
      %1748 = vmatprep.mubr.bf16.mxu0 0
      %1749 = vmatmul.mubr.bf16.gmra.mrb[0].mxu0 %v1671
      %v1750 = vpop.f32.mrb[0].mxu0
      %v1751 = vadd.f32 0.0, %v1750
      %v1752 = vpop.f32.mrb[0].mxu0
      %v1753 = vpop.f32.mrb[0].mxu0
      %v1754 = vadd.f32 0.0, %v1753
      %v1755 = vpop.f32.mrb[0].mxu0
      %1756 = vdwg.mxu0
      %v1759 = vunpack.c.l.b16 %v1645
      %v1760 = vunpack.c.l.b16 %v1646
      %v1761 = vpack.c.b16 %v1760, %v1759
      %v1763 = vsel %vm1669, %v1761, 0
      %1765 = vmatprep.subr.bf16.mxu0 %v1643
      %1766 = vmatpush1.bf16.msra.mxu0 %v1642
      %1767 = vmatprep.subr.bf16.mxu0 0
      %1768 = vmatpush1.bf16.msra.mxu0 0
      %1769 = vmatprep.subr.bf16.mxu0 0
      %1770 = vmatpush1.bf16.msra.mxu0 0
      %1771 = vmatprep.subr.bf16.mxu0 0
      %1772 = vmatpush1.bf16.msra.mxu0 0
      %1773 = vmatprep.subr.bf16.mxu0 0
      %1774 = vmatpush1.bf16.msra.mxu0 0
      %1775 = vmatprep.subr.bf16.mxu0 0
      %1776 = vmatpush1.bf16.msra.mxu0 0
      %1777 = vmatprep.subr.bf16.mxu0 0
      %1778 = vmatpush1.bf16.msra.mxu0 0
      %1779 = vmatprep.subr.bf16.mxu0 0
      %1780 = vmatpush1.bf16.msra.mxu0 0
      %1781 = vmatprep.subr.bf16.mxu0 0
      %1782 = vmatpush1.bf16.msra.mxu0 0
      %1783 = vmatprep.subr.bf16.mxu0 0
      %1784 = vmatpush1.bf16.msra.mxu0 0
      %1785 = vmatprep.subr.bf16.mxu0 0
      %1786 = vmatpush1.bf16.msra.mxu0 0
      %1787 = vmatprep.subr.bf16.mxu0 0
      %1788 = vmatpush1.bf16.msra.mxu0 0
      %1789 = vmatprep.subr.bf16.mxu0 0
      %1790 = vmatpush1.bf16.msra.mxu0 0
      %1791 = vmatprep.subr.bf16.mxu0 0
      %1792 = vmatpush1.bf16.msra.mxu0 0
      %1793 = vmatprep.subr.bf16.mxu0 0
      %1794 = vmatpush1.bf16.msra.mxu0 0
      %1795 = vmatprep.subr.bf16.mxu0 0
      %1796 = vmatpush1.bf16.msra.mxu0 0
      %1797 = vmatprep.mubr.bf16.mxu0 0
      %1798 = vmatmul.mubr.bf16.gmra.mrb[0].mxu0 %v1763
      %v1799 = vpop.f32.mrb[0].mxu0
      %v1800 = vadd.f32 %v1708, %v1799
      %v1801 = vpop.f32.mrb[0].mxu0
      %v1802 = vadd.f32 %v1710, %v1801
      %v1803 = vpop.f32.mrb[0].mxu0
      %v1804 = vadd.f32 %v1712, %v1803
      %v1805 = vpop.f32.mrb[0].mxu0
      %v1806 = vadd.f32 %v1714, %v1805
      %1807 = vdwg.mxu0
      %1808 = vmatprep.subr.bf16.mxu0 0
      %1809 = vmatpush1.bf16.msra.mxu0 %v1644
      %1810 = vmatprep.subr.bf16.mxu0 0
      %1811 = vmatpush1.bf16.msra.mxu0 0
      %1812 = vmatprep.subr.bf16.mxu0 0
      %1813 = vmatpush1.bf16.msra.mxu0 0
      %1814 = vmatprep.subr.bf16.mxu0 0
      %1815 = vmatpush1.bf16.msra.mxu0 0
      %1816 = vmatprep.subr.bf16.mxu0 0
      %1817 = vmatpush1.bf16.msra.mxu0 0
      %1818 = vmatprep.subr.bf16.mxu0 0
      %1819 = vmatpush1.bf16.msra.mxu0 0
      %1820 = vmatprep.subr.bf16.mxu0 0
      %1821 = vmatpush1.bf16.msra.mxu0 0
      %1822 = vmatprep.subr.bf16.mxu0 0
      %1823 = vmatpush1.bf16.msra.mxu0 0
      %1824 = vmatprep.subr.bf16.mxu0 0
      %1825 = vmatpush1.bf16.msra.mxu0 0
      %1826 = vmatprep.subr.bf16.mxu0 0
      %1827 = vmatpush1.bf16.msra.mxu0 0
      %1828 = vmatprep.subr.bf16.mxu0 0
      %1829 = vmatpush1.bf16.msra.mxu0 0
      %1830 = vmatprep.subr.bf16.mxu0 0
      %1831 = vmatpush1.bf16.msra.mxu0 0
      %1832 = vmatprep.subr.bf16.mxu0 0
      %1833 = vmatpush1.bf16.msra.mxu0 0
      %1834 = vmatprep.subr.bf16.mxu0 0
      %1835 = vmatpush1.bf16.msra.mxu0 0
      %1836 = vmatprep.subr.bf16.mxu0 0
      %1837 = vmatpush1.bf16.msra.mxu0 0
      %1838 = vmatprep.subr.bf16.mxu0 0
      %1839 = vmatpush1.bf16.msra.mxu0 0
      %1840 = vmatprep.mubr.bf16.mxu0 0
      %1841 = vmatmul.mubr.bf16.gmra.mrb[0].mxu0 %v1763
      %v1842 = vpop.f32.mrb[0].mxu0
      %v1843 = vadd.f32 %v1751, %v1842
      %v1844 = vpop.f32.mrb[0].mxu0
      %v1845 = vpop.f32.mrb[0].mxu0
      %v1846 = vadd.f32 %v1754, %v1845
      %v1847 = vpop.f32.mrb[0].mxu0
      %1848 = vdwg.mxu0
      %s1849 = scalar_lea.vmem %s5, 16
      %v1850 = vld [vmem:[%s1849] sm:$0xf]
      %v1851 = vld [vmem:[%s1849 + $0x4] sm:$0xf]
      %v1854 = vunpack.c.l.b16 %v1850
      %v1855 = vunpack.c.l.b16 %v1851
      %v1856 = vpack.c.b16 %v1855, %v1854
      %1857 = vrot.lane.b32.xlu0 %v1642, 124
      %v1858 = vpop.permute.xlu0 %1857
      %1859 = vrot.lane.b32.xlu0 %v1643, 124
      %v1860 = vpop.permute.xlu0 %1859
      %1861 = vrot.lane.b32.xlu0 %v1644, 124
      %v1862 = vpop.permute.xlu0 %1861
      %vm1863 = vcmask 1014784
      %v1864 = vsel %vm1863, %v1858, %v1860
      %v1865 = vsel %vm1863, %v1860, %v1862
      %v1870 = vsel %vm1669, %v1856, 0
      %1872 = vmatprep.subr.bf16.mxu0 %v1865
      %1873 = vmatpush1.bf16.msra.mxu0 %v1864
      %1874 = vmatprep.subr.bf16.mxu0 0
      %1875 = vmatpush1.bf16.msra.mxu0 0
      %1876 = vmatprep.subr.bf16.mxu0 0
      %1877 = vmatpush1.bf16.msra.mxu0 0
      %1878 = vmatprep.subr.bf16.mxu0 0
      %1879 = vmatpush1.bf16.msra.mxu0 0
      %1880 = vmatprep.subr.bf16.mxu0 0
      %1881 = vmatpush1.bf16.msra.mxu0 0
      %1882 = vmatprep.subr.bf16.mxu0 0
      %1883 = vmatpush1.bf16.msra.mxu0 0
      %1884 = vmatprep.subr.bf16.mxu0 0
      %1885 = vmatpush1.bf16.msra.mxu0 0
      %1886 = vmatprep.subr.bf16.mxu0 0
      %1887 = vmatpush1.bf16.msra.mxu0 0
      %1888 = vmatprep.subr.bf16.mxu0 0
      %1889 = vmatpush1.bf16.msra.mxu0 0
      %1890 = vmatprep.subr.bf16.mxu0 0
      %1891 = vmatpush1.bf16.msra.mxu0 0
      %1892 = vmatprep.subr.bf16.mxu0 0
      %1893 = vmatpush1.bf16.msra.mxu0 0
      %1894 = vmatprep.subr.bf16.mxu0 0
      %1895 = vmatpush1.bf16.msra.mxu0 0
      %1896 = vmatprep.subr.bf16.mxu0 0
      %1897 = vmatpush1.bf16.msra.mxu0 0
      %1898 = vmatprep.subr.bf16.mxu0 0
      %1899 = vmatpush1.bf16.msra.mxu0 0
      %1900 = vmatprep.subr.bf16.mxu0 0
      %1901 = vmatpush1.bf16.msra.mxu0 0
      %1902 = vmatprep.subr.bf16.mxu0 0
      %1903 = vmatpush1.bf16.msra.mxu0 0
      %1904 = vmatprep.mubr.bf16.mxu0 0
      %1905 = vmatmul.mubr.bf16.gmra.mrb[0].mxu0 %v1870
      %v1906 = vpop.f32.mrb[0].mxu0
      %v1907 = vadd.f32 0.0, %v1906
      %v1908 = vpop.f32.mrb[0].mxu0
      %v1909 = vadd.f32 0.0, %v1908
      %v1910 = vpop.f32.mrb[0].mxu0
      %v1911 = vadd.f32 0.0, %v1910
      %v1912 = vpop.f32.mrb[0].mxu0
      %v1913 = vadd.f32 0.0, %v1912
      %1914 = vdwg.mxu0
      %1915 = vmatprep.subr.bf16.mxu0 0
      %1916 = vmatpush1.bf16.msra.mxu0 %v1862
      %1917 = vmatprep.subr.bf16.mxu0 0
      %1918 = vmatpush1.bf16.msra.mxu0 0
      %1919 = vmatprep.subr.bf16.mxu0 0
      %1920 = vmatpush1.bf16.msra.mxu0 0
      %1921 = vmatprep.subr.bf16.mxu0 0
      %1922 = vmatpush1.bf16.msra.mxu0 0
      %1923 = vmatprep.subr.bf16.mxu0 0
      %1924 = vmatpush1.bf16.msra.mxu0 0
      %1925 = vmatprep.subr.bf16.mxu0 0
      %1926 = vmatpush1.bf16.msra.mxu0 0
      %1927 = vmatprep.subr.bf16.mxu0 0
      %1928 = vmatpush1.bf16.msra.mxu0 0
      %1929 = vmatprep.subr.bf16.mxu0 0
      %1930 = vmatpush1.bf16.msra.mxu0 0
      %1931 = vmatprep.subr.bf16.mxu0 0
      %1932 = vmatpush1.bf16.msra.mxu0 0
      %1933 = vmatprep.subr.bf16.mxu0 0
      %1934 = vmatpush1.bf16.msra.mxu0 0
      %1935 = vmatprep.subr.bf16.mxu0 0
      %1936 = vmatpush1.bf16.msra.mxu0 0
      %1937 = vmatprep.subr.bf16.mxu0 0
      %1938 = vmatpush1.bf16.msra.mxu0 0
      %1939 = vmatprep.subr.bf16.mxu0 0
      %1940 = vmatpush1.bf16.msra.mxu0 0
      %1941 = vmatprep.subr.bf16.mxu0 0
      %1942 = vmatpush1.bf16.msra.mxu0 0
      %1943 = vmatprep.subr.bf16.mxu0 0
      %1944 = vmatpush1.bf16.msra.mxu0 0
      %1945 = vmatprep.subr.bf16.mxu0 0
      %1946 = vmatpush1.bf16.msra.mxu0 0
      %1947 = vmatprep.mubr.bf16.mxu0 0
      %1948 = vmatmul.mubr.bf16.gmra.mrb[0].mxu0 %v1870
      %v1949 = vpop.f32.mrb[0].mxu0
      %v1950 = vadd.f32 0.0, %v1949
      %v1951 = vpop.f32.mrb[0].mxu0
      %v1952 = vpop.f32.mrb[0].mxu0
      %v1953 = vadd.f32 0.0, %v1952
      %v1954 = vpop.f32.mrb[0].mxu0
      %1955 = vdwg.mxu0
      %v1956 = vadd.f32 %v1800, %v1907
      %v1957 = vadd.f32 %v1802, %v1909
      %v1958 = vadd.f32 %v1843, %v1950
      %v1959 = vadd.f32 %v1804, %v1911
      %v1960 = vadd.f32 %v1806, %v1913
      %v1961 = vadd.f32 %v1846, %v1953
      %s1962 = scalar_lea.vmem %s5, 24
      %v1963 = vld [vmem:[%s1962] sm:$0xf]
      %v1964 = vld [vmem:[%s1962 + $0x4] sm:$0xf]
      %v1967 = vunpack.c.l.b16 %v1963
      %v1968 = vunpack.c.l.b16 %v1964
      %v1969 = vpack.c.b16 %v1968, %v1967
      %1970 = vrot.lane.b32.xlu0 %v1642, 96
      %v1971 = vpop.permute.xlu0 %1970
      %1972 = vrot.lane.b32.xlu0 %v1643, 96
      %v1973 = vpop.permute.xlu0 %1972
      %1974 = vrot.lane.b32.xlu0 %v1644, 96
      %v1975 = vpop.permute.xlu0 %1974
      %v1976 = vsel %vm1158, %v1971, %v1973
      %v1977 = vsel %vm1158, %v1973, %v1975
      %v1982 = vsel %vm1669, %v1969, 0
      %1984 = vmatprep.subr.bf16.mxu0 %v1977
      %1985 = vmatpush1.bf16.msra.mxu0 %v1976
      %1986 = vmatprep.subr.bf16.mxu0 0
      %1987 = vmatpush1.bf16.msra.mxu0 0
      %1988 = vmatprep.subr.bf16.mxu0 0
      %1989 = vmatpush1.bf16.msra.mxu0 0
      %1990 = vmatprep.subr.bf16.mxu0 0
      %1991 = vmatpush1.bf16.msra.mxu0 0
      %1992 = vmatprep.subr.bf16.mxu0 0
      %1993 = vmatpush1.bf16.msra.mxu0 0
      %1994 = vmatprep.subr.bf16.mxu0 0
      %1995 = vmatpush1.bf16.msra.mxu0 0
      %1996 = vmatprep.subr.bf16.mxu0 0
      %1997 = vmatpush1.bf16.msra.mxu0 0
      %1998 = vmatprep.subr.bf16.mxu0 0
      %1999 = vmatpush1.bf16.msra.mxu0 0
      %2000 = vmatprep.subr.bf16.mxu0 0
      %2001 = vmatpush1.bf16.msra.mxu0 0
      %2002 = vmatprep.subr.bf16.mxu0 0
      %2003 = vmatpush1.bf16.msra.mxu0 0
      %2004 = vmatprep.subr.bf16.mxu0 0
      %2005 = vmatpush1.bf16.msra.mxu0 0
      %2006 = vmatprep.subr.bf16.mxu0 0
      %2007 = vmatpush1.bf16.msra.mxu0 0
      %2008 = vmatprep.subr.bf16.mxu0 0
      %2009 = vmatpush1.bf16.msra.mxu0 0
      %2010 = vmatprep.subr.bf16.mxu0 0
      %2011 = vmatpush1.bf16.msra.mxu0 0
      %2012 = vmatprep.subr.bf16.mxu0 0
      %2013 = vmatpush1.bf16.msra.mxu0 0
      %2014 = vmatprep.subr.bf16.mxu0 0
      %2015 = vmatpush1.bf16.msra.mxu0 0
      %2016 = vmatprep.mubr.bf16.mxu0 0
      %2017 = vmatmul.mubr.bf16.gmra.mrb[0].mxu0 %v1982
      %v2018 = vpop.f32.mrb[0].mxu0
      %v2019 = vadd.f32 0.0, %v2018
      %v2020 = vpop.f32.mrb[0].mxu0
      %v2021 = vadd.f32 0.0, %v2020
      %v2022 = vpop.f32.mrb[0].mxu0
      %v2023 = vadd.f32 0.0, %v2022
      %v2024 = vpop.f32.mrb[0].mxu0
      %v2025 = vadd.f32 0.0, %v2024
      %2026 = vdwg.mxu0
      %2027 = vmatprep.subr.bf16.mxu0 0
      %2028 = vmatpush1.bf16.msra.mxu0 %v1975
      %2029 = vmatprep.subr.bf16.mxu0 0
      %2030 = vmatpush1.bf16.msra.mxu0 0
      %2031 = vmatprep.subr.bf16.mxu0 0
      %2032 = vmatpush1.bf16.msra.mxu0 0
      %2033 = vmatprep.subr.bf16.mxu0 0
      %2034 = vmatpush1.bf16.msra.mxu0 0
      %2035 = vmatprep.subr.bf16.mxu0 0
      %2036 = vmatpush1.bf16.msra.mxu0 0
      %2037 = vmatprep.subr.bf16.mxu0 0
      %2038 = vmatpush1.bf16.msra.mxu0 0
      %2039 = vmatprep.subr.bf16.mxu0 0
      %2040 = vmatpush1.bf16.msra.mxu0 0
      %2041 = vmatprep.subr.bf16.mxu0 0
      %2042 = vmatpush1.bf16.msra.mxu0 0
      %2043 = vmatprep.subr.bf16.mxu0 0
      %2044 = vmatpush1.bf16.msra.mxu0 0
      %2045 = vmatprep.subr.bf16.mxu0 0
      %2046 = vmatpush1.bf16.msra.mxu0 0
      %2047 = vmatprep.subr.bf16.mxu0 0
      %2048 = vmatpush1.bf16.msra.mxu0 0
      %2049 = vmatprep.subr.bf16.mxu0 0
      %2050 = vmatpush1.bf16.msra.mxu0 0
      %2051 = vmatprep.subr.bf16.mxu0 0
      %2052 = vmatpush1.bf16.msra.mxu0 0
      %2053 = vmatprep.subr.bf16.mxu0 0
      %2054 = vmatpush1.bf16.msra.mxu0 0
      %2055 = vmatprep.subr.bf16.mxu0 0
      %2056 = vmatpush1.bf16.msra.mxu0 0
      %2057 = vmatprep.subr.bf16.mxu0 0
      %2058 = vmatpush1.bf16.msra.mxu0 0
      %2059 = vmatprep.mubr.bf16.mxu0 0
      %2060 = vmatmul.mubr.bf16.gmra.mrb[0].mxu0 %v1982
      %v2061 = vpop.f32.mrb[0].mxu0
      %v2062 = vadd.f32 0.0, %v2061
      %v2063 = vpop.f32.mrb[0].mxu0
      %v2064 = vpop.f32.mrb[0].mxu0
      %v2065 = vadd.f32 0.0, %v2064
      %v2066 = vpop.f32.mrb[0].mxu0
      %2067 = vdwg.mxu0
      %v2068 = vadd.f32 %v1956, %v2019
      %v2069 = vadd.f32 %v1957, %v2021
      %v2070 = vadd.f32 %v1958, %v2062
      %v2071 = vadd.f32 %v1959, %v2023
      %v2072 = vadd.f32 %v1960, %v2025
      %v2073 = vadd.f32 %v1961, %v2065
      %s2074 = scalar_lea.vmem %s5, 32
      %v2075 = vld [vmem:[%s2074] sm:$0xf]
      %v2076 = vld [vmem:[%s2074 + $0x4] sm:$0xf]
      %v2079 = vunpack.c.l.b16 %v2075
      %v2080 = vunpack.c.l.b16 %v2076
      %v2081 = vpack.c.b16 %v2080, %v2079
      %2082 = vrot.lane.b32.xlu0 %v1642, 94
      %v2083 = vpop.permute.xlu0 %2082
      %2084 = vrot.lane.b32.xlu0 %v1643, 94
      %v2085 = vpop.permute.xlu0 %2084
      %2086 = vrot.lane.b32.xlu0 %v1644, 94
      %v2087 = vpop.permute.xlu0 %2086
      %v2088 = vsel %vm1396, %v2083, %v2085
      %v2089 = vsel %vm1396, %v2085, %v2087
      %v2094 = vsel %vm1669, %v2081, 0
      %2096 = vmatprep.subr.bf16.mxu0 %v2089
      %2097 = vmatpush1.bf16.msra.mxu0 %v2088
      %2098 = vmatprep.subr.bf16.mxu0 0
      %2099 = vmatpush1.bf16.msra.mxu0 0
      %2100 = vmatprep.subr.bf16.mxu0 0
      %2101 = vmatpush1.bf16.msra.mxu0 0
      %2102 = vmatprep.subr.bf16.mxu0 0
      %2103 = vmatpush1.bf16.msra.mxu0 0
      %2104 = vmatprep.subr.bf16.mxu0 0
      %2105 = vmatpush1.bf16.msra.mxu0 0
      %2106 = vmatprep.subr.bf16.mxu0 0
      %2107 = vmatpush1.bf16.msra.mxu0 0
      %2108 = vmatprep.subr.bf16.mxu0 0
      %2109 = vmatpush1.bf16.msra.mxu0 0
      %2110 = vmatprep.subr.bf16.mxu0 0
      %2111 = vmatpush1.bf16.msra.mxu0 0
      %2112 = vmatprep.subr.bf16.mxu0 0
      %2113 = vmatpush1.bf16.msra.mxu0 0
      %2114 = vmatprep.subr.bf16.mxu0 0
      %2115 = vmatpush1.bf16.msra.mxu0 0
      %2116 = vmatprep.subr.bf16.mxu0 0
      %2117 = vmatpush1.bf16.msra.mxu0 0
      %2118 = vmatprep.subr.bf16.mxu0 0
      %2119 = vmatpush1.bf16.msra.mxu0 0
      %2120 = vmatprep.subr.bf16.mxu0 0
      %2121 = vmatpush1.bf16.msra.mxu0 0
      %2122 = vmatprep.subr.bf16.mxu0 0
      %2123 = vmatpush1.bf16.msra.mxu0 0
      %2124 = vmatprep.subr.bf16.mxu0 0
      %2125 = vmatpush1.bf16.msra.mxu0 0
      %2126 = vmatprep.subr.bf16.mxu0 0
      %2127 = vmatpush1.bf16.msra.mxu0 0
      %2128 = vmatprep.mubr.bf16.mxu0 0
      %2129 = vmatmul.mubr.bf16.gmra.mrb[0].mxu0 %v2094
      %v2130 = vpop.f32.mrb[0].mxu0
      %v2131 = vadd.f32 0.0, %v2130
      %v2132 = vpop.f32.mrb[0].mxu0
      %v2133 = vadd.f32 0.0, %v2132
      %v2134 = vpop.f32.mrb[0].mxu0
      %v2135 = vadd.f32 0.0, %v2134
      %v2136 = vpop.f32.mrb[0].mxu0
      %v2137 = vadd.f32 0.0, %v2136
      %2138 = vdwg.mxu0
      %2139 = vmatprep.subr.bf16.mxu0 0
      %2140 = vmatpush1.bf16.msra.mxu0 %v2087
      %2141 = vmatprep.subr.bf16.mxu0 0
      %2142 = vmatpush1.bf16.msra.mxu0 0
      %2143 = vmatprep.subr.bf16.mxu0 0
      %2144 = vmatpush1.bf16.msra.mxu0 0
      %2145 = vmatprep.subr.bf16.mxu0 0
      %2146 = vmatpush1.bf16.msra.mxu0 0
      %2147 = vmatprep.subr.bf16.mxu0 0
      %2148 = vmatpush1.bf16.msra.mxu0 0
      %2149 = vmatprep.subr.bf16.mxu0 0
      %2150 = vmatpush1.bf16.msra.mxu0 0
      %2151 = vmatprep.subr.bf16.mxu0 0
      %2152 = vmatpush1.bf16.msra.mxu0 0
      %2153 = vmatprep.subr.bf16.mxu0 0
      %2154 = vmatpush1.bf16.msra.mxu0 0
      %2155 = vmatprep.subr.bf16.mxu0 0
      %2156 = vmatpush1.bf16.msra.mxu0 0
      %2157 = vmatprep.subr.bf16.mxu0 0
      %2158 = vmatpush1.bf16.msra.mxu0 0
      %2159 = vmatprep.subr.bf16.mxu0 0
      %2160 = vmatpush1.bf16.msra.mxu0 0
      %2161 = vmatprep.subr.bf16.mxu0 0
      %2162 = vmatpush1.bf16.msra.mxu0 0
      %2163 = vmatprep.subr.bf16.mxu0 0
      %2164 = vmatpush1.bf16.msra.mxu0 0
      %2165 = vmatprep.subr.bf16.mxu0 0
      %2166 = vmatpush1.bf16.msra.mxu0 0
      %2167 = vmatprep.subr.bf16.mxu0 0
      %2168 = vmatpush1.bf16.msra.mxu0 0
      %2169 = vmatprep.subr.bf16.mxu0 0
      %2170 = vmatpush1.bf16.msra.mxu0 0
      %2171 = vmatprep.mubr.bf16.mxu0 0
      %2172 = vmatmul.mubr.bf16.gmra.mrb[0].mxu0 %v2094
      %v2173 = vpop.f32.mrb[0].mxu0
      %v2174 = vadd.f32 0.0, %v2173
      %v2175 = vpop.f32.mrb[0].mxu0
      %v2176 = vpop.f32.mrb[0].mxu0
      %v2177 = vadd.f32 0.0, %v2176
      %v2178 = vpop.f32.mrb[0].mxu0
      %2179 = vdwg.mxu0
      %v2180 = vadd.f32 %v2068, %v2131
      %v2181 = vadd.f32 %v2069, %v2133
      %v2182 = vadd.f32 %v2070, %v2174
      %v2183 = vadd.f32 %v2071, %v2135
      %v2184 = vadd.f32 %v2072, %v2137
      %v2185 = vadd.f32 %v2073, %v2177
      %s2186 = scalar_lea.vmem %s5, 40
      %v2187 = vld [vmem:[%s2186] sm:$0xf]
      %v2188 = vld [vmem:[%s2186 + $0x4] sm:$0xf]
      %v2191 = vunpack.c.l.b16 %v2187
      %v2192 = vunpack.c.l.b16 %v2188
      %v2193 = vpack.c.b16 %v2192, %v2191
      %2194 = vrot.lane.b32.xlu0 %v1642, 92
      %v2195 = vpop.permute.xlu0 %2194
      %2196 = vrot.lane.b32.xlu0 %v1643, 92
      %v2197 = vpop.permute.xlu0 %2196
      %2198 = vrot.lane.b32.xlu0 %v1644, 92
      %v2199 = vpop.permute.xlu0 %2198
      %vm2200 = vcmask 752640
      %v2201 = vsel %vm2200, %v2195, %v2197
      %v2202 = vsel %vm2200, %v2197, %v2199
      %v2207 = vsel %vm1669, %v2193, 0
      %2209 = vmatprep.subr.bf16.mxu0 %v2202
      %2210 = vmatpush1.bf16.msra.mxu0 %v2201
      %2211 = vmatprep.subr.bf16.mxu0 0
      %2212 = vmatpush1.bf16.msra.mxu0 0
      %2213 = vmatprep.subr.bf16.mxu0 0
      %2214 = vmatpush1.bf16.msra.mxu0 0
      %2215 = vmatprep.subr.bf16.mxu0 0
      %2216 = vmatpush1.bf16.msra.mxu0 0
      %2217 = vmatprep.subr.bf16.mxu0 0
      %2218 = vmatpush1.bf16.msra.mxu0 0
      %2219 = vmatprep.subr.bf16.mxu0 0
      %2220 = vmatpush1.bf16.msra.mxu0 0
      %2221 = vmatprep.subr.bf16.mxu0 0
      %2222 = vmatpush1.bf16.msra.mxu0 0
      %2223 = vmatprep.subr.bf16.mxu0 0
      %2224 = vmatpush1.bf16.msra.mxu0 0
      %2225 = vmatprep.subr.bf16.mxu0 0
      %2226 = vmatpush1.bf16.msra.mxu0 0
      %2227 = vmatprep.subr.bf16.mxu0 0
      %2228 = vmatpush1.bf16.msra.mxu0 0
      %2229 = vmatprep.subr.bf16.mxu0 0
      %2230 = vmatpush1.bf16.msra.mxu0 0
      %2231 = vmatprep.subr.bf16.mxu0 0
      %2232 = vmatpush1.bf16.msra.mxu0 0
      %2233 = vmatprep.subr.bf16.mxu0 0
      %2234 = vmatpush1.bf16.msra.mxu0 0
      %2235 = vmatprep.subr.bf16.mxu0 0
      %2236 = vmatpush1.bf16.msra.mxu0 0
      %2237 = vmatprep.subr.bf16.mxu0 0
      %2238 = vmatpush1.bf16.msra.mxu0 0
      %2239 = vmatprep.subr.bf16.mxu0 0
      %2240 = vmatpush1.bf16.msra.mxu0 0
      %2241 = vmatprep.mubr.bf16.mxu0 0
      %2242 = vmatmul.mubr.bf16.gmra.mrb[0].mxu0 %v2207
      %v2243 = vpop.f32.mrb[0].mxu0
      %v2244 = vadd.f32 0.0, %v2243
      %v2245 = vpop.f32.mrb[0].mxu0
      %v2246 = vadd.f32 0.0, %v2245
      %v2247 = vpop.f32.mrb[0].mxu0
      %v2248 = vadd.f32 0.0, %v2247
      %v2249 = vpop.f32.mrb[0].mxu0
      %v2250 = vadd.f32 0.0, %v2249
      %2251 = vdwg.mxu0
      %2252 = vmatprep.subr.bf16.mxu0 0
      %2253 = vmatpush1.bf16.msra.mxu0 %v2199
      %2254 = vmatprep.subr.bf16.mxu0 0
      %2255 = vmatpush1.bf16.msra.mxu0 0
      %2256 = vmatprep.subr.bf16.mxu0 0
      %2257 = vmatpush1.bf16.msra.mxu0 0
      %2258 = vmatprep.subr.bf16.mxu0 0
      %2259 = vmatpush1.bf16.msra.mxu0 0
      %2260 = vmatprep.subr.bf16.mxu0 0
      %2261 = vmatpush1.bf16.msra.mxu0 0
      %2262 = vmatprep.subr.bf16.mxu0 0
      %2263 = vmatpush1.bf16.msra.mxu0 0
      %2264 = vmatprep.subr.bf16.mxu0 0
      %2265 = vmatpush1.bf16.msra.mxu0 0
      %2266 = vmatprep.subr.bf16.mxu0 0
      %2267 = vmatpush1.bf16.msra.mxu0 0
      %2268 = vmatprep.subr.bf16.mxu0 0
      %2269 = vmatpush1.bf16.msra.mxu0 0
      %2270 = vmatprep.subr.bf16.mxu0 0
      %2271 = vmatpush1.bf16.msra.mxu0 0
      %2272 = vmatprep.subr.bf16.mxu0 0
      %2273 = vmatpush1.bf16.msra.mxu0 0
      %2274 = vmatprep.subr.bf16.mxu0 0
      %2275 = vmatpush1.bf16.msra.mxu0 0
      %2276 = vmatprep.subr.bf16.mxu0 0
      %2277 = vmatpush1.bf16.msra.mxu0 0
      %2278 = vmatprep.subr.bf16.mxu0 0
      %2279 = vmatpush1.bf16.msra.mxu0 0
      %2280 = vmatprep.subr.bf16.mxu0 0
      %2281 = vmatpush1.bf16.msra.mxu0 0
      %2282 = vmatprep.subr.bf16.mxu0 0
      %2283 = vmatpush1.bf16.msra.mxu0 0
      %2284 = vmatprep.mubr.bf16.mxu0 0
      %2285 = vmatmul.mubr.bf16.gmra.mrb[0].mxu0 %v2207
      %v2286 = vpop.f32.mrb[0].mxu0
      %v2287 = vadd.f32 0.0, %v2286
      %v2288 = vpop.f32.mrb[0].mxu0
      %v2289 = vpop.f32.mrb[0].mxu0
      %v2290 = vadd.f32 0.0, %v2289
      %v2291 = vpop.f32.mrb[0].mxu0
      %2292 = vdwg.mxu0
      %v2293 = vadd.f32 %v2180, %v2244
      %v2294 = vadd.f32 %v2181, %v2246
      %v2295 = vadd.f32 %v2182, %v2287
      %v2296 = vadd.f32 %v2183, %v2248
      %v2297 = vadd.f32 %v2184, %v2250
      %v2298 = vadd.f32 %v2185, %v2290
      %s2299 = scalar_lea.vmem %s5, 48
      %v2300 = vld [vmem:[%s2299] sm:$0xf]
      %v2301 = vld [vmem:[%s2299 + $0x4] sm:$0xf]
      %v2304 = vunpack.c.l.b16 %v2300
      %v2305 = vunpack.c.l.b16 %v2301
      %v2306 = vpack.c.b16 %v2305, %v2304
      %2307 = vrot.lane.b32.xlu0 %v1642, 64
      %v2308 = vpop.permute.xlu0 %2307
      %2309 = vrot.lane.b32.xlu0 %v1643, 64
      %v2310 = vpop.permute.xlu0 %2309
      %2311 = vrot.lane.b32.xlu0 %v1644, 64
      %v2312 = vpop.permute.xlu0 %2311
      %vm2313 = vcmask 523264
      %v2314 = vsel %vm2313, %v2308, %v2310
      %v2315 = vsel %vm2313, %v2310, %v2312
      %v2320 = vsel %vm1669, %v2306, 0
      %2322 = vmatprep.subr.bf16.mxu0 %v2315
      %2323 = vmatpush1.bf16.msra.mxu0 %v2314
      %2324 = vmatprep.subr.bf16.mxu0 0
      %2325 = vmatpush1.bf16.msra.mxu0 0
      %2326 = vmatprep.subr.bf16.mxu0 0
      %2327 = vmatpush1.bf16.msra.mxu0 0
      %2328 = vmatprep.subr.bf16.mxu0 0
      %2329 = vmatpush1.bf16.msra.mxu0 0
      %2330 = vmatprep.subr.bf16.mxu0 0
      %2331 = vmatpush1.bf16.msra.mxu0 0
      %2332 = vmatprep.subr.bf16.mxu0 0
      %2333 = vmatpush1.bf16.msra.mxu0 0
      %2334 = vmatprep.subr.bf16.mxu0 0
      %2335 = vmatpush1.bf16.msra.mxu0 0
      %2336 = vmatprep.subr.bf16.mxu0 0
      %2337 = vmatpush1.bf16.msra.mxu0 0
      %2338 = vmatprep.subr.bf16.mxu0 0
      %2339 = vmatpush1.bf16.msra.mxu0 0
      %2340 = vmatprep.subr.bf16.mxu0 0
      %2341 = vmatpush1.bf16.msra.mxu0 0
      %2342 = vmatprep.subr.bf16.mxu0 0
      %2343 = vmatpush1.bf16.msra.mxu0 0
      %2344 = vmatprep.subr.bf16.mxu0 0
      %2345 = vmatpush1.bf16.msra.mxu0 0
      %2346 = vmatprep.subr.bf16.mxu0 0
      %2347 = vmatpush1.bf16.msra.mxu0 0
      %2348 = vmatprep.subr.bf16.mxu0 0
      %2349 = vmatpush1.bf16.msra.mxu0 0
      %2350 = vmatprep.subr.bf16.mxu0 0
      %2351 = vmatpush1.bf16.msra.mxu0 0
      %2352 = vmatprep.subr.bf16.mxu0 0
      %2353 = vmatpush1.bf16.msra.mxu0 0
      %2354 = vmatprep.mubr.bf16.mxu0 0
      %2355 = vmatmul.mubr.bf16.gmra.mrb[0].mxu0 %v2320
      %v2356 = vpop.f32.mrb[0].mxu0
      %v2357 = vadd.f32 0.0, %v2356
      %v2358 = vpop.f32.mrb[0].mxu0
      %v2359 = vadd.f32 0.0, %v2358
      %v2360 = vpop.f32.mrb[0].mxu0
      %v2361 = vadd.f32 0.0, %v2360
      %v2362 = vpop.f32.mrb[0].mxu0
      %v2363 = vadd.f32 0.0, %v2362
      %2364 = vdwg.mxu0
      %2365 = vmatprep.subr.bf16.mxu0 0
      %2366 = vmatpush1.bf16.msra.mxu0 %v2312
      %2367 = vmatprep.subr.bf16.mxu0 0
      %2368 = vmatpush1.bf16.msra.mxu0 0
      %2369 = vmatprep.subr.bf16.mxu0 0
      %2370 = vmatpush1.bf16.msra.mxu0 0
      %2371 = vmatprep.subr.bf16.mxu0 0
      %2372 = vmatpush1.bf16.msra.mxu0 0
      %2373 = vmatprep.subr.bf16.mxu0 0
      %2374 = vmatpush1.bf16.msra.mxu0 0
      %2375 = vmatprep.subr.bf16.mxu0 0
      %2376 = vmatpush1.bf16.msra.mxu0 0
      %2377 = vmatprep.subr.bf16.mxu0 0
      %2378 = vmatpush1.bf16.msra.mxu0 0
      %2379 = vmatprep.subr.bf16.mxu0 0
      %2380 = vmatpush1.bf16.msra.mxu0 0
      %2381 = vmatprep.subr.bf16.mxu0 0
      %2382 = vmatpush1.bf16.msra.mxu0 0
      %2383 = vmatprep.subr.bf16.mxu0 0
      %2384 = vmatpush1.bf16.msra.mxu0 0
      %2385 = vmatprep.subr.bf16.mxu0 0
      %2386 = vmatpush1.bf16.msra.mxu0 0
      %2387 = vmatprep.subr.bf16.mxu0 0
      %2388 = vmatpush1.bf16.msra.mxu0 0
      %2389 = vmatprep.subr.bf16.mxu0 0
      %2390 = vmatpush1.bf16.msra.mxu0 0
      %2391 = vmatprep.subr.bf16.mxu0 0
      %2392 = vmatpush1.bf16.msra.mxu0 0
      %2393 = vmatprep.subr.bf16.mxu0 0
      %2394 = vmatpush1.bf16.msra.mxu0 0
      %2395 = vmatprep.subr.bf16.mxu0 0
      %2396 = vmatpush1.bf16.msra.mxu0 0
      %2397 = vmatprep.mubr.bf16.mxu0 0
      %2398 = vmatmul.mubr.bf16.gmra.mrb[0].mxu0 %v2320
      %v2399 = vpop.f32.mrb[0].mxu0
      %v2400 = vadd.f32 0.0, %v2399
      %v2401 = vpop.f32.mrb[0].mxu0
      %v2402 = vpop.f32.mrb[0].mxu0
      %v2403 = vadd.f32 0.0, %v2402
      %v2404 = vpop.f32.mrb[0].mxu0
      %2405 = vdwg.mxu0
      %v2406 = vadd.f32 %v2293, %v2357
      %v2407 = vadd.f32 %v2294, %v2359
      %v2408 = vadd.f32 %v2295, %v2400
      %v2409 = vadd.f32 %v2296, %v2361
      %v2410 = vadd.f32 %v2297, %v2363
      %v2411 = vadd.f32 %v2298, %v2403
      %s2412 = scalar_lea.vmem %s5, 56
      %v2413 = vld [vmem:[%s2412] sm:$0xf]
      %v2414 = vld [vmem:[%s2412 + $0x4] sm:$0xf]
      %v2417 = vunpack.c.l.b16 %v2413
      %v2418 = vunpack.c.l.b16 %v2414
      %v2419 = vpack.c.b16 %v2418, %v2417
      %2420 = vrot.lane.b32.xlu0 %v1642, 62
      %v2421 = vpop.permute.xlu0 %2420
      %2422 = vrot.lane.b32.xlu0 %v1643, 62
      %v2423 = vpop.permute.xlu0 %2422
      %2424 = vrot.lane.b32.xlu0 %v1644, 62
      %v2425 = vpop.permute.xlu0 %2424
      %vm2426 = vcmask 506880
      %v2427 = vsel %vm2426, %v2421, %v2423
      %v2428 = vsel %vm2426, %v2423, %v2425
      %v2433 = vsel %vm1669, %v2419, 0
      %2435 = vmatprep.subr.bf16.mxu0 %v2428
      %2436 = vmatpush1.bf16.msra.mxu0 %v2427
      %2437 = vmatprep.subr.bf16.mxu0 0
      %2438 = vmatpush1.bf16.msra.mxu0 0
      %2439 = vmatprep.subr.bf16.mxu0 0
      %2440 = vmatpush1.bf16.msra.mxu0 0
      %2441 = vmatprep.subr.bf16.mxu0 0
      %2442 = vmatpush1.bf16.msra.mxu0 0
      %2443 = vmatprep.subr.bf16.mxu0 0
      %2444 = vmatpush1.bf16.msra.mxu0 0
      %2445 = vmatprep.subr.bf16.mxu0 0
      %2446 = vmatpush1.bf16.msra.mxu0 0
      %2447 = vmatprep.subr.bf16.mxu0 0
      %2448 = vmatpush1.bf16.msra.mxu0 0
      %2449 = vmatprep.subr.bf16.mxu0 0
      %2450 = vmatpush1.bf16.msra.mxu0 0
      %2451 = vmatprep.subr.bf16.mxu0 0
      %2452 = vmatpush1.bf16.msra.mxu0 0
      %2453 = vmatprep.subr.bf16.mxu0 0
      %2454 = vmatpush1.bf16.msra.mxu0 0
      %2455 = vmatprep.subr.bf16.mxu0 0
      %2456 = vmatpush1.bf16.msra.mxu0 0
      %2457 = vmatprep.subr.bf16.mxu0 0
      %2458 = vmatpush1.bf16.msra.mxu0 0
      %2459 = vmatprep.subr.bf16.mxu0 0
      %2460 = vmatpush1.bf16.msra.mxu0 0
      %2461 = vmatprep.subr.bf16.mxu0 0
      %2462 = vmatpush1.bf16.msra.mxu0 0
      %2463 = vmatprep.subr.bf16.mxu0 0
      %2464 = vmatpush1.bf16.msra.mxu0 0
      %2465 = vmatprep.subr.bf16.mxu0 0
      %2466 = vmatpush1.bf16.msra.mxu0 0
      %2467 = vmatprep.mubr.bf16.mxu0 0
      %2468 = vmatmul.mubr.bf16.gmra.mrb[0].mxu0 %v2433
      %v2469 = vpop.f32.mrb[0].mxu0
      %v2470 = vadd.f32 0.0, %v2469
      %v2471 = vpop.f32.mrb[0].mxu0
      %v2472 = vadd.f32 0.0, %v2471
      %v2473 = vpop.f32.mrb[0].mxu0
      %v2474 = vadd.f32 0.0, %v2473
      %v2475 = vpop.f32.mrb[0].mxu0
      %v2476 = vadd.f32 0.0, %v2475
      %2477 = vdwg.mxu0
      %2478 = vmatprep.subr.bf16.mxu0 0
      %2479 = vmatpush1.bf16.msra.mxu0 %v2425
      %2480 = vmatprep.subr.bf16.mxu0 0
      %2481 = vmatpush1.bf16.msra.mxu0 0
      %2482 = vmatprep.subr.bf16.mxu0 0
      %2483 = vmatpush1.bf16.msra.mxu0 0
      %2484 = vmatprep.subr.bf16.mxu0 0
      %2485 = vmatpush1.bf16.msra.mxu0 0
      %2486 = vmatprep.subr.bf16.mxu0 0
      %2487 = vmatpush1.bf16.msra.mxu0 0
      %2488 = vmatprep.subr.bf16.mxu0 0
      %2489 = vmatpush1.bf16.msra.mxu0 0
      %2490 = vmatprep.subr.bf16.mxu0 0
      %2491 = vmatpush1.bf16.msra.mxu0 0
      %2492 = vmatprep.subr.bf16.mxu0 0
      %2493 = vmatpush1.bf16.msra.mxu0 0
      %2494 = vmatprep.subr.bf16.mxu0 0
      %2495 = vmatpush1.bf16.msra.mxu0 0
      %2496 = vmatprep.subr.bf16.mxu0 0
      %2497 = vmatpush1.bf16.msra.mxu0 0
      %2498 = vmatprep.subr.bf16.mxu0 0
      %2499 = vmatpush1.bf16.msra.mxu0 0
      %2500 = vmatprep.subr.bf16.mxu0 0
      %2501 = vmatpush1.bf16.msra.mxu0 0
      %2502 = vmatprep.subr.bf16.mxu0 0
      %2503 = vmatpush1.bf16.msra.mxu0 0
      %2504 = vmatprep.subr.bf16.mxu0 0
      %2505 = vmatpush1.bf16.msra.mxu0 0
      %2506 = vmatprep.subr.bf16.mxu0 0
      %2507 = vmatpush1.bf16.msra.mxu0 0
      %2508 = vmatprep.subr.bf16.mxu0 0
      %2509 = vmatpush1.bf16.msra.mxu0 0
      %2510 = vmatprep.mubr.bf16.mxu0 0
      %2511 = vmatmul.mubr.bf16.gmra.mrb[0].mxu0 %v2433
      %v2512 = vpop.f32.mrb[0].mxu0
      %v2513 = vadd.f32 0.0, %v2512
      %v2514 = vpop.f32.mrb[0].mxu0
      %v2515 = vpop.f32.mrb[0].mxu0
      %v2516 = vadd.f32 0.0, %v2515
      %v2517 = vpop.f32.mrb[0].mxu0
      %2518 = vdwg.mxu0
      %v2519 = vadd.f32 %v2406, %v2470
      %v2520 = vadd.f32 %v2407, %v2472
      %v2521 = vadd.f32 %v2408, %v2513
      %v2522 = vadd.f32 %v2409, %v2474
      %v2523 = vadd.f32 %v2410, %v2476
      %v2524 = vadd.f32 %v2411, %v2516
      %s2525 = scalar_lea.vmem %s5, 64
      %v2526 = vld [vmem:[%s2525] sm:$0xf]
      %v2527 = vld [vmem:[%s2525 + $0x4] sm:$0xf]
      %v2530 = vunpack.c.l.b16 %v2526
      %v2531 = vunpack.c.l.b16 %v2527
      %v2532 = vpack.c.b16 %v2531, %v2530
      %2533 = vrot.lane.b32.xlu0 %v1642, 60
      %v2534 = vpop.permute.xlu0 %2533
      %2535 = vrot.lane.b32.xlu0 %v1643, 60
      %v2536 = vpop.permute.xlu0 %2535
      %2537 = vrot.lane.b32.xlu0 %v1644, 60
      %v2538 = vpop.permute.xlu0 %2537
      %vm2539 = vcmask 490496
      %v2540 = vsel %vm2539, %v2534, %v2536
      %v2541 = vsel %vm2539, %v2536, %v2538
      %v2546 = vsel %vm1669, %v2532, 0
      %2548 = vmatprep.subr.bf16.mxu0 %v2541
      %2549 = vmatpush1.bf16.msra.mxu0 %v2540
      %2550 = vmatprep.subr.bf16.mxu0 0
      %2551 = vmatpush1.bf16.msra.mxu0 0
      %2552 = vmatprep.subr.bf16.mxu0 0
      %2553 = vmatpush1.bf16.msra.mxu0 0
      %2554 = vmatprep.subr.bf16.mxu0 0
      %2555 = vmatpush1.bf16.msra.mxu0 0
      %2556 = vmatprep.subr.bf16.mxu0 0
      %2557 = vmatpush1.bf16.msra.mxu0 0
      %2558 = vmatprep.subr.bf16.mxu0 0
      %2559 = vmatpush1.bf16.msra.mxu0 0
      %2560 = vmatprep.subr.bf16.mxu0 0
      %2561 = vmatpush1.bf16.msra.mxu0 0
      %2562 = vmatprep.subr.bf16.mxu0 0
      %2563 = vmatpush1.bf16.msra.mxu0 0
      %2564 = vmatprep.subr.bf16.mxu0 0
      %2565 = vmatpush1.bf16.msra.mxu0 0
      %2566 = vmatprep.subr.bf16.mxu0 0
      %2567 = vmatpush1.bf16.msra.mxu0 0
      %2568 = vmatprep.subr.bf16.mxu0 0
      %2569 = vmatpush1.bf16.msra.mxu0 0
      %2570 = vmatprep.subr.bf16.mxu0 0
      %2571 = vmatpush1.bf16.msra.mxu0 0
      %2572 = vmatprep.subr.bf16.mxu0 0
      %2573 = vmatpush1.bf16.msra.mxu0 0
      %2574 = vmatprep.subr.bf16.mxu0 0
      %2575 = vmatpush1.bf16.msra.mxu0 0
      %2576 = vmatprep.subr.bf16.mxu0 0
      %2577 = vmatpush1.bf16.msra.mxu0 0
      %2578 = vmatprep.subr.bf16.mxu0 0
      %2579 = vmatpush1.bf16.msra.mxu0 0
      %2580 = vmatprep.mubr.bf16.mxu0 0
      %2581 = vmatmul.mubr.bf16.gmra.mrb[0].mxu0 %v2546
      %v2582 = vpop.f32.mrb[0].mxu0
      %v2583 = vadd.f32 0.0, %v2582
      %v2584 = vpop.f32.mrb[0].mxu0
      %v2585 = vadd.f32 0.0, %v2584
      %v2586 = vpop.f32.mrb[0].mxu0
      %v2587 = vadd.f32 0.0, %v2586
      %v2588 = vpop.f32.mrb[0].mxu0
      %v2589 = vadd.f32 0.0, %v2588
      %2590 = vdwg.mxu0
      %2591 = vmatprep.subr.bf16.mxu0 0
      %2592 = vmatpush1.bf16.msra.mxu0 %v2538
      %2593 = vmatprep.subr.bf16.mxu0 0
      %2594 = vmatpush1.bf16.msra.mxu0 0
      %2595 = vmatprep.subr.bf16.mxu0 0
      %2596 = vmatpush1.bf16.msra.mxu0 0
      %2597 = vmatprep.subr.bf16.mxu0 0
      %2598 = vmatpush1.bf16.msra.mxu0 0
      %2599 = vmatprep.subr.bf16.mxu0 0
      %2600 = vmatpush1.bf16.msra.mxu0 0
      %2601 = vmatprep.subr.bf16.mxu0 0
      %2602 = vmatpush1.bf16.msra.mxu0 0
      %2603 = vmatprep.subr.bf16.mxu0 0
      %2604 = vmatpush1.bf16.msra.mxu0 0
      %2605 = vmatprep.subr.bf16.mxu0 0
      %2606 = vmatpush1.bf16.msra.mxu0 0
      %2607 = vmatprep.subr.bf16.mxu0 0
      %2608 = vmatpush1.bf16.msra.mxu0 0
      %2609 = vmatprep.subr.bf16.mxu0 0
      %2610 = vmatpush1.bf16.msra.mxu0 0
      %2611 = vmatprep.subr.bf16.mxu0 0
      %2612 = vmatpush1.bf16.msra.mxu0 0
      %2613 = vmatprep.subr.bf16.mxu0 0
      %2614 = vmatpush1.bf16.msra.mxu0 0
      %2615 = vmatprep.subr.bf16.mxu0 0
      %2616 = vmatpush1.bf16.msra.mxu0 0
      %2617 = vmatprep.subr.bf16.mxu0 0
      %2618 = vmatpush1.bf16.msra.mxu0 0
      %2619 = vmatprep.subr.bf16.mxu0 0
      %2620 = vmatpush1.bf16.msra.mxu0 0
      %2621 = vmatprep.subr.bf16.mxu0 0
      %2622 = vmatpush1.bf16.msra.mxu0 0
      %2623 = vmatprep.mubr.bf16.mxu0 0
      %2624 = vmatmul.mubr.bf16.gmra.mrb[0].mxu0 %v2546
      %v2625 = vpop.f32.mrb[0].mxu0
      %v2626 = vadd.f32 0.0, %v2625
      %v2627 = vpop.f32.mrb[0].mxu0
      %v2628 = vpop.f32.mrb[0].mxu0
      %v2629 = vadd.f32 0.0, %v2628
      %v2630 = vpop.f32.mrb[0].mxu0
      %2631 = vdwg.mxu0
      %v2632 = vadd.f32 %v2519, %v2583
      %v2633 = vadd.f32 %v2520, %v2585
      %v2634 = vadd.f32 %v2521, %v2626
      %v2635 = vadd.f32 %v2522, %v2587
      %v2636 = vadd.f32 %v2523, %v2589
      %v2637 = vadd.f32 %v2524, %v2629
      %v2638 = vld [vmem:[%s6] sm:$0xff]
      %v2639 = vld [vmem:[%s6 + $0x8] sm:$0xff]
      %2641 = vset.pattern.permute.xlu0 0
      %2642 = vperm.xlu0 %2641, %v2638
      %v2643 = vpop.permute.xlu0 %2642
      %2646 = vset.pattern.permute.xlu0 0
      %2647 = vperm.xlu0 %2646, %v2639
      %v2648 = vpop.permute.xlu0 %2647
      %v2650 = vadd.f32 %v2632, %v2643
      %v2651 = vadd.f32 %v2633, %v2643
      %v2652 = vadd.f32 %v2634, %v2643
      %v2653 = vadd.f32 %v2635, %v2648
      %v2654 = vadd.f32 %v2636, %v2648
      %v2655 = vadd.f32 %v2637, %v2648
      %vm2656 = vcmp.gt.f32.partialorder %v2650, 0.0
      %vm2657 = vcmp.gt.f32.partialorder %v2651, 0.0
      %vm2658 = vcmp.gt.f32.partialorder %v2652, 0.0
      %vm2659 = vcmp.gt.f32.partialorder %v2653, 0.0
      %vm2660 = vcmp.gt.f32.partialorder %v2654, 0.0
      %vm2661 = vcmp.gt.f32.partialorder %v2655, 0.0
      %v2662 = vld [vmem:[%s7] sm:$0xff]
      %v2663 = vld [vmem:[%s7 + $0x8] sm:$0xff]
      %2665 = vset.pattern.permute.xlu0 0
      %2666 = vperm.xlu0 %2665, %v2662
      %v2667 = vpop.permute.xlu0 %2666
      %2670 = vset.pattern.permute.xlu0 0
      %2671 = vperm.xlu0 %2670, %v2663
      %v2672 = vpop.permute.xlu0 %2671
      %v2674 = vmul.f32 %v2667, %v2650
      %v2675 = vmul.f32 %v2667, %v2651
      %v2676 = vmul.f32 %v2667, %v2652
      %v2677 = vmul.f32 %v2672, %v2653
      %v2678 = vmul.f32 %v2672, %v2654
      %v2679 = vmul.f32 %v2672, %v2655
      %v2680 = vsel %vm2656, %v2650, %v2674
      %v2681 = vsel %vm2657, %v2651, %v2675
      %v2682 = vsel %vm2658, %v2652, %v2676
      %v2683 = vsel %vm2659, %v2653, %v2677
      %v2684 = vsel %vm2660, %v2654, %v2678
      %v2685 = vsel %vm2661, %v2655, %v2679
      %v2686 = vpack.c.bf16 %v2683, %v2680
      %v2687 = vpack.c.bf16 %v2684, %v2681
      %v2688 = vpack.c.bf16 %v2685, %v2682
      %v2689 = vld [vmem:[%s8] sm:$0xf]
      %v2690 = vld [vmem:[%s8 + $0x4] sm:$0xf]
      %v2691 = vld [vmem:[%s8 + $0x8] sm:$0xf]
      %v2692 = vld [vmem:[%s8 + $0xc] sm:$0xf]
      %s2693 = scalar_lea.vmem %s8, 16
      %v2694 = vld [vmem:[%s2693] sm:$0xf]
      %v2695 = vld [vmem:[%s2693 + $0x4] sm:$0xf]
      %v2696 = vld [vmem:[%s2693 + $0x8] sm:$0xf]
      %v2697 = vld [vmem:[%s2693 + $0xc] sm:$0xf]
      %v2702 = vunpack.c.l.b16 %v2694
      %v2703 = vunpack.c.l.b16 %v2695
      %v2704 = vunpack.c.l.b16 %v2696
      %v2705 = vunpack.c.l.b16 %v2697
      %v2706 = vpack.c.b16 %v2703, %v2702
      %v2707 = vpack.c.b16 %v2705, %v2704
      %2710 = vrot.lane.b32.xlu0 %v2686, 126
      %v2711 = vpop.permute.xlu0 %2710
      %2712 = vrot.lane.b32.xlu0 %v2687, 126
      %v2713 = vpop.permute.xlu0 %2712
      %v2714 = vsel %vm682, %v2711, %v2713
      %v2718 = vsel %vm1669, %v2706, 0
      %v2721 = vsel %vm1669, %v2707, 0
      %2723 = vmatprep.subr.bf16.mxu0 %v2713
      %2724 = vmatpush1.bf16.msra.mxu0 %v2714
      %2725 = vmatprep.subr.bf16.mxu0 0
      %2726 = vmatpush1.bf16.msra.mxu0 0
      %2727 = vmatprep.subr.bf16.mxu0 0
      %2728 = vmatpush1.bf16.msra.mxu0 0
      %2729 = vmatprep.subr.bf16.mxu0 0
      %2730 = vmatpush1.bf16.msra.mxu0 0
      %2731 = vmatprep.subr.bf16.mxu0 0
      %2732 = vmatpush1.bf16.msra.mxu0 0
      %2733 = vmatprep.subr.bf16.mxu0 0
      %2734 = vmatpush1.bf16.msra.mxu0 0
      %2735 = vmatprep.subr.bf16.mxu0 0
      %2736 = vmatpush1.bf16.msra.mxu0 0
      %2737 = vmatprep.subr.bf16.mxu0 0
      %2738 = vmatpush1.bf16.msra.mxu0 0
      %2739 = vmatprep.subr.bf16.mxu0 0
      %2740 = vmatpush1.bf16.msra.mxu0 0
      %2741 = vmatprep.subr.bf16.mxu0 0
      %2742 = vmatpush1.bf16.msra.mxu0 0
      %2743 = vmatprep.subr.bf16.mxu0 0
      %2744 = vmatpush1.bf16.msra.mxu0 0
      %2745 = vmatprep.subr.bf16.mxu0 0
      %2746 = vmatpush1.bf16.msra.mxu0 0
      %2747 = vmatprep.subr.bf16.mxu0 0
      %2748 = vmatpush1.bf16.msra.mxu0 0
      %2749 = vmatprep.subr.bf16.mxu0 0
      %2750 = vmatpush1.bf16.msra.mxu0 0
      %2751 = vmatprep.subr.bf16.mxu0 0
      %2752 = vmatpush1.bf16.msra.mxu0 0
      %2753 = vmatprep.subr.bf16.mxu0 0
      %2754 = vmatpush1.bf16.msra.mxu0 0
      %2755 = vmatprep.mubr.bf16.mxu0 0
      %2756 = vmatmul.mubr.bf16.gmra.mrb[0].mxu0 %v2718
      %v2757 = vpop.f32.mrb[0].mxu0
      %v2758 = vadd.f32 0.0, %v2757
      %v2759 = vpop.f32.mrb[0].mxu0
      %v2760 = vpop.f32.mrb[0].mxu0
      %v2761 = vadd.f32 0.0, %v2760
      %v2762 = vpop.f32.mrb[0].mxu0
      %2763 = vmatprep.mubr.bf16.mxu0 0
      %2764 = vmatmul.mubr.bf16.gmra.mrb[0].mxu0 %v2721
      %v2765 = vpop.f32.mrb[0].mxu0
      %v2766 = vadd.f32 0.0, %v2765
      %v2767 = vpop.f32.mrb[0].mxu0
      %v2768 = vpop.f32.mrb[0].mxu0
      %v2769 = vadd.f32 0.0, %v2768
      %v2770 = vpop.f32.mrb[0].mxu0
      %2771 = vdwg.mxu0
      %v2776 = vunpack.c.l.b16 %v2689
      %v2777 = vunpack.c.l.b16 %v2690
      %v2778 = vunpack.c.l.b16 %v2691
      %v2779 = vunpack.c.l.b16 %v2692
      %v2780 = vpack.c.b16 %v2777, %v2776
      %v2781 = vpack.c.b16 %v2779, %v2778
      %v2783 = vsel %vm1669, %v2780, 0
      %v2786 = vsel %vm1669, %v2781, 0
      %2788 = vmatprep.subr.bf16.mxu0 %v2687
      %2789 = vmatpush1.bf16.msra.mxu0 %v2686
      %2790 = vmatprep.subr.bf16.mxu0 0
      %2791 = vmatpush1.bf16.msra.mxu0 0
      %2792 = vmatprep.subr.bf16.mxu0 0
      %2793 = vmatpush1.bf16.msra.mxu0 0
      %2794 = vmatprep.subr.bf16.mxu0 0
      %2795 = vmatpush1.bf16.msra.mxu0 0
      %2796 = vmatprep.subr.bf16.mxu0 0
      %2797 = vmatpush1.bf16.msra.mxu0 0
      %2798 = vmatprep.subr.bf16.mxu0 0
      %2799 = vmatpush1.bf16.msra.mxu0 0
      %2800 = vmatprep.subr.bf16.mxu0 0
      %2801 = vmatpush1.bf16.msra.mxu0 0
      %2802 = vmatprep.subr.bf16.mxu0 0
      %2803 = vmatpush1.bf16.msra.mxu0 0
      %2804 = vmatprep.subr.bf16.mxu0 0
      %2805 = vmatpush1.bf16.msra.mxu0 0
      %2806 = vmatprep.subr.bf16.mxu0 0
      %2807 = vmatpush1.bf16.msra.mxu0 0
      %2808 = vmatprep.subr.bf16.mxu0 0
      %2809 = vmatpush1.bf16.msra.mxu0 0
      %2810 = vmatprep.subr.bf16.mxu0 0
      %2811 = vmatpush1.bf16.msra.mxu0 0
      %2812 = vmatprep.subr.bf16.mxu0 0
      %2813 = vmatpush1.bf16.msra.mxu0 0
      %2814 = vmatprep.subr.bf16.mxu0 0
      %2815 = vmatpush1.bf16.msra.mxu0 0
      %2816 = vmatprep.subr.bf16.mxu0 0
      %2817 = vmatpush1.bf16.msra.mxu0 0
      %2818 = vmatprep.subr.bf16.mxu0 0
      %2819 = vmatpush1.bf16.msra.mxu0 0
      %2820 = vmatprep.mubr.bf16.mxu0 0
      %2821 = vmatmul.mubr.bf16.gmra.mrb[0].mxu0 %v2783
      %v2822 = vpop.f32.mrb[0].mxu0
      %v2823 = vadd.f32 %v2758, %v2822
      %v2824 = vpop.f32.mrb[0].mxu0
      %v2825 = vpop.f32.mrb[0].mxu0
      %v2826 = vadd.f32 %v2761, %v2825
      %v2827 = vpop.f32.mrb[0].mxu0
      %2828 = vmatprep.mubr.bf16.mxu0 0
      %2829 = vmatmul.mubr.bf16.gmra.mrb[0].mxu0 %v2786
      %v2830 = vpop.f32.mrb[0].mxu0
      %v2831 = vadd.f32 %v2766, %v2830
      %v2832 = vpop.f32.mrb[0].mxu0
      %v2833 = vpop.f32.mrb[0].mxu0
      %v2834 = vadd.f32 %v2769, %v2833
      %v2835 = vpop.f32.mrb[0].mxu0
      %2836 = vdwg.mxu0
      %s2837 = scalar_lea.vmem %s8, 32
      %v2838 = vld [vmem:[%s2837] sm:$0xf]
      %v2839 = vld [vmem:[%s2837 + $0x4] sm:$0xf]
      %v2840 = vld [vmem:[%s2837 + $0x8] sm:$0xf]
      %v2841 = vld [vmem:[%s2837 + $0xc] sm:$0xf]
      %v2846 = vunpack.c.l.b16 %v2838
      %v2847 = vunpack.c.l.b16 %v2839
      %v2848 = vunpack.c.l.b16 %v2840
      %v2849 = vunpack.c.l.b16 %v2841
      %v2850 = vpack.c.b16 %v2847, %v2846
      %v2851 = vpack.c.b16 %v2849, %v2848
      %2852 = vrot.lane.b32.xlu0 %v2686, 124
      %v2853 = vpop.permute.xlu0 %2852
      %2854 = vrot.lane.b32.xlu0 %v2687, 124
      %v2855 = vpop.permute.xlu0 %2854
      %v2856 = vsel %vm1863, %v2853, %v2855
      %v2860 = vsel %vm1669, %v2850, 0
      %v2863 = vsel %vm1669, %v2851, 0
      %2865 = vmatprep.subr.bf16.mxu0 %v2855
      %2866 = vmatpush1.bf16.msra.mxu0 %v2856
      %2867 = vmatprep.subr.bf16.mxu0 0
      %2868 = vmatpush1.bf16.msra.mxu0 0
      %2869 = vmatprep.subr.bf16.mxu0 0
      %2870 = vmatpush1.bf16.msra.mxu0 0
      %2871 = vmatprep.subr.bf16.mxu0 0
      %2872 = vmatpush1.bf16.msra.mxu0 0
      %2873 = vmatprep.subr.bf16.mxu0 0
      %2874 = vmatpush1.bf16.msra.mxu0 0
      %2875 = vmatprep.subr.bf16.mxu0 0
      %2876 = vmatpush1.bf16.msra.mxu0 0
      %2877 = vmatprep.subr.bf16.mxu0 0
      %2878 = vmatpush1.bf16.msra.mxu0 0
      %2879 = vmatprep.subr.bf16.mxu0 0
      %2880 = vmatpush1.bf16.msra.mxu0 0
      %2881 = vmatprep.subr.bf16.mxu0 0
      %2882 = vmatpush1.bf16.msra.mxu0 0
      %2883 = vmatprep.subr.bf16.mxu0 0
      %2884 = vmatpush1.bf16.msra.mxu0 0
      %2885 = vmatprep.subr.bf16.mxu0 0
      %2886 = vmatpush1.bf16.msra.mxu0 0
      %2887 = vmatprep.subr.bf16.mxu0 0
      %2888 = vmatpush1.bf16.msra.mxu0 0
      %2889 = vmatprep.subr.bf16.mxu0 0
      %2890 = vmatpush1.bf16.msra.mxu0 0
      %2891 = vmatprep.subr.bf16.mxu0 0
      %2892 = vmatpush1.bf16.msra.mxu0 0
      %2893 = vmatprep.subr.bf16.mxu0 0
      %2894 = vmatpush1.bf16.msra.mxu0 0
      %2895 = vmatprep.subr.bf16.mxu0 0
      %2896 = vmatpush1.bf16.msra.mxu0 0
      %2897 = vmatprep.mubr.bf16.mxu0 0
      %2898 = vmatmul.mubr.bf16.gmra.mrb[0].mxu0 %v2860
      %v2899 = vpop.f32.mrb[0].mxu0
      %v2900 = vadd.f32 0.0, %v2899
      %v2901 = vpop.f32.mrb[0].mxu0
      %v2902 = vpop.f32.mrb[0].mxu0
      %v2903 = vadd.f32 0.0, %v2902
      %v2904 = vpop.f32.mrb[0].mxu0
      %2905 = vmatprep.mubr.bf16.mxu0 0
      %2906 = vmatmul.mubr.bf16.gmra.mrb[0].mxu0 %v2863
      %v2907 = vpop.f32.mrb[0].mxu0
      %v2908 = vadd.f32 0.0, %v2907
      %v2909 = vpop.f32.mrb[0].mxu0
      %v2910 = vpop.f32.mrb[0].mxu0
      %v2911 = vadd.f32 0.0, %v2910
      %v2912 = vpop.f32.mrb[0].mxu0
      %2913 = vdwg.mxu0
      %v2914 = vadd.f32 %v2823, %v2900
      %v2915 = vadd.f32 %v2826, %v2903
      %v2916 = vadd.f32 %v2831, %v2908
      %v2917 = vadd.f32 %v2834, %v2911
      %s2918 = scalar_lea.vmem %s8, 48
      %v2919 = vld [vmem:[%s2918] sm:$0xf]
      %v2920 = vld [vmem:[%s2918 + $0x4] sm:$0xf]
      %v2921 = vld [vmem:[%s2918 + $0x8] sm:$0xf]
      %v2922 = vld [vmem:[%s2918 + $0xc] sm:$0xf]
      %v2927 = vunpack.c.l.b16 %v2919
      %v2928 = vunpack.c.l.b16 %v2920
      %v2929 = vunpack.c.l.b16 %v2921
      %v2930 = vunpack.c.l.b16 %v2922
      %v2931 = vpack.c.b16 %v2928, %v2927
      %v2932 = vpack.c.b16 %v2930, %v2929
      %2933 = vrot.lane.b32.xlu0 %v2686, 96
      %v2934 = vpop.permute.xlu0 %2933
      %2935 = vrot.lane.b32.xlu0 %v2687, 96
      %v2936 = vpop.permute.xlu0 %2935
      %v2937 = vsel %vm1158, %v2934, %v2936
      %v2941 = vsel %vm1669, %v2931, 0
      %v2944 = vsel %vm1669, %v2932, 0
      %2946 = vmatprep.subr.bf16.mxu0 %v2936
      %2947 = vmatpush1.bf16.msra.mxu0 %v2937
      %2948 = vmatprep.subr.bf16.mxu0 0
      %2949 = vmatpush1.bf16.msra.mxu0 0
      %2950 = vmatprep.subr.bf16.mxu0 0
      %2951 = vmatpush1.bf16.msra.mxu0 0
      %2952 = vmatprep.subr.bf16.mxu0 0
      %2953 = vmatpush1.bf16.msra.mxu0 0
      %2954 = vmatprep.subr.bf16.mxu0 0
      %2955 = vmatpush1.bf16.msra.mxu0 0
      %2956 = vmatprep.subr.bf16.mxu0 0
      %2957 = vmatpush1.bf16.msra.mxu0 0
      %2958 = vmatprep.subr.bf16.mxu0 0
      %2959 = vmatpush1.bf16.msra.mxu0 0
      %2960 = vmatprep.subr.bf16.mxu0 0
      %2961 = vmatpush1.bf16.msra.mxu0 0
      %2962 = vmatprep.subr.bf16.mxu0 0
      %2963 = vmatpush1.bf16.msra.mxu0 0
      %2964 = vmatprep.subr.bf16.mxu0 0
      %2965 = vmatpush1.bf16.msra.mxu0 0
      %2966 = vmatprep.subr.bf16.mxu0 0
      %2967 = vmatpush1.bf16.msra.mxu0 0
      %2968 = vmatprep.subr.bf16.mxu0 0
      %2969 = vmatpush1.bf16.msra.mxu0 0
      %2970 = vmatprep.subr.bf16.mxu0 0
      %2971 = vmatpush1.bf16.msra.mxu0 0
      %2972 = vmatprep.subr.bf16.mxu0 0
      %2973 = vmatpush1.bf16.msra.mxu0 0
      %2974 = vmatprep.subr.bf16.mxu0 0
      %2975 = vmatpush1.bf16.msra.mxu0 0
      %2976 = vmatprep.subr.bf16.mxu0 0
      %2977 = vmatpush1.bf16.msra.mxu0 0
      %2978 = vmatprep.mubr.bf16.mxu0 0
      %2979 = vmatmul.mubr.bf16.gmra.mrb[0].mxu0 %v2941
      %v2980 = vpop.f32.mrb[0].mxu0
      %v2981 = vadd.f32 0.0, %v2980
      %v2982 = vpop.f32.mrb[0].mxu0
      %v2983 = vpop.f32.mrb[0].mxu0
      %v2984 = vadd.f32 0.0, %v2983
      %v2985 = vpop.f32.mrb[0].mxu0
      %2986 = vmatprep.mubr.bf16.mxu0 0
      %2987 = vmatmul.mubr.bf16.gmra.mrb[0].mxu0 %v2944
      %v2988 = vpop.f32.mrb[0].mxu0
      %v2989 = vadd.f32 0.0, %v2988
      %v2990 = vpop.f32.mrb[0].mxu0
      %v2991 = vpop.f32.mrb[0].mxu0
      %v2992 = vadd.f32 0.0, %v2991
      %v2993 = vpop.f32.mrb[0].mxu0
      %2994 = vdwg.mxu0
      %v2995 = vadd.f32 %v2914, %v2981
      %v2996 = vadd.f32 %v2915, %v2984
      %v2997 = vadd.f32 %v2916, %v2989
      %v2998 = vadd.f32 %v2917, %v2992
      %s2999 = scalar_lea.vmem %s8, 64
      %v3000 = vld [vmem:[%s2999] sm:$0xf]
      %v3001 = vld [vmem:[%s2999 + $0x4] sm:$0xf]
      %v3002 = vld [vmem:[%s2999 + $0x8] sm:$0xf]
      %v3003 = vld [vmem:[%s2999 + $0xc] sm:$0xf]
      %v3008 = vunpack.c.l.b16 %v3000
      %v3009 = vunpack.c.l.b16 %v3001
      %v3010 = vunpack.c.l.b16 %v3002
      %v3011 = vunpack.c.l.b16 %v3003
      %v3012 = vpack.c.b16 %v3009, %v3008
      %v3013 = vpack.c.b16 %v3011, %v3010
      %3014 = vrot.lane.b32.xlu0 %v2686, 94
      %v3015 = vpop.permute.xlu0 %3014
      %3016 = vrot.lane.b32.xlu0 %v2687, 94
      %v3017 = vpop.permute.xlu0 %3016
      %v3018 = vsel %vm1396, %v3015, %v3017
      %v3022 = vsel %vm1669, %v3012, 0
      %v3025 = vsel %vm1669, %v3013, 0
      %3027 = vmatprep.subr.bf16.mxu0 %v3017
      %3028 = vmatpush1.bf16.msra.mxu0 %v3018
      %3029 = vmatprep.subr.bf16.mxu0 0
      %3030 = vmatpush1.bf16.msra.mxu0 0
      %3031 = vmatprep.subr.bf16.mxu0 0
      %3032 = vmatpush1.bf16.msra.mxu0 0
      %3033 = vmatprep.subr.bf16.mxu0 0
      %3034 = vmatpush1.bf16.msra.mxu0 0
      %3035 = vmatprep.subr.bf16.mxu0 0
      %3036 = vmatpush1.bf16.msra.mxu0 0
      %3037 = vmatprep.subr.bf16.mxu0 0
      %3038 = vmatpush1.bf16.msra.mxu0 0
      %3039 = vmatprep.subr.bf16.mxu0 0
      %3040 = vmatpush1.bf16.msra.mxu0 0
      %3041 = vmatprep.subr.bf16.mxu0 0
      %3042 = vmatpush1.bf16.msra.mxu0 0
      %3043 = vmatprep.subr.bf16.mxu0 0
      %3044 = vmatpush1.bf16.msra.mxu0 0
      %3045 = vmatprep.subr.bf16.mxu0 0
      %3046 = vmatpush1.bf16.msra.mxu0 0
      %3047 = vmatprep.subr.bf16.mxu0 0
      %3048 = vmatpush1.bf16.msra.mxu0 0
      %3049 = vmatprep.subr.bf16.mxu0 0
      %3050 = vmatpush1.bf16.msra.mxu0 0
      %3051 = vmatprep.subr.bf16.mxu0 0
      %3052 = vmatpush1.bf16.msra.mxu0 0
      %3053 = vmatprep.subr.bf16.mxu0 0
      %3054 = vmatpush1.bf16.msra.mxu0 0
      %3055 = vmatprep.subr.bf16.mxu0 0
      %3056 = vmatpush1.bf16.msra.mxu0 0
      %3057 = vmatprep.subr.bf16.mxu0 0
      %3058 = vmatpush1.bf16.msra.mxu0 0
      %3059 = vmatprep.mubr.bf16.mxu0 0
      %3060 = vmatmul.mubr.bf16.gmra.mrb[0].mxu0 %v3022
      %v3061 = vpop.f32.mrb[0].mxu0
      %v3062 = vadd.f32 0.0, %v3061
      %v3063 = vpop.f32.mrb[0].mxu0
      %v3064 = vpop.f32.mrb[0].mxu0
      %v3065 = vadd.f32 0.0, %v3064
      %v3066 = vpop.f32.mrb[0].mxu0
      %3067 = vmatprep.mubr.bf16.mxu0 0
      %3068 = vmatmul.mubr.bf16.gmra.mrb[0].mxu0 %v3025
      %v3069 = vpop.f32.mrb[0].mxu0
      %v3070 = vadd.f32 0.0, %v3069
      %v3071 = vpop.f32.mrb[0].mxu0
      %v3072 = vpop.f32.mrb[0].mxu0
      %v3073 = vadd.f32 0.0, %v3072
      %v3074 = vpop.f32.mrb[0].mxu0
      %3075 = vdwg.mxu0
      %v3076 = vadd.f32 %v2995, %v3062
      %v3077 = vadd.f32 %v2996, %v3065
      %v3078 = vadd.f32 %v2997, %v3070
      %v3079 = vadd.f32 %v2998, %v3073
      %s3080 = scalar_lea.vmem %s8, 80
      %v3081 = vld [vmem:[%s3080] sm:$0xf]
      %v3082 = vld [vmem:[%s3080 + $0x4] sm:$0xf]
      %v3083 = vld [vmem:[%s3080 + $0x8] sm:$0xf]
      %v3084 = vld [vmem:[%s3080 + $0xc] sm:$0xf]
      %v3089 = vunpack.c.l.b16 %v3081
      %v3090 = vunpack.c.l.b16 %v3082
      %v3091 = vunpack.c.l.b16 %v3083
      %v3092 = vunpack.c.l.b16 %v3084
      %v3093 = vpack.c.b16 %v3090, %v3089
      %v3094 = vpack.c.b16 %v3092, %v3091
      %3095 = vrot.lane.b32.xlu0 %v2686, 92
      %v3096 = vpop.permute.xlu0 %3095
      %3097 = vrot.lane.b32.xlu0 %v2687, 92
      %v3098 = vpop.permute.xlu0 %3097
      %v3099 = vsel %vm2200, %v3096, %v3098
      %v3103 = vsel %vm1669, %v3093, 0
      %v3106 = vsel %vm1669, %v3094, 0
      %3108 = vmatprep.subr.bf16.mxu0 %v3098
      %3109 = vmatpush1.bf16.msra.mxu0 %v3099
      %3110 = vmatprep.subr.bf16.mxu0 0
      %3111 = vmatpush1.bf16.msra.mxu0 0
      %3112 = vmatprep.subr.bf16.mxu0 0
      %3113 = vmatpush1.bf16.msra.mxu0 0
      %3114 = vmatprep.subr.bf16.mxu0 0
      %3115 = vmatpush1.bf16.msra.mxu0 0
      %3116 = vmatprep.subr.bf16.mxu0 0
      %3117 = vmatpush1.bf16.msra.mxu0 0
      %3118 = vmatprep.subr.bf16.mxu0 0
      %3119 = vmatpush1.bf16.msra.mxu0 0
      %3120 = vmatprep.subr.bf16.mxu0 0
      %3121 = vmatpush1.bf16.msra.mxu0 0
      %3122 = vmatprep.subr.bf16.mxu0 0
      %3123 = vmatpush1.bf16.msra.mxu0 0
      %3124 = vmatprep.subr.bf16.mxu0 0
      %3125 = vmatpush1.bf16.msra.mxu0 0
      %3126 = vmatprep.subr.bf16.mxu0 0
      %3127 = vmatpush1.bf16.msra.mxu0 0
      %3128 = vmatprep.subr.bf16.mxu0 0
      %3129 = vmatpush1.bf16.msra.mxu0 0
      %3130 = vmatprep.subr.bf16.mxu0 0
      %3131 = vmatpush1.bf16.msra.mxu0 0
      %3132 = vmatprep.subr.bf16.mxu0 0
      %3133 = vmatpush1.bf16.msra.mxu0 0
      %3134 = vmatprep.subr.bf16.mxu0 0
      %3135 = vmatpush1.bf16.msra.mxu0 0
      %3136 = vmatprep.subr.bf16.mxu0 0
      %3137 = vmatpush1.bf16.msra.mxu0 0
      %3138 = vmatprep.subr.bf16.mxu0 0
      %3139 = vmatpush1.bf16.msra.mxu0 0
      %3140 = vmatprep.mubr.bf16.mxu0 0
      %3141 = vmatmul.mubr.bf16.gmra.mrb[0].mxu0 %v3103
      %v3142 = vpop.f32.mrb[0].mxu0
      %v3143 = vadd.f32 0.0, %v3142
      %v3144 = vpop.f32.mrb[0].mxu0
      %v3145 = vpop.f32.mrb[0].mxu0
      %v3146 = vadd.f32 0.0, %v3145
      %v3147 = vpop.f32.mrb[0].mxu0
      %3148 = vmatprep.mubr.bf16.mxu0 0
      %3149 = vmatmul.mubr.bf16.gmra.mrb[0].mxu0 %v3106
      %v3150 = vpop.f32.mrb[0].mxu0
      %v3151 = vadd.f32 0.0, %v3150
      %v3152 = vpop.f32.mrb[0].mxu0
      %v3153 = vpop.f32.mrb[0].mxu0
      %v3154 = vadd.f32 0.0, %v3153
      %v3155 = vpop.f32.mrb[0].mxu0
      %3156 = vdwg.mxu0
      %v3157 = vadd.f32 %v3076, %v3143
      %v3158 = vadd.f32 %v3077, %v3146
      %v3159 = vadd.f32 %v3078, %v3151
      %v3160 = vadd.f32 %v3079, %v3154
      %s3161 = scalar_lea.vmem %s8, 96
      %v3162 = vld [vmem:[%s3161] sm:$0xf]
      %v3163 = vld [vmem:[%s3161 + $0x4] sm:$0xf]
      %v3164 = vld [vmem:[%s3161 + $0x8] sm:$0xf]
      %v3165 = vld [vmem:[%s3161 + $0xc] sm:$0xf]
      %v3170 = vunpack.c.l.b16 %v3162
      %v3171 = vunpack.c.l.b16 %v3163
      %v3172 = vunpack.c.l.b16 %v3164
      %v3173 = vunpack.c.l.b16 %v3165
      %v3174 = vpack.c.b16 %v3171, %v3170
      %v3175 = vpack.c.b16 %v3173, %v3172
      %3177 = vrot.lane.b32.xlu0 %v2686, 64
      %v3178 = vpop.permute.xlu0 %3177
      %3179 = vrot.lane.b32.xlu0 %v2687, 64
      %v3180 = vpop.permute.xlu0 %3179
      %3181 = vrot.lane.b32.xlu0 %v2688, 64
      %v3182 = vpop.permute.xlu0 %3181
      %v3183 = vsel %vm2313, %v3178, %v3180
      %v3184 = vsel %vm2313, %v3180, %v3182
      %v3188 = vsel %vm1669, %v3174, 0
      %v3191 = vsel %vm1669, %v3175, 0
      %3193 = vmatprep.subr.bf16.mxu0 %v3184
      %3194 = vmatpush1.bf16.msra.mxu0 %v3183
      %3195 = vmatprep.subr.bf16.mxu0 0
      %3196 = vmatpush1.bf16.msra.mxu0 0
      %3197 = vmatprep.subr.bf16.mxu0 0
      %3198 = vmatpush1.bf16.msra.mxu0 0
      %3199 = vmatprep.subr.bf16.mxu0 0
      %3200 = vmatpush1.bf16.msra.mxu0 0
      %3201 = vmatprep.subr.bf16.mxu0 0
      %3202 = vmatpush1.bf16.msra.mxu0 0
      %3203 = vmatprep.subr.bf16.mxu0 0
      %3204 = vmatpush1.bf16.msra.mxu0 0
      %3205 = vmatprep.subr.bf16.mxu0 0
      %3206 = vmatpush1.bf16.msra.mxu0 0
      %3207 = vmatprep.subr.bf16.mxu0 0
      %3208 = vmatpush1.bf16.msra.mxu0 0
      %3209 = vmatprep.subr.bf16.mxu0 0
      %3210 = vmatpush1.bf16.msra.mxu0 0
      %3211 = vmatprep.subr.bf16.mxu0 0
      %3212 = vmatpush1.bf16.msra.mxu0 0
      %3213 = vmatprep.subr.bf16.mxu0 0
      %3214 = vmatpush1.bf16.msra.mxu0 0
      %3215 = vmatprep.subr.bf16.mxu0 0
      %3216 = vmatpush1.bf16.msra.mxu0 0
      %3217 = vmatprep.subr.bf16.mxu0 0
      %3218 = vmatpush1.bf16.msra.mxu0 0
      %3219 = vmatprep.subr.bf16.mxu0 0
      %3220 = vmatpush1.bf16.msra.mxu0 0
      %3221 = vmatprep.subr.bf16.mxu0 0
      %3222 = vmatpush1.bf16.msra.mxu0 0
      %3223 = vmatprep.subr.bf16.mxu0 0
      %3224 = vmatpush1.bf16.msra.mxu0 0
      %3225 = vmatprep.mubr.bf16.mxu0 0
      %3226 = vmatmul.mubr.bf16.gmra.mrb[0].mxu0 %v3188
      %v3227 = vpop.f32.mrb[0].mxu0
      %v3228 = vadd.f32 0.0, %v3227
      %v3229 = vpop.f32.mrb[0].mxu0
      %v3230 = vpop.f32.mrb[0].mxu0
      %v3231 = vadd.f32 0.0, %v3230
      %v3232 = vpop.f32.mrb[0].mxu0
      %3233 = vmatprep.mubr.bf16.mxu0 0
      %3234 = vmatmul.mubr.bf16.gmra.mrb[0].mxu0 %v3191
      %v3235 = vpop.f32.mrb[0].mxu0
      %v3236 = vadd.f32 0.0, %v3235
      %v3237 = vpop.f32.mrb[0].mxu0
      %v3238 = vpop.f32.mrb[0].mxu0
      %v3239 = vadd.f32 0.0, %v3238
      %v3240 = vpop.f32.mrb[0].mxu0
      %3241 = vdwg.mxu0
      %v3242 = vadd.f32 %v3157, %v3228
      %v3243 = vadd.f32 %v3158, %v3231
      %v3244 = vadd.f32 %v3159, %v3236
      %v3245 = vadd.f32 %v3160, %v3239
      %s3246 = scalar_lea.vmem %s8, 112
      %v3247 = vld [vmem:[%s3246] sm:$0xf]
      %v3248 = vld [vmem:[%s3246 + $0x4] sm:$0xf]
      %v3249 = vld [vmem:[%s3246 + $0x8] sm:$0xf]
      %v3250 = vld [vmem:[%s3246 + $0xc] sm:$0xf]
      %v3255 = vunpack.c.l.b16 %v3247
      %v3256 = vunpack.c.l.b16 %v3248
      %v3257 = vunpack.c.l.b16 %v3249
      %v3258 = vunpack.c.l.b16 %v3250
      %v3259 = vpack.c.b16 %v3256, %v3255
      %v3260 = vpack.c.b16 %v3258, %v3257
      %3261 = vrot.lane.b32.xlu0 %v2686, 62
      %v3262 = vpop.permute.xlu0 %3261
      %3263 = vrot.lane.b32.xlu0 %v2687, 62
      %v3264 = vpop.permute.xlu0 %3263
      %3265 = vrot.lane.b32.xlu0 %v2688, 62
      %v3266 = vpop.permute.xlu0 %3265
      %v3267 = vsel %vm2426, %v3262, %v3264
      %v3268 = vsel %vm2426, %v3264, %v3266
      %v3272 = vsel %vm1669, %v3259, 0
      %v3275 = vsel %vm1669, %v3260, 0
      %3277 = vmatprep.subr.bf16.mxu0 %v3268
      %3278 = vmatpush1.bf16.msra.mxu0 %v3267
      %3279 = vmatprep.subr.bf16.mxu0 0
      %3280 = vmatpush1.bf16.msra.mxu0 0
      %3281 = vmatprep.subr.bf16.mxu0 0
      %3282 = vmatpush1.bf16.msra.mxu0 0
      %3283 = vmatprep.subr.bf16.mxu0 0
      %3284 = vmatpush1.bf16.msra.mxu0 0
      %3285 = vmatprep.subr.bf16.mxu0 0
      %3286 = vmatpush1.bf16.msra.mxu0 0
      %3287 = vmatprep.subr.bf16.mxu0 0
      %3288 = vmatpush1.bf16.msra.mxu0 0
      %3289 = vmatprep.subr.bf16.mxu0 0
      %3290 = vmatpush1.bf16.msra.mxu0 0
      %3291 = vmatprep.subr.bf16.mxu0 0
      %3292 = vmatpush1.bf16.msra.mxu0 0
      %3293 = vmatprep.subr.bf16.mxu0 0
      %3294 = vmatpush1.bf16.msra.mxu0 0
      %3295 = vmatprep.subr.bf16.mxu0 0
      %3296 = vmatpush1.bf16.msra.mxu0 0
      %3297 = vmatprep.subr.bf16.mxu0 0
      %3298 = vmatpush1.bf16.msra.mxu0 0
      %3299 = vmatprep.subr.bf16.mxu0 0
      %3300 = vmatpush1.bf16.msra.mxu0 0
      %3301 = vmatprep.subr.bf16.mxu0 0
      %3302 = vmatpush1.bf16.msra.mxu0 0
      %3303 = vmatprep.subr.bf16.mxu0 0
      %3304 = vmatpush1.bf16.msra.mxu0 0
      %3305 = vmatprep.subr.bf16.mxu0 0
      %3306 = vmatpush1.bf16.msra.mxu0 0
      %3307 = vmatprep.subr.bf16.mxu0 0
      %3308 = vmatpush1.bf16.msra.mxu0 0
      %3309 = vmatprep.mubr.bf16.mxu0 0
      %3310 = vmatmul.mubr.bf16.gmra.mrb[0].mxu0 %v3272
      %v3311 = vpop.f32.mrb[0].mxu0
      %v3312 = vadd.f32 0.0, %v3311
      %v3313 = vpop.f32.mrb[0].mxu0
      %v3314 = vpop.f32.mrb[0].mxu0
      %v3315 = vadd.f32 0.0, %v3314
      %v3316 = vpop.f32.mrb[0].mxu0
      %3317 = vmatprep.mubr.bf16.mxu0 0
      %3318 = vmatmul.mubr.bf16.gmra.mrb[0].mxu0 %v3275
      %v3319 = vpop.f32.mrb[0].mxu0
      %v3320 = vadd.f32 0.0, %v3319
      %v3321 = vpop.f32.mrb[0].mxu0
      %v3322 = vpop.f32.mrb[0].mxu0
      %v3323 = vadd.f32 0.0, %v3322
      %v3324 = vpop.f32.mrb[0].mxu0
      %3325 = vdwg.mxu0
      %v3326 = vadd.f32 %v3242, %v3312
      %v3327 = vadd.f32 %v3243, %v3315
      %v3328 = vadd.f32 %v3244, %v3320
      %v3329 = vadd.f32 %v3245, %v3323
      %s3330 = scalar_lea.vmem %s8, 128
      %v3331 = vld [vmem:[%s3330] sm:$0xf]
      %v3332 = vld [vmem:[%s3330 + $0x4] sm:$0xf]
      %v3333 = vld [vmem:[%s3330 + $0x8] sm:$0xf]
      %v3334 = vld [vmem:[%s3330 + $0xc] sm:$0xf]
      %v3339 = vunpack.c.l.b16 %v3331
      %v3340 = vunpack.c.l.b16 %v3332
      %v3341 = vunpack.c.l.b16 %v3333
      %v3342 = vunpack.c.l.b16 %v3334
      %v3343 = vpack.c.b16 %v3340, %v3339
      %v3344 = vpack.c.b16 %v3342, %v3341
      %3345 = vrot.lane.b32.xlu0 %v2686, 60
      %v3346 = vpop.permute.xlu0 %3345
      %3347 = vrot.lane.b32.xlu0 %v2687, 60
      %v3348 = vpop.permute.xlu0 %3347
      %3349 = vrot.lane.b32.xlu0 %v2688, 60
      %v3350 = vpop.permute.xlu0 %3349
      %v3351 = vsel %vm2539, %v3346, %v3348
      %v3352 = vsel %vm2539, %v3348, %v3350
      %v3356 = vsel %vm1669, %v3343, 0
      %v3359 = vsel %vm1669, %v3344, 0
      %3361 = vmatprep.subr.bf16.mxu0 %v3352
      %3362 = vmatpush1.bf16.msra.mxu0 %v3351
      %3363 = vmatprep.subr.bf16.mxu0 0
      %3364 = vmatpush1.bf16.msra.mxu0 0
      %3365 = vmatprep.subr.bf16.mxu0 0
      %3366 = vmatpush1.bf16.msra.mxu0 0
      %3367 = vmatprep.subr.bf16.mxu0 0
      %3368 = vmatpush1.bf16.msra.mxu0 0
      %3369 = vmatprep.subr.bf16.mxu0 0
      %3370 = vmatpush1.bf16.msra.mxu0 0
      %3371 = vmatprep.subr.bf16.mxu0 0
      %3372 = vmatpush1.bf16.msra.mxu0 0
      %3373 = vmatprep.subr.bf16.mxu0 0
      %3374 = vmatpush1.bf16.msra.mxu0 0
      %3375 = vmatprep.subr.bf16.mxu0 0
      %3376 = vmatpush1.bf16.msra.mxu0 0
      %3377 = vmatprep.subr.bf16.mxu0 0
      %3378 = vmatpush1.bf16.msra.mxu0 0
      %3379 = vmatprep.subr.bf16.mxu0 0
      %3380 = vmatpush1.bf16.msra.mxu0 0
      %3381 = vmatprep.subr.bf16.mxu0 0
      %3382 = vmatpush1.bf16.msra.mxu0 0
      %3383 = vmatprep.subr.bf16.mxu0 0
      %3384 = vmatpush1.bf16.msra.mxu0 0
      %3385 = vmatprep.subr.bf16.mxu0 0
      %3386 = vmatpush1.bf16.msra.mxu0 0
      %3387 = vmatprep.subr.bf16.mxu0 0
      %3388 = vmatpush1.bf16.msra.mxu0 0
      %3389 = vmatprep.subr.bf16.mxu0 0
      %3390 = vmatpush1.bf16.msra.mxu0 0
      %3391 = vmatprep.subr.bf16.mxu0 0
      %3392 = vmatpush1.bf16.msra.mxu0 0
      %3393 = vmatprep.mubr.bf16.mxu0 0
      %3394 = vmatmul.mubr.bf16.gmra.mrb[0].mxu0 %v3356
      %v3395 = vpop.f32.mrb[0].mxu0
      %v3396 = vadd.f32 0.0, %v3395
      %v3397 = vpop.f32.mrb[0].mxu0
      %v3398 = vpop.f32.mrb[0].mxu0
      %v3399 = vadd.f32 0.0, %v3398
      %v3400 = vpop.f32.mrb[0].mxu0
      %3401 = vmatprep.mubr.bf16.mxu0 0
      %3402 = vmatmul.mubr.bf16.gmra.mrb[0].mxu0 %v3359
      %v3403 = vpop.f32.mrb[0].mxu0
      %v3404 = vadd.f32 0.0, %v3403
      %v3405 = vpop.f32.mrb[0].mxu0
      %v3406 = vpop.f32.mrb[0].mxu0
      %v3407 = vadd.f32 0.0, %v3406
      %v3408 = vpop.f32.mrb[0].mxu0
      %3409 = vdwg.mxu0
      %v3410 = vadd.f32 %v3326, %v3396
      %v3411 = vadd.f32 %v3327, %v3399
      %v3412 = vadd.f32 %v3328, %v3404
      %v3413 = vadd.f32 %v3329, %v3407
      %v3414 = vld [vmem:[%s9] sm:$0xff]
      %v3415 = vld [vmem:[%s9 + $0x8] sm:$0xff]
      %v3416 = vld [vmem:[%s9 + $0x10] sm:$0xff]
      %v3417 = vld [vmem:[%s9 + $0x18] sm:$0xff]
      %3419 = vset.pattern.permute.xlu0 0
      %3420 = vperm.xlu0 %3419, %v3414
      %v3421 = vpop.permute.xlu0 %3420
      %3424 = vset.pattern.permute.xlu0 0
      %3425 = vperm.xlu0 %3424, %v3415
      %v3426 = vpop.permute.xlu0 %3425
      %3429 = vset.pattern.permute.xlu0 0
      %3430 = vperm.xlu0 %3429, %v3416
      %v3431 = vpop.permute.xlu0 %3430
      %3434 = vset.pattern.permute.xlu0 0
      %3435 = vperm.xlu0 %3434, %v3417
      %v3436 = vpop.permute.xlu0 %3435
      %v3438 = vadd.f32 %v3410, %v3421
      %v3439 = vadd.f32 %v3411, %v3426
      %v3440 = vadd.f32 %v3412, %v3431
      %v3441 = vadd.f32 %v3413, %v3436
      %vm3442 = vcmp.gt.f32.partialorder %v3438, 0.0
      %vm3443 = vcmp.gt.f32.partialorder %v3439, 0.0
      %vm3444 = vcmp.gt.f32.partialorder %v3440, 0.0
      %vm3445 = vcmp.gt.f32.partialorder %v3441, 0.0
      %v3446 = vld [vmem:[%s10] sm:$0xff]
      %v3447 = vld [vmem:[%s10 + $0x8] sm:$0xff]
      %v3448 = vld [vmem:[%s10 + $0x10] sm:$0xff]
      %v3449 = vld [vmem:[%s10 + $0x18] sm:$0xff]
      %3451 = vset.pattern.permute.xlu0 0
      %3452 = vperm.xlu0 %3451, %v3446
      %v3453 = vpop.permute.xlu0 %3452
      %3456 = vset.pattern.permute.xlu0 0
      %3457 = vperm.xlu0 %3456, %v3447
      %v3458 = vpop.permute.xlu0 %3457
      %3461 = vset.pattern.permute.xlu0 0
      %3462 = vperm.xlu0 %3461, %v3448
      %v3463 = vpop.permute.xlu0 %3462
      %3466 = vset.pattern.permute.xlu0 0
      %3467 = vperm.xlu0 %3466, %v3449
      %v3468 = vpop.permute.xlu0 %3467
      %v3470 = vmul.f32 %v3453, %v3438
      %v3471 = vmul.f32 %v3458, %v3439
      %v3472 = vmul.f32 %v3463, %v3440
      %v3473 = vmul.f32 %v3468, %v3441
      %v3474 = vsel %vm3442, %v3438, %v3470
      %v3475 = vsel %vm3443, %v3439, %v3471
      %v3476 = vsel %vm3444, %v3440, %v3472
      %v3477 = vsel %vm3445, %v3441, %v3473
      %v3478 = vpack.c.bf16 %v3475, %v3474
      %v3479 = vpack.c.bf16 %v3477, %v3476
      %v3480 = vld [vmem:[%s11] sm:$0xf]
      %v3481 = vld [vmem:[%s12] sm:$0xff]
      %3483 = vset.pattern.permute.xlu0 0
      %3484 = vperm.xlu0 %3483, %v3481
      %v3485 = vpop.permute.xlu0 %3484
      %vm3487 = vcmask 261120
      %v3489 = vsel %vm3487, %v3480, 0
      %3491 = vmatprep.subr.bf16.mxu0 0
      %3492 = vmatpush1.bf16.msra.mxu0 %v3478
      %3493 = vmatprep.subr.bf16.mxu0 0
      %3494 = vmatpush1.bf16.msra.mxu0 %v3479
      %3495 = vmatprep.subr.bf16.mxu0 0
      %3496 = vmatpush1.bf16.msra.mxu0 0
      %3497 = vmatprep.subr.bf16.mxu0 0
      %3498 = vmatpush1.bf16.msra.mxu0 0
      %3499 = vmatprep.subr.bf16.mxu0 0
      %3500 = vmatpush1.bf16.msra.mxu0 0
      %3501 = vmatprep.subr.bf16.mxu0 0
      %3502 = vmatpush1.bf16.msra.mxu0 0
      %3503 = vmatprep.subr.bf16.mxu0 0
      %3504 = vmatpush1.bf16.msra.mxu0 0
      %3505 = vmatprep.subr.bf16.mxu0 0
      %3506 = vmatpush1.bf16.msra.mxu0 0
      %3507 = vmatprep.subr.bf16.mxu0 0
      %3508 = vmatpush1.bf16.msra.mxu0 0
      %3509 = vmatprep.subr.bf16.mxu0 0
      %3510 = vmatpush1.bf16.msra.mxu0 0
      %3511 = vmatprep.subr.bf16.mxu0 0
      %3512 = vmatpush1.bf16.msra.mxu0 0
      %3513 = vmatprep.subr.bf16.mxu0 0
      %3514 = vmatpush1.bf16.msra.mxu0 0
      %3515 = vmatprep.subr.bf16.mxu0 0
      %3516 = vmatpush1.bf16.msra.mxu0 0
      %3517 = vmatprep.subr.bf16.mxu0 0
      %3518 = vmatpush1.bf16.msra.mxu0 0
      %3519 = vmatprep.subr.bf16.mxu0 0
      %3520 = vmatpush1.bf16.msra.mxu0 0
      %3521 = vmatprep.subr.bf16.mxu0 0
      %3522 = vmatpush1.bf16.msra.mxu0 0
      %3523 = vmatprep.mubr.bf16.mxu0 0
      %3524 = vmatmul.mubr.bf16.gmra.mrb[0].mxu0 %v3489
      %v3525 = vpop.f32.mrb[0].mxu0
      %v3526 = vadd.f32 %v3485, %v3525
      %v3527 = vpop.f32.mrb[0].mxu0
      %v3528 = vpop.f32.mrb[0].mxu0
      %v3529 = vpop.f32.mrb[0].mxu0
      %3530 = vdwg.mxu0
      %v3532 = vrot.slane %v3526, 7
      %v3534 = vsub.f32 %v3526, %v3532
      %v3535 = vmul.f32 %v3534, 1.442695
      %v3536 = vpow.pop %v3535
      %v3537 = vadd.f32 %v3536, 1.0
      %v3538 = vrcp.pop %v3537
      %3539 = vst [vmem:[%s438] sm:$0xf] %v3526
      %3540 = vst [vmem:[%s438 - $0x1] sm:$0x20] %v3538
      %v3541 = vsub.f32 1.0, %v3538
      %3542 = vst [vmem:[%s438] sm:$0x20] %v3541
      %3543 = vst [vmem:[%s438 + $0x6] sm:$0x3] 0.0
      %p3544 = scmp.lt.s32.totalorder %s24, 1
      %s3545 = scalar_select %p3544, %s24, 1
      %s3546 = smul.addr %s3545, 8
      %s3547 = scalar_lea.vmem %s13, %s3546
      // Predicated region
      $region73: #{_lambda_.1} parent=71 // pred_check
        %p3548 = pneg %p320
      $region74: #{_lambda_.1} parent=71 // pred_check_branch
        %3550 = sbr.rel (%p3548) target = $region76
      $region75: #{_lambda_.1} parent=71 // pred_region
        _
      $region76: #{_lambda_.1} parent=71 // pred_fallthru
        _
    $region72: #{_lambda_.1} parent=5 // pred_fallthru
      _
    %p3551 = scmp.le.s32.totalorder 2, %s19
    // Predicated region
    $region77: #{_lambda_.1} parent=5 // pred_check
      %p3552 = pneg %p3551
    $region78: #{_lambda_.1} parent=5 // pred_check_branch
      %3554 = sbr.rel (%p3552) target = $region80
    $region79: #{_lambda_.1} parent=5 // pred_region
      %s3555 = ssub.s32 %s19, 2
      // Predicated region
      $region81: #{_lambda_.1} parent=79 // pred_check
        %p3556 = pneg %p326
      $region82: #{_lambda_.1} parent=79 // pred_check_branch
        %3558 = sbr.rel (%p3556) target = $region84
      $region83: #{_lambda_.1} parent=79 // pred_region
        %p3559 = scmp.lt.s32.totalorder %s25, 1
        %s3560 = scalar_select %p3559, %s25, 1
        %s3561 = smul.addr %s3560, 8
        %s3562 = scalar_lea.vmem %s13, %s3561
      $region84: #{_lambda_.1} parent=79 // pred_fallthru
        _
    $region80: #{_lambda_.1} parent=5 // pred_fallthru
      _
  $region6: #{_lambda_.1} parent=0 // loop_footer
    %s23 = sadd.s32 1, %s19
  $region7: #{_lambda_.1} parent=0 // loop_footer_branch
    %18 = sbr.rel target = $region3
  $region8: #{_lambda_.1} parent=0 // loop_exit
    _

</llo_original>
